<compile_context>
chip_gen: v7x
topology: tpu7x:2x2x1
jax: 0.10.0
libtpu: 0.0.40
codegen_flags: <defaults>
</compile_context>

<pallas_src>
import numpy as np
import jax
import jax.numpy as jnp
from jax.experimental import pallas as pl
from jax.experimental.pallas import tpu as pltpu

# ---------------- module-consistent shapes ----------------
BATCH = 2
SIZE = 128                        # target memory-matrix width ("size" arg)
C_IN = 64                         # _BOTTLENECK_CHANNEL
K = 11                            # _BOTTLENECK_KERNEL_SIZE + 2
PAD = 2
PAD_EDGE = K - 1 - PAD            # 8 zero rows on each edge of a dilated input

C0 = (SIZE - C_IN) // 4 + C_IN    # 80
C1 = (SIZE - C0) // 4 + C0        # 92
C2 = SIZE                         # 128
CP = 128                          # channel padding target (lane-dense)
S0, S1, S2 = 4, 3, 1              # strides

L_IN = 4                          # latent spatial length
L0 = (L_IN - 1) * S0 - 2 * PAD + K   # 19
L1 = (L0 - 1) * S1 - 2 * PAD + K     # 61
L2 = (L1 - 1) * S2 - 2 * PAD + K     # 67

# sublane-rounded working shapes (multiples of 8)
L0R, L1R, L2R = 24, 64, 72        # per-layer output row blocks
L0P_R = 40                        # dilated/padded layer-0 input rows (>= 24+10)
L1P_R = 80                        # dilated/padded layer-1 input rows (>= 64+10)
L2P_R = 88                        # edge-padded layer-2 input rows    (>= 72+10)
K0 = 768                          # layer-0 contraction: 11*64=704 padded to 768
K12 = K * CP                      # layers 1/2 contraction: 1408


# ---------------- kernel (one batch element per grid step) ----------------
def deconv_kernel(acat0_ref, u1_ref, w0_ref, b0_ref, w1_ref, b1_ref,
                  w2_ref, b2_ref, out_ref, acat_ref, apad2_ref):
    # ---- layer 0: single fused matmul; im2col slab was built wrapper-side ----
    y0 = jnp.maximum(
        jnp.dot(acat0_ref[0], w0_ref[...], preferred_element_type=jnp.float32)
        + b0_ref[...], 0.0)                                          # (24, 128)

    # ---- layer 1: stride-3 dilation + edge pad via constant 0/1 matrix ----
    # (U1 columns 19..23 are zero, so the padded/garbage rows of y0 vanish.)
    a1 = jnp.dot(u1_ref[...], y0, preferred_element_type=jnp.float32)  # (80, 128)
    for k in range(K):            # im2col: 11 shifted lane-blocks into scratch
        acat_ref[0:L1R, k * CP:(k + 1) * CP] = a1[k:k + L1R, :]
    y1 = jnp.maximum(
        jnp.dot(acat_ref[0:L1R, :], w1_ref[...],
                preferred_element_type=jnp.float32) + b1_ref[...], 0.0)  # (64, 128)
    # zero the 3 row-padding rows (61..63) so they cannot leak into layer 2
    row = jax.lax.broadcasted_iota(jnp.int32, (L1R, 1), 0)
    y1 = jnp.where(row < L1, y1, 0.0)

    # ---- layer 2: stride 1 -> pure zero edge padding (no matmul) ----
    apad2_ref[0:PAD_EDGE, :] = jnp.zeros((PAD_EDGE, CP), jnp.float32)
    apad2_ref[PAD_EDGE:PAD_EDGE + L1R, :] = y1                       # rows 8..71
    apad2_ref[PAD_EDGE + L1R:L2P_R, :] = jnp.zeros(
        (L2P_R - PAD_EDGE - L1R, CP), jnp.float32)                   # rows 72..87
    for k in range(K):            # im2col: 11 shifted lane-blocks
        acat_ref[:, k * CP:(k + 1) * CP] = apad2_ref[k:k + L2R, :]
    y2 = jnp.maximum(
        jnp.dot(acat_ref[...], w2_ref[...],
                preferred_element_type=jnp.float32) + b2_ref[...], 0.0)  # (72, 128)

    out_ref[0] = y2               # lane-dense (72, 128) store


# ---------------- wrapper-side weight / input prep (pure XLA) ----------------
def _prep_w(w, cin_p, cout_p, kdim_p):
    """(Cin, Cout, K) PyTorch ConvTranspose1d weight -> (kdim_p, cout_p) W_cat
    with W_cat[k*cin_p + c, co] = w[c, co, K-1-k]; zero-padded elsewhere."""
    cin, cout, k = w.shape
    wf = jnp.transpose(jnp.flip(jnp.asarray(w, jnp.float32), axis=2), (2, 0, 1))
    wf = jnp.pad(wf, ((0, 0), (0, cin_p - cin), (0, cout_p - cout)))
    wcat = wf.reshape(k * cin_p, cout_p)
    return jnp.pad(wcat, ((0, kdim_p - k * cin_p), (0, 0)))


def _prep_b(b, cout_p):
    return jnp.pad(jnp.asarray(b, jnp.float32), (0, cout_p - b.shape[0])).reshape(1, cout_p)


def deconv_bottleneck(x, params):
    """x: (B, 64, L_IN) f32 (PyTorch layout).
    params: 3 x (weight, bias), weight=(Cin, Cout, K), bias=(Cout,).
    Returns (B, SIZE, L2) matching the PyTorch module output."""
    (w0, b0), (w1, b1), (w2, b2) = params

    # layer-0 input: dilate (stride 4) + zero edge-pad, channels on lanes
    xt = jnp.transpose(x, (0, 2, 1)).astype(jnp.float32)             # (B, 4, 64)
    u0 = np.zeros((L0P_R, L_IN), np.float32)
    u0[PAD_EDGE + S0 * np.arange(L_IN), np.arange(L_IN)] = 1.0
    xp = jnp.einsum('pl,blc->bpc', jnp.asarray(u0), xt)              # (B, 40, 64)
    # im2col for layer 0 (layout plumbing stays in XLA, not in the kernel)
    acat0 = jnp.concatenate([xp[:, k:k + L0R, :] for k in range(K)], axis=-1)
    acat0 = jnp.pad(acat0, ((0, 0), (0, 0), (0, K0 - K * C_IN)))     # (B, 24, 768)

    # dilation (stride 3) + edge-pad matrix feeding layer 1
    u1 = np.zeros((L1P_R, L0R), np.float32)
    u1[PAD_EDGE + S1 * np.arange(L0), np.arange(L0)] = 1.0
    u1 = jnp.asarray(u1)                                             # (80, 24)

    w0c = _prep_w(w0, C_IN, CP, K0)      # (768, 128)
    w1c = _prep_w(w1, CP, CP, K12)       # (1408, 128)
    w2c = _prep_w(w2, CP, CP, K12)       # (1408, 128)
    b0p, b1p, b2p = _prep_b(b0, CP), _prep_b(b1, CP), _prep_b(b2, CP)

    out = pl.pallas_call(
        deconv_kernel,
        out_shape=jax.ShapeDtypeStruct((BATCH, L2R, CP), jnp.float32),
        grid=(BATCH,),
        in_specs=[
            pl.BlockSpec((1, L0R, K0), lambda b: (b, 0, 0)),   # im2col'd layer-0 input
            pl.BlockSpec((L1P_R, L0R), lambda b: (0, 0)),      # U1 (resident)
            pl.BlockSpec((K0, CP), lambda b: (0, 0)),          # W0_cat
            pl.BlockSpec((1, CP), lambda b: (0, 0)),           # b0
            pl.BlockSpec((K12, CP), lambda b: (0, 0)),         # W1_cat
            pl.BlockSpec((1, CP), lambda b: (0, 0)),           # b1
            pl.BlockSpec((K12, CP), lambda b: (0, 0)),         # W2_cat
            pl.BlockSpec((1, CP), lambda b: (0, 0)),           # b2
        ],
        out_specs=pl.BlockSpec((1, L2R, CP), lambda b: (b, 0, 0)),
        scratch_shapes=[
            pltpu.VMEM((L2R, K12), jnp.float32),   # shared im2col slab (layers 1 & 2)
            pltpu.VMEM((L2P_R, CP), jnp.float32),  # edge-padded layer-2 input
        ],
        compiler_params=pltpu.CompilerParams(
            dimension_semantics=("parallel",)),    # v7x: 2 samples -> 2 TensorCores
    )(acat0, u1, w0c, b0p, w1c, b1p, w2c, b2p)

    # drop row padding, back to PyTorch (B, C, L) layout
    return jnp.transpose(out[:, :L2, :], (0, 2, 1))


# ---------------- pure-JAX reference (independent scatter formulation) ----------------
def _conv_transpose1d_ref(x, w, bias, stride):
    bsz, cin, l = x.shape
    _, cout, k = w.shape
    lout = (l - 1) * stride - 2 * PAD + k
    full = jnp.zeros((bsz, cout, (l - 1) * stride + k), jnp.float32)
    m = jnp.einsum('bit,iok->bokt', x, w)                 # (B, Cout, K, L)
    for kk in range(k):
        full = full.at[:, :, kk:kk + (l - 1) * stride + 1:stride].add(m[:, :, kk, :])
    return full[:, :, PAD:PAD + lout] + bias[None, :, None]


def reference(x, params):
    y = x
    for (w, b), s in zip(params, (S0, S1, S2)):
        y = jax.nn.relu(_conv_transpose1d_ref(y, w, b, s))
    return y


if __name__ == "__main__":
    key = jax.random.PRNGKey(0)
    kx, kw0, kb0, kw1, kb1, kw2, kb2 = jax.random.split(key, 7)
    scale = 0.05
    x = jax.random.normal(kx, (BATCH, C_IN, L_IN), jnp.float32)
    params = (
        (scale * jax.random.normal(kw0, (C_IN, C0, K), jnp.float32),
         scale * jax.random.normal(kb0, (C0,), jnp.float32)),
        (scale * jax.random.normal(kw1, (C0, C1, K), jnp.float32),
         scale * jax.random.normal(kb1, (C1,), jnp.float32)),
        (scale * jax.random.normal(kw2, (C1, C2, K), jnp.float32),
         scale * jax.random.normal(kb2, (C2,), jnp.float32)),
    )

    out = deconv_bottleneck(x, params)
    out = jax.block_until_ready(out)
    assert out.shape == (BATCH, SIZE, L2), out.shape

    ref = reference(x, params)
    err = float(jnp.max(jnp.abs(out - ref)))
    assert err < 1e-3, f"max abs error {err}"

    print("KERNEL_OK")
</pallas_src>

<mosaic_0001>
module attributes {stable_mosaic.version = 11 : i64} {
  func.func @deconv_kernel(%arg0: i32, %arg1: memref<1x24x768xf32, #tpu.memory_space<vmem>>, %arg2: memref<80x24xf32, #tpu.memory_space<vmem>>, %arg3: memref<768x128xf32, #tpu.memory_space<vmem>>, %arg4: memref<1x128xf32, #tpu.memory_space<vmem>>, %arg5: memref<1408x128xf32, #tpu.memory_space<vmem>>, %arg6: memref<1x128xf32, #tpu.memory_space<vmem>>, %arg7: memref<1408x128xf32, #tpu.memory_space<vmem>>, %arg8: memref<1x128xf32, #tpu.memory_space<vmem>>, %arg9: memref<1x72x128xf32, #tpu.memory_space<vmem>>, %arg10: memref<72x1408xf32, #tpu.memory_space<vmem>>, %arg11: memref<88x128xf32, #tpu.memory_space<vmem>>) attributes {dimension_semantics = [#tpu.dimension_semantics<parallel>], iteration_bounds = array<i64: 2>, scalar_prefetch = 0 : i64, scratch_operands = 2 : i64, tpu.core_type = #tpu.core_type<tc>, window_params = [{transform_indices = @transform_0, window_bounds = array<i64: 1, 24, 768>}, {pipeline_mode = #tpu.pipeline_mode<synchronous>, transform_indices = @transform_1, window_bounds = array<i64: 80, 24>}, {pipeline_mode = #tpu.pipeline_mode<synchronous>, transform_indices = @transform_2, window_bounds = array<i64: 768, 128>}, {pipeline_mode = #tpu.pipeline_mode<synchronous>, transform_indices = @transform_3, window_bounds = array<i64: 1, 128>}, {pipeline_mode = #tpu.pipeline_mode<synchronous>, transform_indices = @transform_4, window_bounds = array<i64: 1408, 128>}, {pipeline_mode = #tpu.pipeline_mode<synchronous>, transform_indices = @transform_5, window_bounds = array<i64: 1, 128>}, {pipeline_mode = #tpu.pipeline_mode<synchronous>, transform_indices = @transform_6, window_bounds = array<i64: 1408, 128>}, {pipeline_mode = #tpu.pipeline_mode<synchronous>, transform_indices = @transform_7, window_bounds = array<i64: 1, 128>}, {transform_indices = @transform_8, window_bounds = array<i64: 1, 72, 128>}]} {
    %c0 = arith.constant 0 : index
    %c0_0 = arith.constant 0 : index
    %c0_1 = arith.constant 0 : index
    %0 = vector.load %arg1[%c0, %c0_0, %c0_1] : memref<1x24x768xf32, #tpu.memory_space<vmem>>, vector<1x24x768xf32>
    %1 = vector.shape_cast %0 : vector<1x24x768xf32> to vector<24x768xf32>
    %c0_2 = arith.constant 0 : index
    %c0_3 = arith.constant 0 : index
    %2 = vector.load %arg3[%c0_2, %c0_3] : memref<768x128xf32, #tpu.memory_space<vmem>>, vector<768x128xf32>
    %cst = arith.constant dense<0.000000e+00> : vector<24x128xf32>
    %3 = tpu.matmul %1, %2, %cst {dimension_numbers = #tpu.dot_dimension_numbers<[1], [0], [0], [1], [0, 0, 1, 1], [], []>} : vector<24x768xf32>, vector<768x128xf32>, vector<24x128xf32> -> vector<24x128xf32>
    %c0_4 = arith.constant 0 : index
    %c0_5 = arith.constant 0 : index
    %4 = vector.load %arg4[%c0_4, %c0_5] : memref<1x128xf32, #tpu.memory_space<vmem>>, vector<1x128xf32>
    %5 = vector.broadcast %4 : vector<1x128xf32> to vector<24x128xf32>
    %6 = arith.addf %3, %5 : vector<24x128xf32>
    %cst_6 = arith.constant 0.000000e+00 : f32
    %7 = vector.broadcast %cst_6 : f32 to vector<24x128xf32>
    %8 = arith.maximumf %6, %7 : vector<24x128xf32>
    %c0_7 = arith.constant 0 : index
    %c0_8 = arith.constant 0 : index
    %9 = vector.load %arg2[%c0_7, %c0_8] : memref<80x24xf32, #tpu.memory_space<vmem>>, vector<80x24xf32>
    %cst_9 = arith.constant dense<0.000000e+00> : vector<80x128xf32>
    %10 = tpu.matmul %9, %8, %cst_9 {dimension_numbers = #tpu.dot_dimension_numbers<[1], [0], [0], [1], [0, 0, 1, 1], [], []>} : vector<80x24xf32>, vector<24x128xf32>, vector<80x128xf32> -> vector<80x128xf32>
    %11 = vector.extract_strided_slice %10 {offsets = [0, 0], sizes = [64, 128], strides = [1, 1]} : vector<80x128xf32> to vector<64x128xf32>
    %c0_10 = arith.constant 0 : index
    %c0_11 = arith.constant 0 : index
    %12 = vector.load %arg10[%c0_10, %c0_11] : memref<72x1408xf32, #tpu.memory_space<vmem>>, vector<64x128xf32>
    tpu.vector_store %arg10[%c0_10, %c0_11], %11 {strides = array<i32>} : memref<72x1408xf32, #tpu.memory_space<vmem>>, vector<64x128xf32>,
    %13 = vector.extract_strided_slice %10 {offsets = [1, 0], sizes = [64, 128], strides = [1, 1]} : vector<80x128xf32> to vector<64x128xf32>
    %c0_12 = arith.constant 0 : index
    %c128 = arith.constant 128 : index
    %14 = vector.load %arg10[%c0_12, %c128] : memref<72x1408xf32, #tpu.memory_space<vmem>>, vector<64x128xf32>
    tpu.vector_store %arg10[%c0_12, %c128], %13 {strides = array<i32>} : memref<72x1408xf32, #tpu.memory_space<vmem>>, vector<64x128xf32>,
    %15 = vector.extract_strided_slice %10 {offsets = [2, 0], sizes = [64, 128], strides = [1, 1]} : vector<80x128xf32> to vector<64x128xf32>
    %c0_13 = arith.constant 0 : index
    %c256 = arith.constant 256 : index
    %16 = vector.load %arg10[%c0_13, %c256] : memref<72x1408xf32, #tpu.memory_space<vmem>>, vector<64x128xf32>
    tpu.vector_store %arg10[%c0_13, %c256], %15 {strides = array<i32>} : memref<72x1408xf32, #tpu.memory_space<vmem>>, vector<64x128xf32>,
    %17 = vector.extract_strided_slice %10 {offsets = [3, 0], sizes = [64, 128], strides = [1, 1]} : vector<80x128xf32> to vector<64x128xf32>
    %c0_14 = arith.constant 0 : index
    %c384 = arith.constant 384 : index
    %18 = vector.load %arg10[%c0_14, %c384] : memref<72x1408xf32, #tpu.memory_space<vmem>>, vector<64x128xf32>
    tpu.vector_store %arg10[%c0_14, %c384], %17 {strides = array<i32>} : memref<72x1408xf32, #tpu.memory_space<vmem>>, vector<64x128xf32>,
    %19 = vector.extract_strided_slice %10 {offsets = [4, 0], sizes = [64, 128], strides = [1, 1]} : vector<80x128xf32> to vector<64x128xf32>
    %c0_15 = arith.constant 0 : index
    %c512 = arith.constant 512 : index
    %20 = vector.load %arg10[%c0_15, %c512] : memref<72x1408xf32, #tpu.memory_space<vmem>>, vector<64x128xf32>
    tpu.vector_store %arg10[%c0_15, %c512], %19 {strides = array<i32>} : memref<72x1408xf32, #tpu.memory_space<vmem>>, vector<64x128xf32>,
    %21 = vector.extract_strided_slice %10 {offsets = [5, 0], sizes = [64, 128], strides = [1, 1]} : vector<80x128xf32> to vector<64x128xf32>
    %c0_16 = arith.constant 0 : index
    %c640 = arith.constant 640 : index
    %22 = vector.load %arg10[%c0_16, %c640] : memref<72x1408xf32, #tpu.memory_space<vmem>>, vector<64x128xf32>
    tpu.vector_store %arg10[%c0_16, %c640], %21 {strides = array<i32>} : memref<72x1408xf32, #tpu.memory_space<vmem>>, vector<64x128xf32>,
    %23 = vector.extract_strided_slice %10 {offsets = [6, 0], sizes = [64, 128], strides = [1, 1]} : vector<80x128xf32> to vector<64x128xf32>
    %c0_17 = arith.constant 0 : index
    %c768 = arith.constant 768 : index
    %24 = vector.load %arg10[%c0_17, %c768] : memref<72x1408xf32, #tpu.memory_space<vmem>>, vector<64x128xf32>
    tpu.vector_store %arg10[%c0_17, %c768], %23 {strides = array<i32>} : memref<72x1408xf32, #tpu.memory_space<vmem>>, vector<64x128xf32>,
    %25 = vector.extract_strided_slice %10 {offsets = [7, 0], sizes = [64, 128], strides = [1, 1]} : vector<80x128xf32> to vector<64x128xf32>
    %c0_18 = arith.constant 0 : index
    %c896 = arith.constant 896 : index
    %26 = vector.load %arg10[%c0_18, %c896] : memref<72x1408xf32, #tpu.memory_space<vmem>>, vector<64x128xf32>
    tpu.vector_store %arg10[%c0_18, %c896], %25 {strides = array<i32>} : memref<72x1408xf32, #tpu.memory_space<vmem>>, vector<64x128xf32>,
    %27 = vector.extract_strided_slice %10 {offsets = [8, 0], sizes = [64, 128], strides = [1, 1]} : vector<80x128xf32> to vector<64x128xf32>
    %c0_19 = arith.constant 0 : index
    %c1024 = arith.constant 1024 : index
    %28 = vector.load %arg10[%c0_19, %c1024] : memref<72x1408xf32, #tpu.memory_space<vmem>>, vector<64x128xf32>
    tpu.vector_store %arg10[%c0_19, %c1024], %27 {strides = array<i32>} : memref<72x1408xf32, #tpu.memory_space<vmem>>, vector<64x128xf32>,
    %29 = vector.extract_strided_slice %10 {offsets = [9, 0], sizes = [64, 128], strides = [1, 1]} : vector<80x128xf32> to vector<64x128xf32>
    %c0_20 = arith.constant 0 : index
    %c1152 = arith.constant 1152 : index
    %30 = vector.load %arg10[%c0_20, %c1152] : memref<72x1408xf32, #tpu.memory_space<vmem>>, vector<64x128xf32>
    tpu.vector_store %arg10[%c0_20, %c1152], %29 {strides = array<i32>} : memref<72x1408xf32, #tpu.memory_space<vmem>>, vector<64x128xf32>,
    %31 = vector.extract_strided_slice %10 {offsets = [10, 0], sizes = [64, 128], strides = [1, 1]} : vector<80x128xf32> to vector<64x128xf32>
    %c0_21 = arith.constant 0 : index
    %c1280 = arith.constant 1280 : index
    %32 = vector.load %arg10[%c0_21, %c1280] : memref<72x1408xf32, #tpu.memory_space<vmem>>, vector<64x128xf32>
    tpu.vector_store %arg10[%c0_21, %c1280], %31 {strides = array<i32>} : memref<72x1408xf32, #tpu.memory_space<vmem>>, vector<64x128xf32>,
    %c0_22 = arith.constant 0 : index
    %c0_23 = arith.constant 0 : index
    %33 = vector.load %arg10[%c0_22, %c0_23] : memref<72x1408xf32, #tpu.memory_space<vmem>>, vector<64x1408xf32>
    %c0_24 = arith.constant 0 : index
    %c0_25 = arith.constant 0 : index
    %34 = vector.load %arg5[%c0_24, %c0_25] : memref<1408x128xf32, #tpu.memory_space<vmem>>, vector<1408x128xf32>
    %cst_26 = arith.constant dense<0.000000e+00> : vector<64x128xf32>
    %35 = tpu.matmul %33, %34, %cst_26 {dimension_numbers = #tpu.dot_dimension_numbers<[1], [0], [0], [1], [0, 0, 1, 1], [], []>} : vector<64x1408xf32>, vector<1408x128xf32>, vector<64x128xf32> -> vector<64x128xf32>
    %c0_27 = arith.constant 0 : index
    %c0_28 = arith.constant 0 : index
    %36 = vector.load %arg6[%c0_27, %c0_28] : memref<1x128xf32, #tpu.memory_space<vmem>>, vector<1x128xf32>
    %37 = vector.broadcast %36 : vector<1x128xf32> to vector<64x128xf32>
    %38 = arith.addf %35, %37 : vector<64x128xf32>
    %cst_29 = arith.constant 0.000000e+00 : f32
    %39 = vector.broadcast %cst_29 : f32 to vector<64x128xf32>
    %40 = arith.maximumf %38, %39 : vector<64x128xf32>
    %41 = tpu.iota {dimensions = array<i32: 0>} : vector<64x1xi32>
    %c61_i32 = arith.constant 61 : i32
    %42 = vector.broadcast %c61_i32 : i32 to vector<64x1xi32>
    %43 = arith.cmpi slt, %41, %42 : vector<64x1xi32>
    %cst_30 = arith.constant 0.000000e+00 : f32
    %44 = vector.shape_cast %43 : vector<64x1xi1> to vector<64x1xi1>
    %45 = vector.broadcast %44 : vector<64x1xi1> to vector<64x128xi1>
    %46 = vector.broadcast %cst_30 : f32 to vector<64x128xf32>
    %47 = arith.select %45, %40, %46 : vector<64x128xi1>, vector<64x128xf32>
    %cst_31 = arith.constant 0.000000e+00 : f32
    %48 = vector.broadcast %cst_31 : f32 to vector<8x128xf32>
    %c0_32 = arith.constant 0 : index
    %c0_33 = arith.constant 0 : index
    %49 = vector.load %arg11[%c0_32, %c0_33] : memref<88x128xf32, #tpu.memory_space<vmem>>, vector<8x128xf32>
    tpu.vector_store %arg11[%c0_32, %c0_33], %48 {strides = array<i32>} : memref<88x128xf32, #tpu.memory_space<vmem>>, vector<8x128xf32>,
    %c8 = arith.constant 8 : index
    %c0_34 = arith.constant 0 : index
    %50 = vector.load %arg11[%c8, %c0_34] : memref<88x128xf32, #tpu.memory_space<vmem>>, vector<64x128xf32>
    tpu.vector_store %arg11[%c8, %c0_34], %47 {strides = array<i32>} : memref<88x128xf32, #tpu.memory_space<vmem>>, vector<64x128xf32>,
    %cst_35 = arith.constant 0.000000e+00 : f32
    %51 = vector.broadcast %cst_35 : f32 to vector<16x128xf32>
    %c72 = arith.constant 72 : index
    %c0_36 = arith.constant 0 : index
    %52 = vector.load %arg11[%c72, %c0_36] : memref<88x128xf32, #tpu.memory_space<vmem>>, vector<16x128xf32>
    tpu.vector_store %arg11[%c72, %c0_36], %51 {strides = array<i32>} : memref<88x128xf32, #tpu.memory_space<vmem>>, vector<16x128xf32>,
    %c0_37 = arith.constant 0 : index
    %c0_38 = arith.constant 0 : index
    %53 = vector.load %arg11[%c0_37, %c0_38] : memref<88x128xf32, #tpu.memory_space<vmem>>, vector<72x128xf32>
    %c0_39 = arith.constant 0 : index
    %c0_40 = arith.constant 0 : index
    %54 = vector.load %arg10[%c0_39, %c0_40] : memref<72x1408xf32, #tpu.memory_space<vmem>>, vector<72x128xf32>
    tpu.vector_store %arg10[%c0_39, %c0_40], %53 {strides = array<i32>} : memref<72x1408xf32, #tpu.memory_space<vmem>>, vector<72x128xf32>,
    %c1 = arith.constant 1 : index
    %c0_41 = arith.constant 0 : index
    %55 = vector.load %arg11[%c1, %c0_41] : memref<88x128xf32, #tpu.memory_space<vmem>>, vector<72x128xf32>
    %c0_42 = arith.constant 0 : index
    %c128_43 = arith.constant 128 : index
    %56 = vector.load %arg10[%c0_42, %c128_43] : memref<72x1408xf32, #tpu.memory_space<vmem>>, vector<72x128xf32>
    tpu.vector_store %arg10[%c0_42, %c128_43], %55 {strides = array<i32>} : memref<72x1408xf32, #tpu.memory_space<vmem>>, vector<72x128xf32>,
    %c2 = arith.constant 2 : index
    %c0_44 = arith.constant 0 : index
    %57 = vector.load %arg11[%c2, %c0_44] : memref<88x128xf32, #tpu.memory_space<vmem>>, vector<72x128xf32>
    %c0_45 = arith.constant 0 : index
    %c256_46 = arith.constant 256 : index
    %58 = vector.load %arg10[%c0_45, %c256_46] : memref<72x1408xf32, #tpu.memory_space<vmem>>, vector<72x128xf32>
    tpu.vector_store %arg10[%c0_45, %c256_46], %57 {strides = array<i32>} : memref<72x1408xf32, #tpu.memory_space<vmem>>, vector<72x128xf32>,
    %c3 = arith.constant 3 : index
    %c0_47 = arith.constant 0 : index
    %59 = vector.load %arg11[%c3, %c0_47] : memref<88x128xf32, #tpu.memory_space<vmem>>, vector<72x128xf32>
    %c0_48 = arith.constant 0 : index
    %c384_49 = arith.constant 384 : index
    %60 = vector.load %arg10[%c0_48, %c384_49] : memref<72x1408xf32, #tpu.memory_space<vmem>>, vector<72x128xf32>
    tpu.vector_store %arg10[%c0_48, %c384_49], %59 {strides = array<i32>} : memref<72x1408xf32, #tpu.memory_space<vmem>>, vector<72x128xf32>,
    %c4 = arith.constant 4 : index
    %c0_50 = arith.constant 0 : index
    %61 = vector.load %arg11[%c4, %c0_50] : memref<88x128xf32, #tpu.memory_space<vmem>>, vector<72x128xf32>
    %c0_51 = arith.constant 0 : index
    %c512_52 = arith.constant 512 : index
    %62 = vector.load %arg10[%c0_51, %c512_52] : memref<72x1408xf32, #tpu.memory_space<vmem>>, vector<72x128xf32>
    tpu.vector_store %arg10[%c0_51, %c512_52], %61 {strides = array<i32>} : memref<72x1408xf32, #tpu.memory_space<vmem>>, vector<72x128xf32>,
    %c5 = arith.constant 5 : index
    %c0_53 = arith.constant 0 : index
    %63 = vector.load %arg11[%c5, %c0_53] : memref<88x128xf32, #tpu.memory_space<vmem>>, vector<72x128xf32>
    %c0_54 = arith.constant 0 : index
    %c640_55 = arith.constant 640 : index
    %64 = vector.load %arg10[%c0_54, %c640_55] : memref<72x1408xf32, #tpu.memory_space<vmem>>, vector<72x128xf32>
    tpu.vector_store %arg10[%c0_54, %c640_55], %63 {strides = array<i32>} : memref<72x1408xf32, #tpu.memory_space<vmem>>, vector<72x128xf32>,
    %c6 = arith.constant 6 : index
    %c0_56 = arith.constant 0 : index
    %65 = vector.load %arg11[%c6, %c0_56] : memref<88x128xf32, #tpu.memory_space<vmem>>, vector<72x128xf32>
    %c0_57 = arith.constant 0 : index
    %c768_58 = arith.constant 768 : index
    %66 = vector.load %arg10[%c0_57, %c768_58] : memref<72x1408xf32, #tpu.memory_space<vmem>>, vector<72x128xf32>
    tpu.vector_store %arg10[%c0_57, %c768_58], %65 {strides = array<i32>} : memref<72x1408xf32, #tpu.memory_space<vmem>>, vector<72x128xf32>,
    %c7 = arith.constant 7 : index
    %c0_59 = arith.constant 0 : index
    %67 = vector.load %arg11[%c7, %c0_59] : memref<88x128xf32, #tpu.memory_space<vmem>>, vector<72x128xf32>
    %c0_60 = arith.constant 0 : index
    %c896_61 = arith.constant 896 : index
    %68 = vector.load %arg10[%c0_60, %c896_61] : memref<72x1408xf32, #tpu.memory_space<vmem>>, vector<72x128xf32>
    tpu.vector_store %arg10[%c0_60, %c896_61], %67 {strides = array<i32>} : memref<72x1408xf32, #tpu.memory_space<vmem>>, vector<72x128xf32>,
    %c8_62 = arith.constant 8 : index
    %c0_63 = arith.constant 0 : index
    %69 = vector.load %arg11[%c8_62, %c0_63] : memref<88x128xf32, #tpu.memory_space<vmem>>, vector<72x128xf32>
    %c0_64 = arith.constant 0 : index
    %c1024_65 = arith.constant 1024 : index
    %70 = vector.load %arg10[%c0_64, %c1024_65] : memref<72x1408xf32, #tpu.memory_space<vmem>>, vector<72x128xf32>
    tpu.vector_store %arg10[%c0_64, %c1024_65], %69 {strides = array<i32>} : memref<72x1408xf32, #tpu.memory_space<vmem>>, vector<72x128xf32>,
    %c9 = arith.constant 9 : index
    %c0_66 = arith.constant 0 : index
    %71 = vector.load %arg11[%c9, %c0_66] : memref<88x128xf32, #tpu.memory_space<vmem>>, vector<72x128xf32>
    %c0_67 = arith.constant 0 : index
    %c1152_68 = arith.constant 1152 : index
    %72 = vector.load %arg10[%c0_67, %c1152_68] : memref<72x1408xf32, #tpu.memory_space<vmem>>, vector<72x128xf32>
    tpu.vector_store %arg10[%c0_67, %c1152_68], %71 {strides = array<i32>} : memref<72x1408xf32, #tpu.memory_space<vmem>>, vector<72x128xf32>,
    %c10 = arith.constant 10 : index
    %c0_69 = arith.constant 0 : index
    %73 = vector.load %arg11[%c10, %c0_69] : memref<88x128xf32, #tpu.memory_space<vmem>>, vector<72x128xf32>
    %c0_70 = arith.constant 0 : index
    %c1280_71 = arith.constant 1280 : index
    %74 = vector.load %arg10[%c0_70, %c1280_71] : memref<72x1408xf32, #tpu.memory_space<vmem>>, vector<72x128xf32>
    tpu.vector_store %arg10[%c0_70, %c1280_71], %73 {strides = array<i32>} : memref<72x1408xf32, #tpu.memory_space<vmem>>, vector<72x128xf32>,
    %c0_72 = arith.constant 0 : index
    %c0_73 = arith.constant 0 : index
    %75 = vector.load %arg10[%c0_72, %c0_73] : memref<72x1408xf32, #tpu.memory_space<vmem>>, vector<72x1408xf32>
    %c0_74 = arith.constant 0 : index
    %c0_75 = arith.constant 0 : index
    %76 = vector.load %arg7[%c0_74, %c0_75] : memref<1408x128xf32, #tpu.memory_space<vmem>>, vector<1408x128xf32>
    %cst_76 = arith.constant dense<0.000000e+00> : vector<72x128xf32>
    %77 = tpu.matmul %75, %76, %cst_76 {dimension_numbers = #tpu.dot_dimension_numbers<[1], [0], [0], [1], [0, 0, 1, 1], [], []>} : vector<72x1408xf32>, vector<1408x128xf32>, vector<72x128xf32> -> vector<72x128xf32>
    %c0_77 = arith.constant 0 : index
    %c0_78 = arith.constant 0 : index
    %78 = vector.load %arg8[%c0_77, %c0_78] : memref<1x128xf32, #tpu.memory_space<vmem>>, vector<1x128xf32>
    %79 = vector.broadcast %78 : vector<1x128xf32> to vector<72x128xf32>
    %80 = arith.addf %77, %79 : vector<72x128xf32>
    %cst_79 = arith.constant 0.000000e+00 : f32
    %81 = vector.broadcast %cst_79 : f32 to vector<72x128xf32>
    %82 = arith.maximumf %80, %81 : vector<72x128xf32>
    %c0_80 = arith.constant 0 : index
    %c0_81 = arith.constant 0 : index
    %c0_82 = arith.constant 0 : index
    %83 = vector.load %arg9[%c0_80, %c0_81, %c0_82] : memref<1x72x128xf32, #tpu.memory_space<vmem>>, vector<1x72x128xf32>
    %84 = vector.shape_cast %83 : vector<1x72x128xf32> to vector<72x128xf32>
    %85 = vector.shape_cast %82 : vector<72x128xf32> to vector<1x72x128xf32>
    tpu.vector_store %arg9[%c0_80, %c0_81, %c0_82], %85 {strides = array<i32>} : memref<1x72x128xf32, #tpu.memory_space<vmem>>, vector<1x72x128xf32>,
    return
  }
  func.func @transform_0(%arg0: i32) -> (i32, i32, i32) {
    %c0_i32 = arith.constant 0 : i32
    %c0_i32_0 = arith.constant 0 : i32
    %c0_i32_1 = arith.constant 0 : i32
    return %arg0, %c0_i32, %c0_i32_0 : i32, i32, i32
  }
  func.func @transform_1(%arg0: i32) -> (i32, i32) {
    %c0_i32 = arith.constant 0 : i32
    %c0_i32_0 = arith.constant 0 : i32
    %c0_i32_1 = arith.constant 0 : i32
    return %c0_i32, %c0_i32_0 : i32, i32
  }
  func.func @transform_2(%arg0: i32) -> (i32, i32) {
    %c0_i32 = arith.constant 0 : i32
    %c0_i32_0 = arith.constant 0 : i32
    %c0_i32_1 = arith.constant 0 : i32
    return %c0_i32, %c0_i32_0 : i32, i32
  }
  func.func @transform_3(%arg0: i32) -> (i32, i32) {
    %c0_i32 = arith.constant 0 : i32
    %c0_i32_0 = arith.constant 0 : i32
    %c0_i32_1 = arith.constant 0 : i32
    return %c0_i32, %c0_i32_0 : i32, i32
  }
  func.func @transform_4(%arg0: i32) -> (i32, i32) {
    %c0_i32 = arith.constant 0 : i32
    %c0_i32_0 = arith.constant 0 : i32
    %c0_i32_1 = arith.constant 0 : i32
    return %c0_i32, %c0_i32_0 : i32, i32
  }
  func.func @transform_5(%arg0: i32) -> (i32, i32) {
    %c0_i32 = arith.constant 0 : i32
    %c0_i32_0 = arith.constant 0 : i32
    %c0_i32_1 = arith.constant 0 : i32
    return %c0_i32, %c0_i32_0 : i32, i32
  }
  func.func @transform_6(%arg0: i32) -> (i32, i32) {
    %c0_i32 = arith.constant 0 : i32
    %c0_i32_0 = arith.constant 0 : i32
    %c0_i32_1 = arith.constant 0 : i32
    return %c0_i32, %c0_i32_0 : i32, i32
  }
  func.func @transform_7(%arg0: i32) -> (i32, i32) {
    %c0_i32 = arith.constant 0 : i32
    %c0_i32_0 = arith.constant 0 : i32
    %c0_i32_1 = arith.constant 0 : i32
    return %c0_i32, %c0_i32_0 : i32, i32
  }
  func.func @transform_8(%arg0: i32) -> (i32, i32, i32) {
    %c0_i32 = arith.constant 0 : i32
    %c0_i32_0 = arith.constant 0 : i32
    %c0_i32_1 = arith.constant 0 : i32
    return %arg0, %c0_i32, %c0_i32_0 : i32, i32, i32
  }
}

</mosaic_0001>

<llo_original>
// kernel: tpu_custom_call.1
$region0: #{tpu_custom_call.1}
  #allocation0 [shape = 'u32[]', space=smem, size = 0x4, offset = 0x4, fixed_abs, tag = 'smem constant byte address 0x4 - core index']
  #allocation1 [shape = 'u32[144,128]{1,0:T(1,128)}', space=vmem, size = 0x12000, scoped, tag = 'internal scratch']
  #allocation2 [shape = 'f32[72,1408]{1,0:T(8,128)}', space=vmem, size = 0x63000, scoped, tag = 'scratch operand']
  #allocation3 [shape = 'f32[88,128]{1,0:T(8,128)}', space=vmem, size = 0xb000, scoped, tag = 'scratch operand']
  %s0 = inlined_call_operand.hbm [shape: f32[2,24,768], index: 0, kind: input, shape index: {}]
  %s1 = inlined_call_operand.vmem [shape: f32[80,24], index: 1, kind: input, shape index: {}]
  %s2 = inlined_call_operand.hbm [shape: f32[768,128], index: 2, kind: input, shape index: {}]
  %s3 = inlined_call_operand.vmem [shape: f32[1,128], index: 3, kind: input, shape index: {}]
  %s4 = inlined_call_operand.hbm [shape: f32[1408,128], index: 4, kind: input, shape index: {}]
  %s5 = inlined_call_operand.vmem [shape: f32[1,128], index: 5, kind: input, shape index: {}]
  %s6 = inlined_call_operand.hbm [shape: f32[1408,128], index: 6, kind: input, shape index: {}]
  %s7 = inlined_call_operand.vmem [shape: f32[1,128], index: 7, kind: input, shape index: {}]
  %s8 = inlined_call_operand.hbm [shape: f32[2,72,128], index: 8, kind: output, shape index: {}]
  %s9 = sld [smem:[#allocation0]]
  $region81: #{tpu_custom_call.1} parent=0
    _
  %s11 = ssub.s32 1, %s9
  %s12 = scalar_select 0, %s11, %s9
  $region1: #{tpu_custom_call.1} parent=0
    #allocation4 [shape = 'u8[147456]{0}', space=vmem, size = 0x24000, scoped, tag = 'input window, operand 0']
    #allocation5 [shape = 's32[2]{0}', space=sflag, size = 0x8, scoped, tag = 'scoped memory for tpu_custom_call.1']
    #allocation6 [shape = 's32[2]{0}', space=sflag, size = 0x8, scoped, tag = 'scoped memory for tpu_custom_call.1']
    #allocation7 [shape = 'u8[393216]{0}', space=vmem, size = 0x60000, scoped, tag = 'input window, operand 2, single buffered']
    #allocation8 [shape = 's32[1]{0}', space=sflag, size = 0x4, scoped, tag = 'scoped memory for tpu_custom_call.1']
    #allocation9 [shape = 'u8[720896]{0}', space=vmem, size = 0xb0000, scoped, tag = 'input window, operand 4, single buffered']
    #allocation10 [shape = 'u8[720896]{0}', space=vmem, size = 0xb0000, scoped, tag = 'input window, operand 6, single buffered']
    #allocation11 [shape = 's32[1]{0}', space=sflag, size = 0x4, scoped, tag = 'scoped memory for tpu_custom_call.1']
    #allocation12 [shape = 'u8[73728]{0}', space=vmem, size = 0x12000, scoped, tag = 'output window, operand 0']
    %13 = vsyncpa [#allocation5], 0
    %s14 = scalar_lea.sflag [#allocation5], 1
    %15 = vsyncpa %s14, 0
    %16 = vsyncpa [#allocation8], 0
    %17 = vsyncpa [#allocation11], 0
    %18 = vsyncpa [#allocation6], 0
    %s19 = scalar_lea.sflag [#allocation6], 1
    %20 = vsyncpa %s19, 0
    loop: start=0, step=1, limit=4
    $region2: #{tpu_custom_call.1} parent=1 // loop_pre_header
      _
    $region3: #{tpu_custom_call.1} parent=1 // loop_header
      %s22 = sphi 0, %s26
      %p23 = scmp.ge.s32.totalorder %s22, 4
      %s32 = sphi 0, %s34
      %s35 = sphi 0, %s32
      %s36 = sphi 0, %s35
      %s52 = sphi 0, %s36
      %s56 = sphi 0, %s56
      %s58 = sphi 0, %s56
      %s59 = sphi 0, %s58
      %s73 = sphi 0, %s59
      %s77 = sphi 0, %s77
      %s79 = sphi 0, %s77
      %s80 = sphi 0, %s79
      %s94 = sphi 0, %s80
      %s98 = sphi 0, %s98
      %s100 = sphi 0, %s98
      %s101 = sphi 0, %s100
      %s115 = sphi 0, %s101
      %s119 = sphi 0, %s119
      %s121 = sphi 0, %s119
      %s122 = sphi 0, %s121
      %s136 = sphi 0, %s122
      %s140 = sphi 0, %s140
      %s142 = sphi 0, %s140
      %s143 = sphi 0, %s142
      %s157 = sphi 0, %s143
      %s161 = sphi 0, %s161
      %s163 = sphi 0, %s161
      %s164 = sphi 0, %s163
      %s178 = sphi 0, %s164
      %s182 = sphi 0, %s182
      %s184 = sphi 0, %s182
      %s185 = sphi 0, %s184
      %s199 = sphi 0, %s185
      %s205 = sphi 0, %s207
      %s208 = sphi 0, %s205
      %s209 = sphi 0, %s208
      %s225 = sphi 0, %s209
    $region4: #{tpu_custom_call.1} parent=1 // loop_header_branch
      %25 = sbr.rel (%p23) target = $region8
    $region5: #{tpu_custom_call.1} parent=1 // loop_body
      %s27 = ssub.s32 %s22, 1
      %s28 = ssub.s32 %s22, 2
      %s29 = sadd.s32 %s22, 1
      %s30 = ssub.s32 %s22, %s29
      %p31 = scmp.eq.s32.totalorder %s30, 0
      %s33 = sadd.s32 %s32, 1
      %s34 = scalar_select %p31, %s32, %s33
      %p37 = pneg %p31
      %p38 = scmp.eq.s32.totalorder %s22, 1
      %p39 = por %p37, %p38
      %p40 = scmp.ne.s32.totalorder %s32, %s35
      %p41 = scmp.eq.s32.totalorder %s22, 0
      %p42 = por %p40, %p41
      %p43 = scmp.ne.s32.totalorder %s32, %s35
      %p44 = scmp.eq.s32.totalorder %s27, 1
      %p45 = por %p43, %p44
      %p46 = scmp.ne.s32.totalorder %s35, %s36
      %p47 = scmp.eq.s32.totalorder %s27, 0
      %p48 = por %p46, %p47
      %p49 = scmp.ne.s32.totalorder %s35, %s36
      %p50 = scmp.eq.s32.totalorder %s28, 1
      %p51 = por %p49, %p50
      %p53 = scmp.ne.s32.totalorder %s36, %s52
      %p54 = scmp.eq.s32.totalorder %s28, 0
      %p55 = por %p53, %p54
      %s57 = sadd.s32 %s56, 1
      %p60 = scmp.eq.s32.totalorder %s22, 1
      %p61 = scmp.ne.s32.totalorder %s56, %s58
      %p62 = scmp.eq.s32.totalorder %s22, 0
      %p63 = por %p61, %p62
      %p64 = scmp.ne.s32.totalorder %s56, %s58
      %p65 = scmp.eq.s32.totalorder %s27, 1
      %p66 = por %p64, %p65
      %p67 = scmp.ne.s32.totalorder %s58, %s59
      %p68 = scmp.eq.s32.totalorder %s27, 0
      %p69 = por %p67, %p68
      %p70 = scmp.ne.s32.totalorder %s58, %s59
      %p71 = scmp.eq.s32.totalorder %s28, 1
      %p72 = por %p70, %p71
      %p74 = scmp.ne.s32.totalorder %s59, %s73
      %p75 = scmp.eq.s32.totalorder %s28, 0
      %p76 = por %p74, %p75
      %s78 = sadd.s32 %s77, 1
      %p81 = scmp.eq.s32.totalorder %s22, 1
      %p82 = scmp.ne.s32.totalorder %s77, %s79
      %p83 = scmp.eq.s32.totalorder %s22, 0
      %p84 = por %p82, %p83
      %p85 = scmp.ne.s32.totalorder %s77, %s79
      %p86 = scmp.eq.s32.totalorder %s27, 1
      %p87 = por %p85, %p86
      %p88 = scmp.ne.s32.totalorder %s79, %s80
      %p89 = scmp.eq.s32.totalorder %s27, 0
      %p90 = por %p88, %p89
      %p91 = scmp.ne.s32.totalorder %s79, %s80
      %p92 = scmp.eq.s32.totalorder %s28, 1
      %p93 = por %p91, %p92
      %p95 = scmp.ne.s32.totalorder %s80, %s94
      %p96 = scmp.eq.s32.totalorder %s28, 0
      %p97 = por %p95, %p96
      %s99 = sadd.s32 %s98, 1
      %p102 = scmp.eq.s32.totalorder %s22, 1
      %p103 = scmp.ne.s32.totalorder %s98, %s100
      %p104 = scmp.eq.s32.totalorder %s22, 0
      %p105 = por %p103, %p104
      %p106 = scmp.ne.s32.totalorder %s98, %s100
      %p107 = scmp.eq.s32.totalorder %s27, 1
      %p108 = por %p106, %p107
      %p109 = scmp.ne.s32.totalorder %s100, %s101
      %p110 = scmp.eq.s32.totalorder %s27, 0
      %p111 = por %p109, %p110
      %p112 = scmp.ne.s32.totalorder %s100, %s101
      %p113 = scmp.eq.s32.totalorder %s28, 1
      %p114 = por %p112, %p113
      %p116 = scmp.ne.s32.totalorder %s101, %s115
      %p117 = scmp.eq.s32.totalorder %s28, 0
      %p118 = por %p116, %p117
      %s120 = sadd.s32 %s119, 1
      %p123 = scmp.eq.s32.totalorder %s22, 1
      %p124 = scmp.ne.s32.totalorder %s119, %s121
      %p125 = scmp.eq.s32.totalorder %s22, 0
      %p126 = por %p124, %p125
      %p127 = scmp.ne.s32.totalorder %s119, %s121
      %p128 = scmp.eq.s32.totalorder %s27, 1
      %p129 = por %p127, %p128
      %p130 = scmp.ne.s32.totalorder %s121, %s122
      %p131 = scmp.eq.s32.totalorder %s27, 0
      %p132 = por %p130, %p131
      %p133 = scmp.ne.s32.totalorder %s121, %s122
      %p134 = scmp.eq.s32.totalorder %s28, 1
      %p135 = por %p133, %p134
      %p137 = scmp.ne.s32.totalorder %s122, %s136
      %p138 = scmp.eq.s32.totalorder %s28, 0
      %p139 = por %p137, %p138
      %s141 = sadd.s32 %s140, 1
      %p144 = scmp.eq.s32.totalorder %s22, 1
      %p145 = scmp.ne.s32.totalorder %s140, %s142
      %p146 = scmp.eq.s32.totalorder %s22, 0
      %p147 = por %p145, %p146
      %p148 = scmp.ne.s32.totalorder %s140, %s142
      %p149 = scmp.eq.s32.totalorder %s27, 1
      %p150 = por %p148, %p149
      %p151 = scmp.ne.s32.totalorder %s142, %s143
      %p152 = scmp.eq.s32.totalorder %s27, 0
      %p153 = por %p151, %p152
      %p154 = scmp.ne.s32.totalorder %s142, %s143
      %p155 = scmp.eq.s32.totalorder %s28, 1
      %p156 = por %p154, %p155
      %p158 = scmp.ne.s32.totalorder %s143, %s157
      %p159 = scmp.eq.s32.totalorder %s28, 0
      %p160 = por %p158, %p159
      %s162 = sadd.s32 %s161, 1
      %p165 = scmp.eq.s32.totalorder %s22, 1
      %p166 = scmp.ne.s32.totalorder %s161, %s163
      %p167 = scmp.eq.s32.totalorder %s22, 0
      %p168 = por %p166, %p167
      %p169 = scmp.ne.s32.totalorder %s161, %s163
      %p170 = scmp.eq.s32.totalorder %s27, 1
      %p171 = por %p169, %p170
      %p172 = scmp.ne.s32.totalorder %s163, %s164
      %p173 = scmp.eq.s32.totalorder %s27, 0
      %p174 = por %p172, %p173
      %p175 = scmp.ne.s32.totalorder %s163, %s164
      %p176 = scmp.eq.s32.totalorder %s28, 1
      %p177 = por %p175, %p176
      %p179 = scmp.ne.s32.totalorder %s164, %s178
      %p180 = scmp.eq.s32.totalorder %s28, 0
      %p181 = por %p179, %p180
      %s183 = sadd.s32 %s182, 1
      %p186 = scmp.eq.s32.totalorder %s22, 1
      %p187 = scmp.ne.s32.totalorder %s182, %s184
      %p188 = scmp.eq.s32.totalorder %s22, 0
      %p189 = por %p187, %p188
      %p190 = scmp.ne.s32.totalorder %s182, %s184
      %p191 = scmp.eq.s32.totalorder %s27, 1
      %p192 = por %p190, %p191
      %p193 = scmp.ne.s32.totalorder %s184, %s185
      %p194 = scmp.eq.s32.totalorder %s27, 0
      %p195 = por %p193, %p194
      %p196 = scmp.ne.s32.totalorder %s184, %s185
      %p197 = scmp.eq.s32.totalorder %s28, 1
      %p198 = por %p196, %p197
      %p200 = scmp.ne.s32.totalorder %s185, %s199
      %p201 = scmp.eq.s32.totalorder %s28, 0
      %p202 = por %p200, %p201
      %s203 = ssub.s32 %s22, %s29
      %p204 = scmp.eq.s32.totalorder %s203, 0
      %s206 = sadd.s32 %s205, 1
      %s207 = scalar_select %p204, %s205, %s206
      %p210 = pneg %p204
      %p211 = scmp.eq.s32.totalorder %s22, 1
      %p212 = por %p210, %p211
      %p213 = scmp.ne.s32.totalorder %s205, %s208
      %p214 = scmp.eq.s32.totalorder %s22, 0
      %p215 = por %p213, %p214
      %p216 = scmp.ne.s32.totalorder %s205, %s208
      %p217 = scmp.eq.s32.totalorder %s27, 1
      %p218 = por %p216, %p217
      %p219 = scmp.ne.s32.totalorder %s208, %s209
      %p220 = scmp.eq.s32.totalorder %s27, 0
      %p221 = por %p219, %p220
      %p222 = scmp.ne.s32.totalorder %s208, %s209
      %p223 = scmp.eq.s32.totalorder %s28, 1
      %p224 = por %p222, %p223
      %p226 = scmp.ne.s32.totalorder %s209, %s225
      %p227 = scmp.eq.s32.totalorder %s28, 0
      %p228 = por %p226, %p227
      %p229 = scmp.le.s32.totalorder 1, %s22
      %p230 = scmp.lt.s32.totalorder %s22, 3
      %p231 = pnand %p229, %p230
      %p232 = pneg %p231
      // Predicated region
      $region9: #{tpu_custom_call.1} parent=5 // pred_check
        _
      $region10: #{tpu_custom_call.1} parent=5 // pred_check_branch
        %234 = sbr.rel (%p231) target = $region12
      $region11: #{tpu_custom_call.1} parent=5 // pred_region
        %s235 = ssub.s32 %s22, 1
        // Predicated region
        $region13: #{tpu_custom_call.1} parent=11 // pred_check
          %p236 = pneg %p69
        $region14: #{tpu_custom_call.1} parent=11 // pred_check_branch
          %238 = sbr.rel (%p236) target = $region16
        $region15: #{tpu_custom_call.1} parent=11 // pred_region
          _
        $region16: #{tpu_custom_call.1} parent=11 // pred_fallthru
          _
        // Predicated region
        $region17: #{tpu_custom_call.1} parent=11 // pred_check
          %p239 = pneg %p90
        $region18: #{tpu_custom_call.1} parent=11 // pred_check_branch
          %241 = sbr.rel (%p239) target = $region20
        $region19: #{tpu_custom_call.1} parent=11 // pred_region
          %s243 = ssub.s32 12288, 12288
          %244 = vsyncadd [#allocation8], %s243
          %s245 = sshll.u32 [#allocation7], 4
          %s246 = int_to_ptr.vmem [resolvable:$true] %s245
          %251 = dma.hbm_to_vmem [thread:$0]  %s2, 12288, %s246, [#allocation8], 128, 128, 8
        $region20: #{tpu_custom_call.1} parent=11 // pred_fallthru
          _
        // Predicated region
        $region21: #{tpu_custom_call.1} parent=11 // pred_check
          %p252 = pneg %p111
        $region22: #{tpu_custom_call.1} parent=11 // pred_check_branch
          %254 = sbr.rel (%p252) target = $region24
        $region23: #{tpu_custom_call.1} parent=11 // pred_region
          _
        $region24: #{tpu_custom_call.1} parent=11 // pred_fallthru
          _
        // Predicated region
        $region25: #{tpu_custom_call.1} parent=11 // pred_check
          %p255 = pneg %p132
        $region26: #{tpu_custom_call.1} parent=11 // pred_check_branch
          %257 = sbr.rel (%p255) target = $region28
        $region27: #{tpu_custom_call.1} parent=11 // pred_region
          %s259 = ssub.s32 22528, 22528
          %260 = vsyncadd [#allocation8], %s259
          %s261 = sshll.u32 [#allocation9], 4
          %s262 = int_to_ptr.vmem [resolvable:$true] %s261
          %267 = dma.hbm_to_vmem [thread:$0]  %s4, 22528, %s262, [#allocation8], 128, 128, 8
        $region28: #{tpu_custom_call.1} parent=11 // pred_fallthru
          _
        // Predicated region
        $region29: #{tpu_custom_call.1} parent=11 // pred_check
          %p268 = pneg %p153
        $region30: #{tpu_custom_call.1} parent=11 // pred_check_branch
          %270 = sbr.rel (%p268) target = $region32
        $region31: #{tpu_custom_call.1} parent=11 // pred_region
          _
        $region32: #{tpu_custom_call.1} parent=11 // pred_fallthru
          _
        // Predicated region
        $region33: #{tpu_custom_call.1} parent=11 // pred_check
          %p271 = pneg %p174
        $region34: #{tpu_custom_call.1} parent=11 // pred_check_branch
          %273 = sbr.rel (%p271) target = $region36
        $region35: #{tpu_custom_call.1} parent=11 // pred_region
          %s275 = ssub.s32 22528, 22528
          %276 = vsyncadd [#allocation11], %s275
          %s277 = sshll.u32 [#allocation10], 4
          %s278 = int_to_ptr.vmem [resolvable:$true] %s277
          %283 = dma.hbm_to_vmem [thread:$0]  %s6, 22528, %s278, [#allocation11], 128, 128, 8
        $region36: #{tpu_custom_call.1} parent=11 // pred_fallthru
          _
        // Predicated region
        $region37: #{tpu_custom_call.1} parent=11 // pred_check
          %p284 = pneg %p195
        $region38: #{tpu_custom_call.1} parent=11 // pred_check_branch
          %286 = sbr.rel (%p284) target = $region40
        $region39: #{tpu_custom_call.1} parent=11 // pred_region
          _
        $region40: #{tpu_custom_call.1} parent=11 // pred_fallthru
          _
      $region12: #{tpu_custom_call.1} parent=5 // pred_fallthru
        _
      %p287 = scmp.lt.s32.totalorder %s22, 2
      // Predicated region
      $region41: #{tpu_custom_call.1} parent=5 // pred_check
        %p288 = pneg %p287
      $region42: #{tpu_custom_call.1} parent=5 // pred_check_branch
        %290 = sbr.rel (%p288) target = $region44
      $region43: #{tpu_custom_call.1} parent=5 // pred_region
        // Predicated region
        $region45: #{tpu_custom_call.1} parent=43 // pred_check
          %p291 = pneg %p42
        $region46: #{tpu_custom_call.1} parent=43 // pred_check_branch
          %293 = sbr.rel (%p291) target = $region48
        $region47: #{tpu_custom_call.1} parent=43 // pred_region
          %s294 = sand.u32 %s32, 1
          %s295 = scalar_lea.sflag [#allocation5], %s294
          %s296 = sand.u32 %s32, 1
          %s297 = smul.addr %s296, 144
          %s298 = scalar_lea.vmem [#allocation4], %s297
          %s300 = ssub.s32 2304, 2304
          %301 = vsyncadd %s295, %s300
          %s302 = smul.addr %s22, 18
          %s303 = smul.addr %s302, 128
          %s304 = scalar_lea.hbm %s0, %s303
          %s305 = sshll.u32 %s298, 4
          %s306 = int_to_ptr.vmem [resolvable:$true] %s305
          %311 = dma.hbm_to_vmem [thread:$0]  %s304, 2304, %s306, %s295, 768, 768, 48
        $region48: #{tpu_custom_call.1} parent=43 // pred_fallthru
          _
      $region44: #{tpu_custom_call.1} parent=5 // pred_fallthru
        _
      %p312 = scmp.le.s32.totalorder 1, %s22
      %p313 = scmp.lt.s32.totalorder %s22, 3
      %p314 = pnand %p312, %p313
      %p315 = pneg %p314
      // Predicated region
      $region49: #{tpu_custom_call.1} parent=5 // pred_check
        _
      $region50: #{tpu_custom_call.1} parent=5 // pred_check_branch
        %317 = sbr.rel (%p314) target = $region52
      $region51: #{tpu_custom_call.1} parent=5 // pred_region
        %s318 = ssub.s32 %s22, 1
        %s319 = sand.u32 %s35, 1
        %s320 = scalar_lea.sflag [#allocation5], %s319
        %s321 = sand.u32 %s35, 1
        %s322 = smul.addr %s321, 144
        %s323 = scalar_lea.vmem [#allocation4], %s322
        // Predicated region
        $region53: #{tpu_custom_call.1} parent=51 // pred_check
          %p324 = pneg %p48
        $region54: #{tpu_custom_call.1} parent=51 // pred_check_branch
          %326 = sbr.rel (%p324) target = $region56
        $region55: #{tpu_custom_call.1} parent=51 // pred_region
          %327 = dma.done %s320, 2304
        $region56: #{tpu_custom_call.1} parent=51 // pred_fallthru
          _
        // Predicated region
        $region57: #{tpu_custom_call.1} parent=51 // pred_check
          %p328 = pneg %p90
        $region58: #{tpu_custom_call.1} parent=51 // pred_check_branch
          %330 = sbr.rel (%p328) target = $region60
        $region59: #{tpu_custom_call.1} parent=51 // pred_region
          %331 = dma.done [#allocation8], 12288
        $region60: #{tpu_custom_call.1} parent=51 // pred_fallthru
          _
        // Predicated region
        $region61: #{tpu_custom_call.1} parent=51 // pred_check
          %p332 = pneg %p132
        $region62: #{tpu_custom_call.1} parent=51 // pred_check_branch
          %334 = sbr.rel (%p332) target = $region64
        $region63: #{tpu_custom_call.1} parent=51 // pred_region
          %335 = dma.done [#allocation8], 22528
        $region64: #{tpu_custom_call.1} parent=51 // pred_fallthru
          _
        // Predicated region
        $region65: #{tpu_custom_call.1} parent=51 // pred_check
          %p336 = pneg %p174
        $region66: #{tpu_custom_call.1} parent=51 // pred_check_branch
          %338 = sbr.rel (%p336) target = $region68
        $region67: #{tpu_custom_call.1} parent=51 // pred_region
          %339 = dma.done [#allocation11], 22528
        $region68: #{tpu_custom_call.1} parent=51 // pred_fallthru
          _
        %s340 = sand.u32 %s35, 1
        %s341 = scalar_lea.sflag [#allocation5], %s340
        %s342 = sand.u32 %s35, 1
        %s343 = smul.addr %s342, 144
        %s344 = scalar_lea.vmem [#allocation4], %s343
        %p345 = pneg %p48
        %p346 = pneg %p45
        %p347 = pneg %p69
        %p348 = pneg %p66
        %p349 = pneg %p90
        %p350 = pneg %p87
        %p351 = pneg %p111
        %p352 = pneg %p108
        %p353 = pneg %p132
        %p354 = pneg %p129
        %p355 = pneg %p153
        %p356 = pneg %p150
        %p357 = pneg %p174
        %p358 = pneg %p171
        %p359 = pneg %p195
        %p360 = pneg %p192
        %p361 = pneg %p221
        %p362 = pneg %p218
        %s363 = sand.u32 %s208, 1
        %s364 = scalar_lea.sflag [#allocation6], %s363
        %s365 = sand.u32 %s208, 1
        %s366 = smul.addr %s365, 72
        %s367 = scalar_lea.vmem [#allocation12], %s366
        %v368 = vld [vmem:[%s323] sm:$0xff]
        %v369 = vld [vmem:[%s323 + $0x8] sm:$0xff]
        %v370 = vld [vmem:[%s323 + $0x10] sm:$0xff]
        %v371 = vld [vmem:[%s323 + $0x18] sm:$0xff]
        %v372 = vld [vmem:[%s323 + $0x20] sm:$0xff]
        %v373 = vld [vmem:[%s323 + $0x28] sm:$0xff]
        %v374 = vld [vmem:[%s323 + $0x30] sm:$0xff]
        %v375 = vld [vmem:[%s323 + $0x38] sm:$0xff]
        %v376 = vld [vmem:[%s323 + $0x40] sm:$0xff]
        %v377 = vld [vmem:[%s323 + $0x48] sm:$0xff]
        %v378 = vld [vmem:[%s323 + $0x50] sm:$0xff]
        %v379 = vld [vmem:[%s323 + $0x58] sm:$0xff]
        %v380 = vld [vmem:[%s323 + $0x60] sm:$0xff]
        %v381 = vld [vmem:[%s323 + $0x68] sm:$0xff]
        %v382 = vld [vmem:[%s323 + $0x70] sm:$0xff]
        %v383 = vld [vmem:[%s323 + $0x78] sm:$0xff]
        %v384 = vld [vmem:[%s323 + $0x80] sm:$0xff]
        %v385 = vld [vmem:[%s323 + $0x88] sm:$0xff]
        %v386 = vld [vmem:[#allocation7] sm:$0xff]
        %v387 = vld [vmem:[#allocation7 + $0x8] sm:$0xff]
        %v388 = vld [vmem:[#allocation7 + $0x10] sm:$0xff]
        %v389 = vld [vmem:[#allocation7 + $0x18] sm:$0xff]
        %v390 = vld [vmem:[#allocation7 + $0x20] sm:$0xff]
        %v391 = vld [vmem:[#allocation7 + $0x28] sm:$0xff]
        %v392 = vld [vmem:[#allocation7 + $0x30] sm:$0xff]
        %v393 = vld [vmem:[#allocation7 + $0x38] sm:$0xff]
        %v394 = vld [vmem:[#allocation7 + $0x40] sm:$0xff]
        %v395 = vld [vmem:[#allocation7 + $0x48] sm:$0xff]
        %v396 = vld [vmem:[#allocation7 + $0x50] sm:$0xff]
        %v397 = vld [vmem:[#allocation7 + $0x58] sm:$0xff]
        %v398 = vld [vmem:[#allocation7 + $0x60] sm:$0xff]
        %v399 = vld [vmem:[#allocation7 + $0x68] sm:$0xff]
        %v400 = vld [vmem:[#allocation7 + $0x70] sm:$0xff]
        %v401 = vld [vmem:[#allocation7 + $0x78] sm:$0xff]
        %v402 = vld [vmem:[#allocation7 + $0x80] sm:$0xff]
        %v403 = vld [vmem:[#allocation7 + $0x88] sm:$0xff]
        %v404 = vld [vmem:[#allocation7 + $0x90] sm:$0xff]
        %v405 = vld [vmem:[#allocation7 + $0x98] sm:$0xff]
        %v406 = vld [vmem:[#allocation7 + $0xa0] sm:$0xff]
        %v407 = vld [vmem:[#allocation7 + $0xa8] sm:$0xff]
        %v408 = vld [vmem:[#allocation7 + $0xb0] sm:$0xff]
        %v409 = vld [vmem:[#allocation7 + $0xb8] sm:$0xff]
        %v410 = vld [vmem:[#allocation7 + $0xc0] sm:$0xff]
        %v411 = vld [vmem:[#allocation7 + $0xc8] sm:$0xff]
        %v412 = vld [vmem:[#allocation7 + $0xd0] sm:$0xff]
        %v413 = vld [vmem:[#allocation7 + $0xd8] sm:$0xff]
        %v414 = vld [vmem:[#allocation7 + $0xe0] sm:$0xff]
        %v415 = vld [vmem:[#allocation7 + $0xe8] sm:$0xff]
        %v416 = vld [vmem:[#allocation7 + $0xf0] sm:$0xff]
        %v417 = vld [vmem:[#allocation7 + $0xf8] sm:$0xff]
        %v418 = vld [vmem:[#allocation7 + $0x100] sm:$0xff]
        %v419 = vld [vmem:[#allocation7 + $0x108] sm:$0xff]
        %v420 = vld [vmem:[#allocation7 + $0x110] sm:$0xff]
        %v421 = vld [vmem:[#allocation7 + $0x118] sm:$0xff]
        %v422 = vld [vmem:[#allocation7 + $0x120] sm:$0xff]
        %v423 = vld [vmem:[#allocation7 + $0x128] sm:$0xff]
        %v424 = vld [vmem:[#allocation7 + $0x130] sm:$0xff]
        %v425 = vld [vmem:[#allocation7 + $0x138] sm:$0xff]
        %v426 = vld [vmem:[#allocation7 + $0x140] sm:$0xff]
        %v427 = vld [vmem:[#allocation7 + $0x148] sm:$0xff]
        %v428 = vld [vmem:[#allocation7 + $0x150] sm:$0xff]
        %v429 = vld [vmem:[#allocation7 + $0x158] sm:$0xff]
        %v430 = vld [vmem:[#allocation7 + $0x160] sm:$0xff]
        %v431 = vld [vmem:[#allocation7 + $0x168] sm:$0xff]
        %v432 = vld [vmem:[#allocation7 + $0x170] sm:$0xff]
        %v433 = vld [vmem:[#allocation7 + $0x178] sm:$0xff]
        %v434 = vld [vmem:[#allocation7 + $0x180] sm:$0xff]
        %v435 = vld [vmem:[#allocation7 + $0x188] sm:$0xff]
        %v436 = vld [vmem:[#allocation7 + $0x190] sm:$0xff]
        %v437 = vld [vmem:[#allocation7 + $0x198] sm:$0xff]
        %v438 = vld [vmem:[#allocation7 + $0x1a0] sm:$0xff]
        %v439 = vld [vmem:[#allocation7 + $0x1a8] sm:$0xff]
        %v440 = vld [vmem:[#allocation7 + $0x1b0] sm:$0xff]
        %v441 = vld [vmem:[#allocation7 + $0x1b8] sm:$0xff]
        %v442 = vld [vmem:[#allocation7 + $0x1c0] sm:$0xff]
        %v443 = vld [vmem:[#allocation7 + $0x1c8] sm:$0xff]
        %v444 = vld [vmem:[#allocation7 + $0x1d0] sm:$0xff]
        %v445 = vld [vmem:[#allocation7 + $0x1d8] sm:$0xff]
        %v446 = vld [vmem:[#allocation7 + $0x1e0] sm:$0xff]
        %v447 = vld [vmem:[#allocation7 + $0x1e8] sm:$0xff]
        %v448 = vld [vmem:[#allocation7 + $0x1f0] sm:$0xff]
        %v449 = vld [vmem:[#allocation7 + $0x1f8] sm:$0xff]
        %v450 = vld [vmem:[#allocation7 + $0x200] sm:$0xff]
        %v451 = vld [vmem:[#allocation7 + $0x208] sm:$0xff]
        %v452 = vld [vmem:[#allocation7 + $0x210] sm:$0xff]
        %v453 = vld [vmem:[#allocation7 + $0x218] sm:$0xff]
        %v454 = vld [vmem:[#allocation7 + $0x220] sm:$0xff]
        %v455 = vld [vmem:[#allocation7 + $0x228] sm:$0xff]
        %v456 = vld [vmem:[#allocation7 + $0x230] sm:$0xff]
        %v457 = vld [vmem:[#allocation7 + $0x238] sm:$0xff]
        %v458 = vld [vmem:[#allocation7 + $0x240] sm:$0xff]
        %v459 = vld [vmem:[#allocation7 + $0x248] sm:$0xff]
        %v460 = vld [vmem:[#allocation7 + $0x250] sm:$0xff]
        %v461 = vld [vmem:[#allocation7 + $0x258] sm:$0xff]
        %v462 = vld [vmem:[#allocation7 + $0x260] sm:$0xff]
        %v463 = vld [vmem:[#allocation7 + $0x268] sm:$0xff]
        %v464 = vld [vmem:[#allocation7 + $0x270] sm:$0xff]
        %v465 = vld [vmem:[#allocation7 + $0x278] sm:$0xff]
        %v466 = vld [vmem:[#allocation7 + $0x280] sm:$0xff]
        %v467 = vld [vmem:[#allocation7 + $0x288] sm:$0xff]
        %v468 = vld [vmem:[#allocation7 + $0x290] sm:$0xff]
        %v469 = vld [vmem:[#allocation7 + $0x298] sm:$0xff]
        %v470 = vld [vmem:[#allocation7 + $0x2a0] sm:$0xff]
        %v471 = vld [vmem:[#allocation7 + $0x2a8] sm:$0xff]
        %v472 = vld [vmem:[#allocation7 + $0x2b0] sm:$0xff]
        %v473 = vld [vmem:[#allocation7 + $0x2b8] sm:$0xff]
        %v474 = vld [vmem:[#allocation7 + $0x2c0] sm:$0xff]
        %v475 = vld [vmem:[#allocation7 + $0x2c8] sm:$0xff]
        %v476 = vld [vmem:[#allocation7 + $0x2d0] sm:$0xff]
        %v477 = vld [vmem:[#allocation7 + $0x2d8] sm:$0xff]
        %v478 = vld [vmem:[#allocation7 + $0x2e0] sm:$0xff]
        %v479 = vld [vmem:[#allocation7 + $0x2e8] sm:$0xff]
        %v480 = vld [vmem:[#allocation7 + $0x2f0] sm:$0xff]
        %v481 = vld [vmem:[#allocation7 + $0x2f8] sm:$0xff]
        %v482 = vld [vmem:[%s3] sm:$0x1]
        %v484 = vlaneseq
        %v485 = vshrl.u32 %v484, 7
        %v486 = vsub.s32 0, %v485
        %v487 = vrot.slane %v482, %v486
        %489 = vmatprep.subr.mxu0 0.0
        %490 = vmatpush1.msra.mxu0 %v386
        %491 = vmatprep.subr.mxu0 0.0
        %492 = vmatpush1.msra.mxu0 %v387
        %493 = vmatprep.subr.mxu0 0.0
        %494 = vmatpush1.msra.mxu0 %v388
        %495 = vmatprep.subr.mxu0 0.0
        %496 = vmatpush1.msra.mxu0 %v389
        %497 = vmatprep.subr.mxu0 0.0
        %498 = vmatpush1.msra.mxu0 %v390
        %499 = vmatprep.subr.mxu0 0.0
        %500 = vmatpush1.msra.mxu0 %v391
        %501 = vmatprep.subr.mxu0 0.0
        %502 = vmatpush1.msra.mxu0 %v392
        %503 = vmatprep.subr.mxu0 0.0
        %504 = vmatpush1.msra.mxu0 %v393
        %505 = vmatprep.subr.mxu0 0.0
        %506 = vmatpush1.msra.mxu0 %v394
        %507 = vmatprep.subr.mxu0 0.0
        %508 = vmatpush1.msra.mxu0 %v395
        %509 = vmatprep.subr.mxu0 0.0
        %510 = vmatpush1.msra.mxu0 %v396
        %511 = vmatprep.subr.mxu0 0.0
        %512 = vmatpush1.msra.mxu0 %v397
        %513 = vmatprep.subr.mxu0 0.0
        %514 = vmatpush1.msra.mxu0 %v398
        %515 = vmatprep.subr.mxu0 0.0
        %516 = vmatpush1.msra.mxu0 %v399
        %517 = vmatprep.subr.mxu0 0.0
        %518 = vmatpush1.msra.mxu0 %v400
        %519 = vmatprep.subr.mxu0 0.0
        %520 = vmatpush1.msra.mxu0 %v401
        %521 = vmatprep.subr.mxu0 0.0
        %522 = vmatpush1.msra.mxu0 %v402
        %523 = vmatprep.subr.mxu0 0.0
        %524 = vmatpush1.msra.mxu0 %v403
        %525 = vmatprep.subr.mxu0 0.0
        %526 = vmatpush1.msra.mxu0 %v404
        %527 = vmatprep.subr.mxu0 0.0
        %528 = vmatpush1.msra.mxu0 %v405
        %529 = vmatprep.subr.mxu0 0.0
        %530 = vmatpush1.msra.mxu0 %v406
        %531 = vmatprep.subr.mxu0 0.0
        %532 = vmatpush1.msra.mxu0 %v407
        %533 = vmatprep.subr.mxu0 0.0
        %534 = vmatpush1.msra.mxu0 %v408
        %535 = vmatprep.subr.mxu0 0.0
        %536 = vmatpush1.msra.mxu0 %v409
        %537 = vmatprep.subr.mxu0 0.0
        %538 = vmatpush1.msra.mxu0 %v410
        %539 = vmatprep.subr.mxu0 0.0
        %540 = vmatpush1.msra.mxu0 %v411
        %541 = vmatprep.subr.mxu0 0.0
        %542 = vmatpush1.msra.mxu0 %v412
        %543 = vmatprep.subr.mxu0 0.0
        %544 = vmatpush1.msra.mxu0 %v413
        %545 = vmatprep.subr.mxu0 0.0
        %546 = vmatpush1.msra.mxu0 %v414
        %547 = vmatprep.subr.mxu0 0.0
        %548 = vmatpush1.msra.mxu0 %v415
        %549 = vmatprep.subr.mxu0 0.0
        %550 = vmatpush1.msra.mxu0 %v416
        %551 = vmatprep.subr.mxu0 0.0
        %552 = vmatpush1.msra.mxu0 %v417
        %553 = vmatprep.mubr.f32.mxu0 %v369
        %554 = vmatmul.mubr.f32.gmra.mrb[0].mxu0 %v368
        %v555 = vpop.f32.mrb[0].mxu0
        %v556 = vadd.f32 %v487, %v555
        %v557 = vpop.f32.mrb[0].mxu0
        %558 = vmatprep.mubr.f32.mxu0 %v375
        %559 = vmatmul.mubr.f32.gmra.mrb[0].mxu0 %v374
        %v560 = vpop.f32.mrb[0].mxu0
        %v561 = vadd.f32 %v487, %v560
        %v562 = vpop.f32.mrb[0].mxu0
        %563 = vmatprep.mubr.f32.mxu0 %v381
        %564 = vmatmul.mubr.f32.gmra.mrb[0].mxu0 %v380
        %v565 = vpop.f32.mrb[0].mxu0
        %v566 = vadd.f32 %v487, %v565
        %v567 = vpop.f32.mrb[0].mxu0
        %568 = vdwg.mxu0
        %569 = vmatprep.subr.mxu0 0.0
        %570 = vmatpush1.msra.mxu0 %v418
        %571 = vmatprep.subr.mxu0 0.0
        %572 = vmatpush1.msra.mxu0 %v419
        %573 = vmatprep.subr.mxu0 0.0
        %574 = vmatpush1.msra.mxu0 %v420
        %575 = vmatprep.subr.mxu0 0.0
        %576 = vmatpush1.msra.mxu0 %v421
        %577 = vmatprep.subr.mxu0 0.0
        %578 = vmatpush1.msra.mxu0 %v422
        %579 = vmatprep.subr.mxu0 0.0
        %580 = vmatpush1.msra.mxu0 %v423
        %581 = vmatprep.subr.mxu0 0.0
        %582 = vmatpush1.msra.mxu0 %v424
        %583 = vmatprep.subr.mxu0 0.0
        %584 = vmatpush1.msra.mxu0 %v425
        %585 = vmatprep.subr.mxu0 0.0
        %586 = vmatpush1.msra.mxu0 %v426
        %587 = vmatprep.subr.mxu0 0.0
        %588 = vmatpush1.msra.mxu0 %v427
        %589 = vmatprep.subr.mxu0 0.0
        %590 = vmatpush1.msra.mxu0 %v428
        %591 = vmatprep.subr.mxu0 0.0
        %592 = vmatpush1.msra.mxu0 %v429
        %593 = vmatprep.subr.mxu0 0.0
        %594 = vmatpush1.msra.mxu0 %v430
        %595 = vmatprep.subr.mxu0 0.0
        %596 = vmatpush1.msra.mxu0 %v431
        %597 = vmatprep.subr.mxu0 0.0
        %598 = vmatpush1.msra.mxu0 %v432
        %599 = vmatprep.subr.mxu0 0.0
        %600 = vmatpush1.msra.mxu0 %v433
        %601 = vmatprep.subr.mxu0 0.0
        %602 = vmatpush1.msra.mxu0 %v434
        %603 = vmatprep.subr.mxu0 0.0
        %604 = vmatpush1.msra.mxu0 %v435
        %605 = vmatprep.subr.mxu0 0.0
        %606 = vmatpush1.msra.mxu0 %v436
        %607 = vmatprep.subr.mxu0 0.0
        %608 = vmatpush1.msra.mxu0 %v437
        %609 = vmatprep.subr.mxu0 0.0
        %610 = vmatpush1.msra.mxu0 %v438
        %611 = vmatprep.subr.mxu0 0.0
        %612 = vmatpush1.msra.mxu0 %v439
        %613 = vmatprep.subr.mxu0 0.0
        %614 = vmatpush1.msra.mxu0 %v440
        %615 = vmatprep.subr.mxu0 0.0
        %616 = vmatpush1.msra.mxu0 %v441
        %617 = vmatprep.subr.mxu0 0.0
        %618 = vmatpush1.msra.mxu0 %v442
        %619 = vmatprep.subr.mxu0 0.0
        %620 = vmatpush1.msra.mxu0 %v443
        %621 = vmatprep.subr.mxu0 0.0
        %622 = vmatpush1.msra.mxu0 %v444
        %623 = vmatprep.subr.mxu0 0.0
        %624 = vmatpush1.msra.mxu0 %v445
        %625 = vmatprep.subr.mxu0 0.0
        %626 = vmatpush1.msra.mxu0 %v446
        %627 = vmatprep.subr.mxu0 0.0
        %628 = vmatpush1.msra.mxu0 %v447
        %629 = vmatprep.subr.mxu0 0.0
        %630 = vmatpush1.msra.mxu0 %v448
        %631 = vmatprep.subr.mxu0 0.0
        %632 = vmatpush1.msra.mxu0 %v449
        %633 = vmatprep.mubr.f32.mxu0 %v371
        %634 = vmatmul.mubr.f32.gmra.mrb[0].mxu0 %v370
        %v635 = vpop.f32.mrb[0].mxu0
        %v636 = vadd.f32 %v556, %v635
        %v637 = vpop.f32.mrb[0].mxu0
        %638 = vmatprep.mubr.f32.mxu0 %v377
        %639 = vmatmul.mubr.f32.gmra.mrb[0].mxu0 %v376
        %v640 = vpop.f32.mrb[0].mxu0
        %v641 = vadd.f32 %v561, %v640
        %v642 = vpop.f32.mrb[0].mxu0
        %643 = vmatprep.mubr.f32.mxu0 %v383
        %644 = vmatmul.mubr.f32.gmra.mrb[0].mxu0 %v382
        %v645 = vpop.f32.mrb[0].mxu0
        %v646 = vadd.f32 %v566, %v645
        %v647 = vpop.f32.mrb[0].mxu0
        %648 = vdwg.mxu0
        %649 = vmatprep.subr.mxu0 0.0
        %650 = vmatpush1.msra.mxu0 %v450
        %651 = vmatprep.subr.mxu0 0.0
        %652 = vmatpush1.msra.mxu0 %v451
        %653 = vmatprep.subr.mxu0 0.0
        %654 = vmatpush1.msra.mxu0 %v452
        %655 = vmatprep.subr.mxu0 0.0
        %656 = vmatpush1.msra.mxu0 %v453
        %657 = vmatprep.subr.mxu0 0.0
        %658 = vmatpush1.msra.mxu0 %v454
        %659 = vmatprep.subr.mxu0 0.0
        %660 = vmatpush1.msra.mxu0 %v455
        %661 = vmatprep.subr.mxu0 0.0
        %662 = vmatpush1.msra.mxu0 %v456
        %663 = vmatprep.subr.mxu0 0.0
        %664 = vmatpush1.msra.mxu0 %v457
        %665 = vmatprep.subr.mxu0 0.0
        %666 = vmatpush1.msra.mxu0 %v458
        %667 = vmatprep.subr.mxu0 0.0
        %668 = vmatpush1.msra.mxu0 %v459
        %669 = vmatprep.subr.mxu0 0.0
        %670 = vmatpush1.msra.mxu0 %v460
        %671 = vmatprep.subr.mxu0 0.0
        %672 = vmatpush1.msra.mxu0 %v461
        %673 = vmatprep.subr.mxu0 0.0
        %674 = vmatpush1.msra.mxu0 %v462
        %675 = vmatprep.subr.mxu0 0.0
        %676 = vmatpush1.msra.mxu0 %v463
        %677 = vmatprep.subr.mxu0 0.0
        %678 = vmatpush1.msra.mxu0 %v464
        %679 = vmatprep.subr.mxu0 0.0
        %680 = vmatpush1.msra.mxu0 %v465
        %681 = vmatprep.subr.mxu0 0.0
        %682 = vmatpush1.msra.mxu0 %v466
        %683 = vmatprep.subr.mxu0 0.0
        %684 = vmatpush1.msra.mxu0 %v467
        %685 = vmatprep.subr.mxu0 0.0
        %686 = vmatpush1.msra.mxu0 %v468
        %687 = vmatprep.subr.mxu0 0.0
        %688 = vmatpush1.msra.mxu0 %v469
        %689 = vmatprep.subr.mxu0 0.0
        %690 = vmatpush1.msra.mxu0 %v470
        %691 = vmatprep.subr.mxu0 0.0
        %692 = vmatpush1.msra.mxu0 %v471
        %693 = vmatprep.subr.mxu0 0.0
        %694 = vmatpush1.msra.mxu0 %v472
        %695 = vmatprep.subr.mxu0 0.0
        %696 = vmatpush1.msra.mxu0 %v473
        %697 = vmatprep.subr.mxu0 0.0
        %698 = vmatpush1.msra.mxu0 %v474
        %699 = vmatprep.subr.mxu0 0.0
        %700 = vmatpush1.msra.mxu0 %v475
        %701 = vmatprep.subr.mxu0 0.0
        %702 = vmatpush1.msra.mxu0 %v476
        %703 = vmatprep.subr.mxu0 0.0
        %704 = vmatpush1.msra.mxu0 %v477
        %705 = vmatprep.subr.mxu0 0.0
        %706 = vmatpush1.msra.mxu0 %v478
        %707 = vmatprep.subr.mxu0 0.0
        %708 = vmatpush1.msra.mxu0 %v479
        %709 = vmatprep.subr.mxu0 0.0
        %710 = vmatpush1.msra.mxu0 %v480
        %711 = vmatprep.subr.mxu0 0.0
        %712 = vmatpush1.msra.mxu0 %v481
        %713 = vmatprep.mubr.f32.mxu0 %v373
        %714 = vmatmul.mubr.f32.gmra.mrb[0].mxu0 %v372
        %v715 = vpop.f32.mrb[0].mxu0
        %v716 = vadd.f32 %v636, %v715
        %v717 = vpop.f32.mrb[0].mxu0
        %718 = vmatprep.mubr.f32.mxu0 %v379
        %719 = vmatmul.mubr.f32.gmra.mrb[0].mxu0 %v378
        %v720 = vpop.f32.mrb[0].mxu0
        %v721 = vadd.f32 %v641, %v720
        %v722 = vpop.f32.mrb[0].mxu0
        %723 = vmatprep.mubr.f32.mxu0 %v385
        %724 = vmatmul.mubr.f32.gmra.mrb[0].mxu0 %v384
        %v725 = vpop.f32.mrb[0].mxu0
        %v726 = vadd.f32 %v646, %v725
        %v727 = vpop.f32.mrb[0].mxu0
        %728 = vdwg.mxu0
        %v729 = vmax.f32 %v716, 0.0
        %v730 = vmax.f32 %v721, 0.0
        %v731 = vmax.f32 %v726, 0.0
        %v732 = vld [vmem:[%s1] sm:$0xff]
        %v733 = vld [vmem:[%s1 + $0x8] sm:$0xff]
        %v734 = vld [vmem:[%s1 + $0x10] sm:$0xff]
        %v735 = vld [vmem:[%s1 + $0x18] sm:$0xff]
        %v736 = vld [vmem:[%s1 + $0x20] sm:$0xff]
        %v737 = vld [vmem:[%s1 + $0x28] sm:$0xff]
        %v738 = vld [vmem:[%s1 + $0x30] sm:$0xff]
        %v739 = vld [vmem:[%s1 + $0x38] sm:$0xff]
        %v740 = vld [vmem:[%s1 + $0x40] sm:$0xff]
        %v741 = vld [vmem:[%s1 + $0x48] sm:$0xff]
        %vm742 = vcmask 195584
        %v744 = vsel %vm742, %v732, 0
        %v747 = vsel %vm742, %v733, 0
        %v750 = vsel %vm742, %v734, 0
        %v753 = vsel %vm742, %v735, 0
        %v756 = vsel %vm742, %v736, 0
        %v759 = vsel %vm742, %v737, 0
        %v762 = vsel %vm742, %v738, 0
        %v765 = vsel %vm742, %v739, 0
        %v768 = vsel %vm742, %v740, 0
        %v771 = vsel %vm742, %v741, 0
        %773 = vmatprep.subr.mxu0 0.0
        %774 = vmatpush1.msra.mxu0 %v729
        %775 = vmatprep.subr.mxu0 0.0
        %776 = vmatpush1.msra.mxu0 %v730
        %777 = vmatprep.subr.mxu0 0.0
        %778 = vmatpush1.msra.mxu0 %v731
        %779 = vmatprep.subr.mxu0 0.0
        %780 = vmatpush1.msra.mxu0 0.0
        %781 = vmatprep.subr.mxu0 0.0
        %782 = vmatpush1.msra.mxu0 0.0
        %783 = vmatprep.subr.mxu0 0.0
        %784 = vmatpush1.msra.mxu0 0.0
        %785 = vmatprep.subr.mxu0 0.0
        %786 = vmatpush1.msra.mxu0 0.0
        %787 = vmatprep.subr.mxu0 0.0
        %788 = vmatpush1.msra.mxu0 0.0
        %789 = vmatprep.subr.mxu0 0.0
        %790 = vmatpush1.msra.mxu0 0.0
        %791 = vmatprep.subr.mxu0 0.0
        %792 = vmatpush1.msra.mxu0 0.0
        %793 = vmatprep.subr.mxu0 0.0
        %794 = vmatpush1.msra.mxu0 0.0
        %795 = vmatprep.subr.mxu0 0.0
        %796 = vmatpush1.msra.mxu0 0.0
        %797 = vmatprep.subr.mxu0 0.0
        %798 = vmatpush1.msra.mxu0 0.0
        %799 = vmatprep.subr.mxu0 0.0
        %800 = vmatpush1.msra.mxu0 0.0
        %801 = vmatprep.subr.mxu0 0.0
        %802 = vmatpush1.msra.mxu0 0.0
        %803 = vmatprep.subr.mxu0 0.0
        %804 = vmatpush1.msra.mxu0 0.0
        %805 = vmatprep.subr.mxu0 0.0
        %806 = vmatpush1.msra.mxu0 0.0
        %807 = vmatprep.subr.mxu0 0.0
        %808 = vmatpush1.msra.mxu0 0.0
        %809 = vmatprep.subr.mxu0 0.0
        %810 = vmatpush1.msra.mxu0 0.0
        %811 = vmatprep.subr.mxu0 0.0
        %812 = vmatpush1.msra.mxu0 0.0
        %813 = vmatprep.subr.mxu0 0.0
        %814 = vmatpush1.msra.mxu0 0.0
        %815 = vmatprep.subr.mxu0 0.0
        %816 = vmatpush1.msra.mxu0 0.0
        %817 = vmatprep.subr.mxu0 0.0
        %818 = vmatpush1.msra.mxu0 0.0
        %819 = vmatprep.subr.mxu0 0.0
        %820 = vmatpush1.msra.mxu0 0.0
        %821 = vmatprep.subr.mxu0 0.0
        %822 = vmatpush1.msra.mxu0 0.0
        %823 = vmatprep.subr.mxu0 0.0
        %824 = vmatpush1.msra.mxu0 0.0
        %825 = vmatprep.subr.mxu0 0.0
        %826 = vmatpush1.msra.mxu0 0.0
        %827 = vmatprep.subr.mxu0 0.0
        %828 = vmatpush1.msra.mxu0 0.0
        %829 = vmatprep.subr.mxu0 0.0
        %830 = vmatpush1.msra.mxu0 0.0
        %831 = vmatprep.subr.mxu0 0.0
        %832 = vmatpush1.msra.mxu0 0.0
        %833 = vmatprep.subr.mxu0 0.0
        %834 = vmatpush1.msra.mxu0 0.0
        %835 = vmatprep.subr.mxu0 0.0
        %836 = vmatpush1.msra.mxu0 0.0
        %837 = vmatprep.mubr.f32.mxu0 0.0
        %838 = vmatmul.mubr.f32.gmra.mrb[0].mxu0 %v744
        %v839 = vpop.f32.mrb[0].mxu0
        %v840 = vadd.f32 0.0, %v839
        %v841 = vpop.f32.mrb[0].mxu0
        %842 = vmatprep.mubr.f32.mxu0 0.0
        %843 = vmatmul.mubr.f32.gmra.mrb[0].mxu0 %v747
        %v844 = vpop.f32.mrb[0].mxu0
        %v845 = vadd.f32 0.0, %v844
        %v846 = vpop.f32.mrb[0].mxu0
        %847 = vmatprep.mubr.f32.mxu0 0.0
        %848 = vmatmul.mubr.f32.gmra.mrb[0].mxu0 %v750
        %v849 = vpop.f32.mrb[0].mxu0
        %v850 = vadd.f32 0.0, %v849
        %v851 = vpop.f32.mrb[0].mxu0
        %852 = vmatprep.mubr.f32.mxu0 0.0
        %853 = vmatmul.mubr.f32.gmra.mrb[0].mxu0 %v753
        %v854 = vpop.f32.mrb[0].mxu0
        %v855 = vadd.f32 0.0, %v854
        %v856 = vpop.f32.mrb[0].mxu0
        %857 = vmatprep.mubr.f32.mxu0 0.0
        %858 = vmatmul.mubr.f32.gmra.mrb[0].mxu0 %v756
        %v859 = vpop.f32.mrb[0].mxu0
        %v860 = vadd.f32 0.0, %v859
        %v861 = vpop.f32.mrb[0].mxu0
        %862 = vmatprep.mubr.f32.mxu0 0.0
        %863 = vmatmul.mubr.f32.gmra.mrb[0].mxu0 %v759
        %v864 = vpop.f32.mrb[0].mxu0
        %v865 = vadd.f32 0.0, %v864
        %v866 = vpop.f32.mrb[0].mxu0
        %867 = vmatprep.mubr.f32.mxu0 0.0
        %868 = vmatmul.mubr.f32.gmra.mrb[0].mxu0 %v762
        %v869 = vpop.f32.mrb[0].mxu0
        %v870 = vadd.f32 0.0, %v869
        %v871 = vpop.f32.mrb[0].mxu0
        %872 = vmatprep.mubr.f32.mxu0 0.0
        %873 = vmatmul.mubr.f32.gmra.mrb[0].mxu0 %v765
        %v874 = vpop.f32.mrb[0].mxu0
        %v875 = vadd.f32 0.0, %v874
        %v876 = vpop.f32.mrb[0].mxu0
        %877 = vmatprep.mubr.f32.mxu0 0.0
        %878 = vmatmul.mubr.f32.gmra.mrb[0].mxu0 %v768
        %v879 = vpop.f32.mrb[0].mxu0
        %v880 = vadd.f32 0.0, %v879
        %v881 = vpop.f32.mrb[0].mxu0
        %882 = vmatprep.mubr.f32.mxu0 0.0
        %883 = vmatmul.mubr.f32.gmra.mrb[0].mxu0 %v771
        %v884 = vpop.f32.mrb[0].mxu0
        %v885 = vadd.f32 0.0, %v884
        %v886 = vpop.f32.mrb[0].mxu0
        %887 = vdwg.mxu0
        %888 = vst [vmem:[#allocation2] sm:$0xff] %v840
        %889 = vst [vmem:[#allocation2 + $0x58] sm:$0xff] %v845
        %890 = vst [vmem:[#allocation2 + $0xb0] sm:$0xff] %v850
        %891 = vst [vmem:[#allocation2 + $0x108] sm:$0xff] %v855
        %892 = vst [vmem:[#allocation2 + $0x160] sm:$0xff] %v860
        %893 = vst [vmem:[#allocation2 + $0x1b8] sm:$0xff] %v865
        %894 = vst [vmem:[#allocation2 + $0x210] sm:$0xff] %v870
        %895 = vst [vmem:[#allocation2 + $0x268] sm:$0xff] %v875
        %vm905 = vcmask 1046528
        %v906 = vrot.slane %v840, 1
        %v907 = vrot.slane %v845, 1
        %v908 = vsel %vm905, %v906, %v907
        %v909 = vrot.slane %v850, 1
        %v910 = vsel %vm905, %v907, %v909
        %v911 = vrot.slane %v855, 1
        %v912 = vsel %vm905, %v909, %v911
        %v913 = vrot.slane %v860, 1
        %v914 = vsel %vm905, %v911, %v913
        %v915 = vrot.slane %v865, 1
        %v916 = vsel %vm905, %v913, %v915
        %v917 = vrot.slane %v870, 1
        %v918 = vsel %vm905, %v915, %v917
        %v919 = vrot.slane %v875, 1
        %v920 = vsel %vm905, %v917, %v919
        %v921 = vrot.slane %v880, 1
        %v922 = vsel %vm905, %v919, %v921
        %931 = vst [vmem:[#allocation2 + $0x8] sm:$0xff] %v908
        %932 = vst [vmem:[#allocation2 + $0x60] sm:$0xff] %v910
        %933 = vst [vmem:[#allocation2 + $0xb8] sm:$0xff] %v912
        %934 = vst [vmem:[#allocation2 + $0x110] sm:$0xff] %v914
        %935 = vst [vmem:[#allocation2 + $0x168] sm:$0xff] %v916
        %936 = vst [vmem:[#allocation2 + $0x1c0] sm:$0xff] %v918
        %937 = vst [vmem:[#allocation2 + $0x218] sm:$0xff] %v920
        %938 = vst [vmem:[#allocation2 + $0x270] sm:$0xff] %v922
        %vm939 = vcmask 1045504
        %v940 = vrot.slane %v840, 2
        %v941 = vrot.slane %v845, 2
        %v942 = vsel %vm939, %v940, %v941
        %v943 = vrot.slane %v850, 2
        %v944 = vsel %vm939, %v941, %v943
        %v945 = vrot.slane %v855, 2
        %v946 = vsel %vm939, %v943, %v945
        %v947 = vrot.slane %v860, 2
        %v948 = vsel %vm939, %v945, %v947
        %v949 = vrot.slane %v865, 2
        %v950 = vsel %vm939, %v947, %v949
        %v951 = vrot.slane %v870, 2
        %v952 = vsel %vm939, %v949, %v951
        %v953 = vrot.slane %v875, 2
        %v954 = vsel %vm939, %v951, %v953
        %v955 = vrot.slane %v880, 2
        %v956 = vsel %vm939, %v953, %v955
        %965 = vst [vmem:[#allocation2 + $0x10] sm:$0xff] %v942
        %966 = vst [vmem:[#allocation2 + $0x68] sm:$0xff] %v944
        %967 = vst [vmem:[#allocation2 + $0xc0] sm:$0xff] %v946
        %968 = vst [vmem:[#allocation2 + $0x118] sm:$0xff] %v948
        %969 = vst [vmem:[#allocation2 + $0x170] sm:$0xff] %v950
        %970 = vst [vmem:[#allocation2 + $0x1c8] sm:$0xff] %v952
        %971 = vst [vmem:[#allocation2 + $0x220] sm:$0xff] %v954
        %972 = vst [vmem:[#allocation2 + $0x278] sm:$0xff] %v956
        %vm973 = vcmask 1044480
        %v974 = vrot.slane %v840, 3
        %v975 = vrot.slane %v845, 3
        %v976 = vsel %vm973, %v974, %v975
        %v977 = vrot.slane %v850, 3
        %v978 = vsel %vm973, %v975, %v977
        %v979 = vrot.slane %v855, 3
        %v980 = vsel %vm973, %v977, %v979
        %v981 = vrot.slane %v860, 3
        %v982 = vsel %vm973, %v979, %v981
        %v983 = vrot.slane %v865, 3
        %v984 = vsel %vm973, %v981, %v983
        %v985 = vrot.slane %v870, 3
        %v986 = vsel %vm973, %v983, %v985
        %v987 = vrot.slane %v875, 3
        %v988 = vsel %vm973, %v985, %v987
        %v989 = vrot.slane %v880, 3
        %v990 = vsel %vm973, %v987, %v989
        %999 = vst [vmem:[#allocation2 + $0x18] sm:$0xff] %v976
        %1000 = vst [vmem:[#allocation2 + $0x70] sm:$0xff] %v978
        %1001 = vst [vmem:[#allocation2 + $0xc8] sm:$0xff] %v980
        %1002 = vst [vmem:[#allocation2 + $0x120] sm:$0xff] %v982
        %1003 = vst [vmem:[#allocation2 + $0x178] sm:$0xff] %v984
        %1004 = vst [vmem:[#allocation2 + $0x1d0] sm:$0xff] %v986
        %1005 = vst [vmem:[#allocation2 + $0x228] sm:$0xff] %v988
        %1006 = vst [vmem:[#allocation2 + $0x280] sm:$0xff] %v990
        %vm1007 = vcmask 1043456
        %v1008 = vrot.slane %v840, 4
        %v1009 = vrot.slane %v845, 4
        %v1010 = vsel %vm1007, %v1008, %v1009
        %v1011 = vrot.slane %v850, 4
        %v1012 = vsel %vm1007, %v1009, %v1011
        %v1013 = vrot.slane %v855, 4
        %v1014 = vsel %vm1007, %v1011, %v1013
        %v1015 = vrot.slane %v860, 4
        %v1016 = vsel %vm1007, %v1013, %v1015
        %v1017 = vrot.slane %v865, 4
        %v1018 = vsel %vm1007, %v1015, %v1017
        %v1019 = vrot.slane %v870, 4
        %v1020 = vsel %vm1007, %v1017, %v1019
        %v1021 = vrot.slane %v875, 4
        %v1022 = vsel %vm1007, %v1019, %v1021
        %v1023 = vrot.slane %v880, 4
        %v1024 = vsel %vm1007, %v1021, %v1023
        %1033 = vst [vmem:[#allocation2 + $0x20] sm:$0xff] %v1010
        %1034 = vst [vmem:[#allocation2 + $0x78] sm:$0xff] %v1012
        %1035 = vst [vmem:[#allocation2 + $0xd0] sm:$0xff] %v1014
        %1036 = vst [vmem:[#allocation2 + $0x128] sm:$0xff] %v1016
        %1037 = vst [vmem:[#allocation2 + $0x180] sm:$0xff] %v1018
        %1038 = vst [vmem:[#allocation2 + $0x1d8] sm:$0xff] %v1020
        %1039 = vst [vmem:[#allocation2 + $0x230] sm:$0xff] %v1022
        %1040 = vst [vmem:[#allocation2 + $0x288] sm:$0xff] %v1024
        %vm1041 = vcmask 1042432
        %v1042 = vrot.slane %v840, 5
        %v1043 = vrot.slane %v845, 5
        %v1044 = vsel %vm1041, %v1042, %v1043
        %v1045 = vrot.slane %v850, 5
        %v1046 = vsel %vm1041, %v1043, %v1045
        %v1047 = vrot.slane %v855, 5
        %v1048 = vsel %vm1041, %v1045, %v1047
        %v1049 = vrot.slane %v860, 5
        %v1050 = vsel %vm1041, %v1047, %v1049
        %v1051 = vrot.slane %v865, 5
        %v1052 = vsel %vm1041, %v1049, %v1051
        %v1053 = vrot.slane %v870, 5
        %v1054 = vsel %vm1041, %v1051, %v1053
        %v1055 = vrot.slane %v875, 5
        %v1056 = vsel %vm1041, %v1053, %v1055
        %v1057 = vrot.slane %v880, 5
        %v1058 = vsel %vm1041, %v1055, %v1057
        %1067 = vst [vmem:[#allocation2 + $0x28] sm:$0xff] %v1044
        %1068 = vst [vmem:[#allocation2 + $0x80] sm:$0xff] %v1046
        %1069 = vst [vmem:[#allocation2 + $0xd8] sm:$0xff] %v1048
        %1070 = vst [vmem:[#allocation2 + $0x130] sm:$0xff] %v1050
        %1071 = vst [vmem:[#allocation2 + $0x188] sm:$0xff] %v1052
        %1072 = vst [vmem:[#allocation2 + $0x1e0] sm:$0xff] %v1054
        %1073 = vst [vmem:[#allocation2 + $0x238] sm:$0xff] %v1056
        %1074 = vst [vmem:[#allocation2 + $0x290] sm:$0xff] %v1058
        %vm1075 = vcmask 1041408
        %v1076 = vrot.slane %v840, 6
        %v1077 = vrot.slane %v845, 6
        %v1078 = vsel %vm1075, %v1076, %v1077
        %v1079 = vrot.slane %v850, 6
        %v1080 = vsel %vm1075, %v1077, %v1079
        %v1081 = vrot.slane %v855, 6
        %v1082 = vsel %vm1075, %v1079, %v1081
        %v1083 = vrot.slane %v860, 6
        %v1084 = vsel %vm1075, %v1081, %v1083
        %v1085 = vrot.slane %v865, 6
        %v1086 = vsel %vm1075, %v1083, %v1085
        %v1087 = vrot.slane %v870, 6
        %v1088 = vsel %vm1075, %v1085, %v1087
        %v1089 = vrot.slane %v875, 6
        %v1090 = vsel %vm1075, %v1087, %v1089
        %v1091 = vrot.slane %v880, 6
        %v1092 = vsel %vm1075, %v1089, %v1091
        %1101 = vst [vmem:[#allocation2 + $0x30] sm:$0xff] %v1078
        %1102 = vst [vmem:[#allocation2 + $0x88] sm:$0xff] %v1080
        %1103 = vst [vmem:[#allocation2 + $0xe0] sm:$0xff] %v1082
        %1104 = vst [vmem:[#allocation2 + $0x138] sm:$0xff] %v1084
        %1105 = vst [vmem:[#allocation2 + $0x190] sm:$0xff] %v1086
        %1106 = vst [vmem:[#allocation2 + $0x1e8] sm:$0xff] %v1088
        %1107 = vst [vmem:[#allocation2 + $0x240] sm:$0xff] %v1090
        %1108 = vst [vmem:[#allocation2 + $0x298] sm:$0xff] %v1092
        %vm1109 = vcmask 1040384
        %v1110 = vrot.slane %v840, 7
        %v1111 = vrot.slane %v845, 7
        %v1112 = vsel %vm1109, %v1110, %v1111
        %v1113 = vrot.slane %v850, 7
        %v1114 = vsel %vm1109, %v1111, %v1113
        %v1115 = vrot.slane %v855, 7
        %v1116 = vsel %vm1109, %v1113, %v1115
        %v1117 = vrot.slane %v860, 7
        %v1118 = vsel %vm1109, %v1115, %v1117
        %v1119 = vrot.slane %v865, 7
        %v1120 = vsel %vm1109, %v1117, %v1119
        %v1121 = vrot.slane %v870, 7
        %v1122 = vsel %vm1109, %v1119, %v1121
        %v1123 = vrot.slane %v875, 7
        %v1124 = vsel %vm1109, %v1121, %v1123
        %v1125 = vrot.slane %v880, 7
        %v1126 = vsel %vm1109, %v1123, %v1125
        %1135 = vst [vmem:[#allocation2 + $0x38] sm:$0xff] %v1112
        %1136 = vst [vmem:[#allocation2 + $0x90] sm:$0xff] %v1114
        %1137 = vst [vmem:[#allocation2 + $0xe8] sm:$0xff] %v1116
        %1138 = vst [vmem:[#allocation2 + $0x140] sm:$0xff] %v1118
        %1139 = vst [vmem:[#allocation2 + $0x198] sm:$0xff] %v1120
        %1140 = vst [vmem:[#allocation2 + $0x1f0] sm:$0xff] %v1122
        %1141 = vst [vmem:[#allocation2 + $0x248] sm:$0xff] %v1124
        %1142 = vst [vmem:[#allocation2 + $0x2a0] sm:$0xff] %v1126
        %1143 = vst [vmem:[#allocation2 + $0x40] sm:$0xff] %v845
        %1144 = vst [vmem:[#allocation2 + $0x98] sm:$0xff] %v850
        %1145 = vst [vmem:[#allocation2 + $0xf0] sm:$0xff] %v855
        %1146 = vst [vmem:[#allocation2 + $0x148] sm:$0xff] %v860
        %1147 = vst [vmem:[#allocation2 + $0x1a0] sm:$0xff] %v865
        %1148 = vst [vmem:[#allocation2 + $0x1f8] sm:$0xff] %v870
        %1149 = vst [vmem:[#allocation2 + $0x250] sm:$0xff] %v875
        %1150 = vst [vmem:[#allocation2 + $0x2a8] sm:$0xff] %v880
        %v1152 = vrot.slane %v885, 1
        %v1153 = vsel %vm905, %v921, %v1152
        %1155 = vst [vmem:[#allocation2 + $0x48] sm:$0xff] %v910
        %1156 = vst [vmem:[#allocation2 + $0xa0] sm:$0xff] %v912
        %1157 = vst [vmem:[#allocation2 + $0xf8] sm:$0xff] %v914
        %1158 = vst [vmem:[#allocation2 + $0x150] sm:$0xff] %v916
        %1159 = vst [vmem:[#allocation2 + $0x1a8] sm:$0xff] %v918
        %1160 = vst [vmem:[#allocation2 + $0x200] sm:$0xff] %v920
        %1161 = vst [vmem:[#allocation2 + $0x258] sm:$0xff] %v922
        %1162 = vst [vmem:[#allocation2 + $0x2b0] sm:$0xff] %v1153
        %v1163 = vrot.slane %v885, 2
        %v1164 = vsel %vm939, %v955, %v1163
        %1166 = vst [vmem:[#allocation2 + $0x50] sm:$0xff] %v944
        %1167 = vst [vmem:[#allocation2 + $0xa8] sm:$0xff] %v946
        %1168 = vst [vmem:[#allocation2 + $0x100] sm:$0xff] %v948
        %1169 = vst [vmem:[#allocation2 + $0x158] sm:$0xff] %v950
        %1170 = vst [vmem:[#allocation2 + $0x1b0] sm:$0xff] %v952
        %1171 = vst [vmem:[#allocation2 + $0x208] sm:$0xff] %v954
        %1172 = vst [vmem:[#allocation2 + $0x260] sm:$0xff] %v956
        %1173 = vst [vmem:[#allocation2 + $0x2b8] sm:$0xff] %v1164
        %v1174 = vld [vmem:[#allocation2] sm:$0xff]
        %v1175 = vld [vmem:[#allocation2 + $0x8] sm:$0xff]
        %v1176 = vld [vmem:[#allocation2 + $0x10] sm:$0xff]
        %v1177 = vld [vmem:[#allocation2 + $0x18] sm:$0xff]
        %v1178 = vld [vmem:[#allocation2 + $0x20] sm:$0xff]
        %v1179 = vld [vmem:[#allocation2 + $0x28] sm:$0xff]
        %v1180 = vld [vmem:[#allocation2 + $0x30] sm:$0xff]
        %v1181 = vld [vmem:[#allocation2 + $0x38] sm:$0xff]
        %v1182 = vld [vmem:[#allocation2 + $0x40] sm:$0xff]
        %v1183 = vld [vmem:[#allocation2 + $0x48] sm:$0xff]
        %v1184 = vld [vmem:[#allocation2 + $0x50] sm:$0xff]
        %v1185 = vld [vmem:[#allocation2 + $0x58] sm:$0xff]
        %v1186 = vld [vmem:[#allocation2 + $0x60] sm:$0xff]
        %v1187 = vld [vmem:[#allocation2 + $0x68] sm:$0xff]
        %v1188 = vld [vmem:[#allocation2 + $0x70] sm:$0xff]
        %v1189 = vld [vmem:[#allocation2 + $0x78] sm:$0xff]
        %v1190 = vld [vmem:[#allocation2 + $0x80] sm:$0xff]
        %v1191 = vld [vmem:[#allocation2 + $0x88] sm:$0xff]
        %v1192 = vld [vmem:[#allocation2 + $0x90] sm:$0xff]
        %v1193 = vld [vmem:[#allocation2 + $0x98] sm:$0xff]
        %v1194 = vld [vmem:[#allocation2 + $0xa0] sm:$0xff]
        %v1195 = vld [vmem:[#allocation2 + $0xa8] sm:$0xff]
        %v1196 = vld [vmem:[#allocation2 + $0xb0] sm:$0xff]
        %v1197 = vld [vmem:[#allocation2 + $0xb8] sm:$0xff]
        %v1198 = vld [vmem:[#allocation2 + $0xc0] sm:$0xff]
        %v1199 = vld [vmem:[#allocation2 + $0xc8] sm:$0xff]
        %v1200 = vld [vmem:[#allocation2 + $0xd0] sm:$0xff]
        %v1201 = vld [vmem:[#allocation2 + $0xd8] sm:$0xff]
        %v1202 = vld [vmem:[#allocation2 + $0xe0] sm:$0xff]
        %v1203 = vld [vmem:[#allocation2 + $0xe8] sm:$0xff]
        %v1204 = vld [vmem:[#allocation2 + $0xf0] sm:$0xff]
        %v1205 = vld [vmem:[#allocation2 + $0xf8] sm:$0xff]
        %v1206 = vld [vmem:[#allocation2 + $0x100] sm:$0xff]
        %v1207 = vld [vmem:[#allocation2 + $0x108] sm:$0xff]
        %v1208 = vld [vmem:[#allocation2 + $0x110] sm:$0xff]
        %v1209 = vld [vmem:[#allocation2 + $0x118] sm:$0xff]
        %v1210 = vld [vmem:[#allocation2 + $0x120] sm:$0xff]
        %v1211 = vld [vmem:[#allocation2 + $0x128] sm:$0xff]
        %v1212 = vld [vmem:[#allocation2 + $0x130] sm:$0xff]
        %v1213 = vld [vmem:[#allocation2 + $0x138] sm:$0xff]
        %v1214 = vld [vmem:[#allocation2 + $0x140] sm:$0xff]
        %v1215 = vld [vmem:[#allocation2 + $0x148] sm:$0xff]
        %v1216 = vld [vmem:[#allocation2 + $0x150] sm:$0xff]
        %v1217 = vld [vmem:[#allocation2 + $0x158] sm:$0xff]
        %v1218 = vld [vmem:[#allocation2 + $0x160] sm:$0xff]
        %v1219 = vld [vmem:[#allocation2 + $0x168] sm:$0xff]
        %v1220 = vld [vmem:[#allocation2 + $0x170] sm:$0xff]
        %v1221 = vld [vmem:[#allocation2 + $0x178] sm:$0xff]
        %v1222 = vld [vmem:[#allocation2 + $0x180] sm:$0xff]
        %v1223 = vld [vmem:[#allocation2 + $0x188] sm:$0xff]
        %v1224 = vld [vmem:[#allocation2 + $0x190] sm:$0xff]
        %v1225 = vld [vmem:[#allocation2 + $0x198] sm:$0xff]
        %v1226 = vld [vmem:[#allocation2 + $0x1a0] sm:$0xff]
        %v1227 = vld [vmem:[#allocation2 + $0x1a8] sm:$0xff]
        %v1228 = vld [vmem:[#allocation2 + $0x1b0] sm:$0xff]
        %v1229 = vld [vmem:[#allocation2 + $0x1b8] sm:$0xff]
        %v1230 = vld [vmem:[#allocation2 + $0x1c0] sm:$0xff]
        %v1231 = vld [vmem:[#allocation2 + $0x1c8] sm:$0xff]
        %v1232 = vld [vmem:[#allocation2 + $0x1d0] sm:$0xff]
        %v1233 = vld [vmem:[#allocation2 + $0x1d8] sm:$0xff]
        %v1234 = vld [vmem:[#allocation2 + $0x1e0] sm:$0xff]
        %v1235 = vld [vmem:[#allocation2 + $0x1e8] sm:$0xff]
        %v1236 = vld [vmem:[#allocation2 + $0x1f0] sm:$0xff]
        %v1237 = vld [vmem:[#allocation2 + $0x1f8] sm:$0xff]
        %v1238 = vld [vmem:[#allocation2 + $0x200] sm:$0xff]
        %v1239 = vld [vmem:[#allocation2 + $0x208] sm:$0xff]
        %v1240 = vld [vmem:[#allocation2 + $0x210] sm:$0xff]
        %v1241 = vld [vmem:[#allocation2 + $0x218] sm:$0xff]
        %v1242 = vld [vmem:[#allocation2 + $0x220] sm:$0xff]
        %v1243 = vld [vmem:[#allocation2 + $0x228] sm:$0xff]
        %v1244 = vld [vmem:[#allocation2 + $0x230] sm:$0xff]
        %v1245 = vld [vmem:[#allocation2 + $0x238] sm:$0xff]
        %v1246 = vld [vmem:[#allocation2 + $0x240] sm:$0xff]
        %v1247 = vld [vmem:[#allocation2 + $0x248] sm:$0xff]
        %v1248 = vld [vmem:[#allocation2 + $0x250] sm:$0xff]
        %v1249 = vld [vmem:[#allocation2 + $0x258] sm:$0xff]
        %v1250 = vld [vmem:[#allocation2 + $0x260] sm:$0xff]
        %v1251 = vld [vmem:[#allocation2 + $0x268] sm:$0xff]
        %v1252 = vld [vmem:[#allocation2 + $0x270] sm:$0xff]
        %v1253 = vld [vmem:[#allocation2 + $0x278] sm:$0xff]
        %v1254 = vld [vmem:[#allocation2 + $0x280] sm:$0xff]
        %v1255 = vld [vmem:[#allocation2 + $0x288] sm:$0xff]
        %v1256 = vld [vmem:[#allocation2 + $0x290] sm:$0xff]
        %v1257 = vld [vmem:[#allocation2 + $0x298] sm:$0xff]
        %v1258 = vld [vmem:[#allocation2 + $0x2a0] sm:$0xff]
        %v1259 = vld [vmem:[#allocation2 + $0x2a8] sm:$0xff]
        %v1260 = vld [vmem:[#allocation2 + $0x2b0] sm:$0xff]
        %v1261 = vld [vmem:[#allocation2 + $0x2b8] sm:$0xff]
        %v1262 = vld [vmem:[#allocation9] sm:$0xff]
        %v1263 = vld [vmem:[#allocation9 + $0x8] sm:$0xff]
        %v1264 = vld [vmem:[#allocation9 + $0x10] sm:$0xff]
        %v1265 = vld [vmem:[#allocation9 + $0x18] sm:$0xff]
        %v1266 = vld [vmem:[#allocation9 + $0x20] sm:$0xff]
        %v1267 = vld [vmem:[#allocation9 + $0x28] sm:$0xff]
        %v1268 = vld [vmem:[#allocation9 + $0x30] sm:$0xff]
        %v1269 = vld [vmem:[#allocation9 + $0x38] sm:$0xff]
        %v1270 = vld [vmem:[#allocation9 + $0x40] sm:$0xff]
        %v1271 = vld [vmem:[#allocation9 + $0x48] sm:$0xff]
        %v1272 = vld [vmem:[#allocation9 + $0x50] sm:$0xff]
        %v1273 = vld [vmem:[#allocation9 + $0x58] sm:$0xff]
        %v1274 = vld [vmem:[#allocation9 + $0x60] sm:$0xff]
        %v1275 = vld [vmem:[#allocation9 + $0x68] sm:$0xff]
        %v1276 = vld [vmem:[#allocation9 + $0x70] sm:$0xff]
        %v1277 = vld [vmem:[#allocation9 + $0x78] sm:$0xff]
        %v1278 = vld [vmem:[#allocation9 + $0x80] sm:$0xff]
        %v1279 = vld [vmem:[#allocation9 + $0x88] sm:$0xff]
        %v1280 = vld [vmem:[#allocation9 + $0x90] sm:$0xff]
        %v1281 = vld [vmem:[#allocation9 + $0x98] sm:$0xff]
        %v1282 = vld [vmem:[#allocation9 + $0xa0] sm:$0xff]
        %v1283 = vld [vmem:[#allocation9 + $0xa8] sm:$0xff]
        %v1284 = vld [vmem:[#allocation9 + $0xb0] sm:$0xff]
        %v1285 = vld [vmem:[#allocation9 + $0xb8] sm:$0xff]
        %v1286 = vld [vmem:[#allocation9 + $0xc0] sm:$0xff]
        %v1287 = vld [vmem:[#allocation9 + $0xc8] sm:$0xff]
        %v1288 = vld [vmem:[#allocation9 + $0xd0] sm:$0xff]
        %v1289 = vld [vmem:[#allocation9 + $0xd8] sm:$0xff]
        %v1290 = vld [vmem:[#allocation9 + $0xe0] sm:$0xff]
        %v1291 = vld [vmem:[#allocation9 + $0xe8] sm:$0xff]
        %v1292 = vld [vmem:[#allocation9 + $0xf0] sm:$0xff]
        %v1293 = vld [vmem:[#allocation9 + $0xf8] sm:$0xff]
        %v1294 = vld [vmem:[#allocation9 + $0x100] sm:$0xff]
        %v1295 = vld [vmem:[#allocation9 + $0x108] sm:$0xff]
        %v1296 = vld [vmem:[#allocation9 + $0x110] sm:$0xff]
        %v1297 = vld [vmem:[#allocation9 + $0x118] sm:$0xff]
        %v1298 = vld [vmem:[#allocation9 + $0x120] sm:$0xff]
        %v1299 = vld [vmem:[#allocation9 + $0x128] sm:$0xff]
        %v1300 = vld [vmem:[#allocation9 + $0x130] sm:$0xff]
        %v1301 = vld [vmem:[#allocation9 + $0x138] sm:$0xff]
        %v1302 = vld [vmem:[#allocation9 + $0x140] sm:$0xff]
        %v1303 = vld [vmem:[#allocation9 + $0x148] sm:$0xff]
        %v1304 = vld [vmem:[#allocation9 + $0x150] sm:$0xff]
        %v1305 = vld [vmem:[#allocation9 + $0x158] sm:$0xff]
        %v1306 = vld [vmem:[#allocation9 + $0x160] sm:$0xff]
        %v1307 = vld [vmem:[#allocation9 + $0x168] sm:$0xff]
        %v1308 = vld [vmem:[#allocation9 + $0x170] sm:$0xff]
        %v1309 = vld [vmem:[#allocation9 + $0x178] sm:$0xff]
        %v1310 = vld [vmem:[#allocation9 + $0x180] sm:$0xff]
        %v1311 = vld [vmem:[#allocation9 + $0x188] sm:$0xff]
        %v1312 = vld [vmem:[#allocation9 + $0x190] sm:$0xff]
        %v1313 = vld [vmem:[#allocation9 + $0x198] sm:$0xff]
        %v1314 = vld [vmem:[#allocation9 + $0x1a0] sm:$0xff]
        %v1315 = vld [vmem:[#allocation9 + $0x1a8] sm:$0xff]
        %v1316 = vld [vmem:[#allocation9 + $0x1b0] sm:$0xff]
        %v1317 = vld [vmem:[#allocation9 + $0x1b8] sm:$0xff]
        %v1318 = vld [vmem:[#allocation9 + $0x1c0] sm:$0xff]
        %v1319 = vld [vmem:[#allocation9 + $0x1c8] sm:$0xff]
        %v1320 = vld [vmem:[#allocation9 + $0x1d0] sm:$0xff]
        %v1321 = vld [vmem:[#allocation9 + $0x1d8] sm:$0xff]
        %v1322 = vld [vmem:[#allocation9 + $0x1e0] sm:$0xff]
        %v1323 = vld [vmem:[#allocation9 + $0x1e8] sm:$0xff]
        %v1324 = vld [vmem:[#allocation9 + $0x1f0] sm:$0xff]
        %v1325 = vld [vmem:[#allocation9 + $0x1f8] sm:$0xff]
        %v1326 = vld [vmem:[#allocation9 + $0x200] sm:$0xff]
        %v1327 = vld [vmem:[#allocation9 + $0x208] sm:$0xff]
        %v1328 = vld [vmem:[#allocation9 + $0x210] sm:$0xff]
        %v1329 = vld [vmem:[#allocation9 + $0x218] sm:$0xff]
        %v1330 = vld [vmem:[#allocation9 + $0x220] sm:$0xff]
        %v1331 = vld [vmem:[#allocation9 + $0x228] sm:$0xff]
        %v1332 = vld [vmem:[#allocation9 + $0x230] sm:$0xff]
        %v1333 = vld [vmem:[#allocation9 + $0x238] sm:$0xff]
        %v1334 = vld [vmem:[#allocation9 + $0x240] sm:$0xff]
        %v1335 = vld [vmem:[#allocation9 + $0x248] sm:$0xff]
        %v1336 = vld [vmem:[#allocation9 + $0x250] sm:$0xff]
        %v1337 = vld [vmem:[#allocation9 + $0x258] sm:$0xff]
        %v1338 = vld [vmem:[#allocation9 + $0x260] sm:$0xff]
        %v1339 = vld [vmem:[#allocation9 + $0x268] sm:$0xff]
        %v1340 = vld [vmem:[#allocation9 + $0x270] sm:$0xff]
        %v1341 = vld [vmem:[#allocation9 + $0x278] sm:$0xff]
        %v1342 = vld [vmem:[#allocation9 + $0x280] sm:$0xff]
        %v1343 = vld [vmem:[#allocation9 + $0x288] sm:$0xff]
        %v1344 = vld [vmem:[#allocation9 + $0x290] sm:$0xff]
        %v1345 = vld [vmem:[#allocation9 + $0x298] sm:$0xff]
        %v1346 = vld [vmem:[#allocation9 + $0x2a0] sm:$0xff]
        %v1347 = vld [vmem:[#allocation9 + $0x2a8] sm:$0xff]
        %v1348 = vld [vmem:[#allocation9 + $0x2b0] sm:$0xff]
        %v1349 = vld [vmem:[#allocation9 + $0x2b8] sm:$0xff]
        %v1350 = vld [vmem:[#allocation9 + $0x2c0] sm:$0xff]
        %v1351 = vld [vmem:[#allocation9 + $0x2c8] sm:$0xff]
        %v1352 = vld [vmem:[#allocation9 + $0x2d0] sm:$0xff]
        %v1353 = vld [vmem:[#allocation9 + $0x2d8] sm:$0xff]
        %v1354 = vld [vmem:[#allocation9 + $0x2e0] sm:$0xff]
        %v1355 = vld [vmem:[#allocation9 + $0x2e8] sm:$0xff]
        %v1356 = vld [vmem:[#allocation9 + $0x2f0] sm:$0xff]
        %v1357 = vld [vmem:[#allocation9 + $0x2f8] sm:$0xff]
        %v1358 = vld [vmem:[#allocation9 + $0x300] sm:$0xff]
        %v1359 = vld [vmem:[#allocation9 + $0x308] sm:$0xff]
        %v1360 = vld [vmem:[#allocation9 + $0x310] sm:$0xff]
        %v1361 = vld [vmem:[#allocation9 + $0x318] sm:$0xff]
        %v1362 = vld [vmem:[#allocation9 + $0x320] sm:$0xff]
        %v1363 = vld [vmem:[#allocation9 + $0x328] sm:$0xff]
        %v1364 = vld [vmem:[#allocation9 + $0x330] sm:$0xff]
        %v1365 = vld [vmem:[#allocation9 + $0x338] sm:$0xff]
        %v1366 = vld [vmem:[#allocation9 + $0x340] sm:$0xff]
        %v1367 = vld [vmem:[#allocation9 + $0x348] sm:$0xff]
        %v1368 = vld [vmem:[#allocation9 + $0x350] sm:$0xff]
        %v1369 = vld [vmem:[#allocation9 + $0x358] sm:$0xff]
        %v1370 = vld [vmem:[#allocation9 + $0x360] sm:$0xff]
        %v1371 = vld [vmem:[#allocation9 + $0x368] sm:$0xff]
        %v1372 = vld [vmem:[#allocation9 + $0x370] sm:$0xff]
        %v1373 = vld [vmem:[#allocation9 + $0x378] sm:$0xff]
        %v1374 = vld [vmem:[#allocation9 + $0x380] sm:$0xff]
        %v1375 = vld [vmem:[#allocation9 + $0x388] sm:$0xff]
        %v1376 = vld [vmem:[#allocation9 + $0x390] sm:$0xff]
        %v1377 = vld [vmem:[#allocation9 + $0x398] sm:$0xff]
        %v1378 = vld [vmem:[#allocation9 + $0x3a0] sm:$0xff]
        %v1379 = vld [vmem:[#allocation9 + $0x3a8] sm:$0xff]
        %v1380 = vld [vmem:[#allocation9 + $0x3b0] sm:$0xff]
        %v1381 = vld [vmem:[#allocation9 + $0x3b8] sm:$0xff]
        %v1382 = vld [vmem:[#allocation9 + $0x3c0] sm:$0xff]
        %v1383 = vld [vmem:[#allocation9 + $0x3c8] sm:$0xff]
        %v1384 = vld [vmem:[#allocation9 + $0x3d0] sm:$0xff]
        %v1385 = vld [vmem:[#allocation9 + $0x3d8] sm:$0xff]
        %v1386 = vld [vmem:[#allocation9 + $0x3e0] sm:$0xff]
        %v1387 = vld [vmem:[#allocation9 + $0x3e8] sm:$0xff]
        %v1388 = vld [vmem:[#allocation9 + $0x3f0] sm:$0xff]
        %v1389 = vld [vmem:[#allocation9 + $0x3f8] sm:$0xff]
        %v1390 = vld [vmem:[#allocation9 + $0x400] sm:$0xff]
        %v1391 = vld [vmem:[#allocation9 + $0x408] sm:$0xff]
        %v1392 = vld [vmem:[#allocation9 + $0x410] sm:$0xff]
        %v1393 = vld [vmem:[#allocation9 + $0x418] sm:$0xff]
        %v1394 = vld [vmem:[#allocation9 + $0x420] sm:$0xff]
        %v1395 = vld [vmem:[#allocation9 + $0x428] sm:$0xff]
        %v1396 = vld [vmem:[#allocation9 + $0x430] sm:$0xff]
        %v1397 = vld [vmem:[#allocation9 + $0x438] sm:$0xff]
        %v1398 = vld [vmem:[#allocation9 + $0x440] sm:$0xff]
        %v1399 = vld [vmem:[#allocation9 + $0x448] sm:$0xff]
        %v1400 = vld [vmem:[#allocation9 + $0x450] sm:$0xff]
        %v1401 = vld [vmem:[#allocation9 + $0x458] sm:$0xff]
        %v1402 = vld [vmem:[#allocation9 + $0x460] sm:$0xff]
        %v1403 = vld [vmem:[#allocation9 + $0x468] sm:$0xff]
        %v1404 = vld [vmem:[#allocation9 + $0x470] sm:$0xff]
        %v1405 = vld [vmem:[#allocation9 + $0x478] sm:$0xff]
        %v1406 = vld [vmem:[#allocation9 + $0x480] sm:$0xff]
        %v1407 = vld [vmem:[#allocation9 + $0x488] sm:$0xff]
        %v1408 = vld [vmem:[#allocation9 + $0x490] sm:$0xff]
        %v1409 = vld [vmem:[#allocation9 + $0x498] sm:$0xff]
        %v1410 = vld [vmem:[#allocation9 + $0x4a0] sm:$0xff]
        %v1411 = vld [vmem:[#allocation9 + $0x4a8] sm:$0xff]
        %v1412 = vld [vmem:[#allocation9 + $0x4b0] sm:$0xff]
        %v1413 = vld [vmem:[#allocation9 + $0x4b8] sm:$0xff]
        %v1414 = vld [vmem:[#allocation9 + $0x4c0] sm:$0xff]
        %v1415 = vld [vmem:[#allocation9 + $0x4c8] sm:$0xff]
        %v1416 = vld [vmem:[#allocation9 + $0x4d0] sm:$0xff]
        %v1417 = vld [vmem:[#allocation9 + $0x4d8] sm:$0xff]
        %v1418 = vld [vmem:[#allocation9 + $0x4e0] sm:$0xff]
        %v1419 = vld [vmem:[#allocation9 + $0x4e8] sm:$0xff]
        %v1420 = vld [vmem:[#allocation9 + $0x4f0] sm:$0xff]
        %v1421 = vld [vmem:[#allocation9 + $0x4f8] sm:$0xff]
        %v1422 = vld [vmem:[#allocation9 + $0x500] sm:$0xff]
        %v1423 = vld [vmem:[#allocation9 + $0x508] sm:$0xff]
        %v1424 = vld [vmem:[#allocation9 + $0x510] sm:$0xff]
        %v1425 = vld [vmem:[#allocation9 + $0x518] sm:$0xff]
        %v1426 = vld [vmem:[#allocation9 + $0x520] sm:$0xff]
        %v1427 = vld [vmem:[#allocation9 + $0x528] sm:$0xff]
        %v1428 = vld [vmem:[#allocation9 + $0x530] sm:$0xff]
        %v1429 = vld [vmem:[#allocation9 + $0x538] sm:$0xff]
        %v1430 = vld [vmem:[#allocation9 + $0x540] sm:$0xff]
        %v1431 = vld [vmem:[#allocation9 + $0x548] sm:$0xff]
        %v1432 = vld [vmem:[#allocation9 + $0x550] sm:$0xff]
        %v1433 = vld [vmem:[#allocation9 + $0x558] sm:$0xff]
        %v1434 = vld [vmem:[#allocation9 + $0x560] sm:$0xff]
        %v1435 = vld [vmem:[#allocation9 + $0x568] sm:$0xff]
        %v1436 = vld [vmem:[#allocation9 + $0x570] sm:$0xff]
        %v1437 = vld [vmem:[#allocation9 + $0x578] sm:$0xff]
        %v1438 = vld [vmem:[%s5] sm:$0x1]
        %v1440 = vlaneseq
        %v1441 = vshrl.u32 %v1440, 7
        %v1442 = vsub.s32 0, %v1441
        %v1443 = vrot.slane %v1438, %v1442
        %1445 = vmatprep.subr.mxu0 0.0
        %1446 = vmatpush1.msra.mxu0 %v1262
        %1447 = vmatprep.subr.mxu0 0.0
        %1448 = vmatpush1.msra.mxu0 %v1263
        %1449 = vmatprep.subr.mxu0 0.0
        %1450 = vmatpush1.msra.mxu0 %v1264
        %1451 = vmatprep.subr.mxu0 0.0
        %1452 = vmatpush1.msra.mxu0 %v1265
        %1453 = vmatprep.subr.mxu0 0.0
        %1454 = vmatpush1.msra.mxu0 %v1266
        %1455 = vmatprep.subr.mxu0 0.0
        %1456 = vmatpush1.msra.mxu0 %v1267
        %1457 = vmatprep.subr.mxu0 0.0
        %1458 = vmatpush1.msra.mxu0 %v1268
        %1459 = vmatprep.subr.mxu0 0.0
        %1460 = vmatpush1.msra.mxu0 %v1269
        %1461 = vmatprep.subr.mxu0 0.0
        %1462 = vmatpush1.msra.mxu0 %v1270
        %1463 = vmatprep.subr.mxu0 0.0
        %1464 = vmatpush1.msra.mxu0 %v1271
        %1465 = vmatprep.subr.mxu0 0.0
        %1466 = vmatpush1.msra.mxu0 %v1272
        %1467 = vmatprep.subr.mxu0 0.0
        %1468 = vmatpush1.msra.mxu0 %v1273
        %1469 = vmatprep.subr.mxu0 0.0
        %1470 = vmatpush1.msra.mxu0 %v1274
        %1471 = vmatprep.subr.mxu0 0.0
        %1472 = vmatpush1.msra.mxu0 %v1275
        %1473 = vmatprep.subr.mxu0 0.0
        %1474 = vmatpush1.msra.mxu0 %v1276
        %1475 = vmatprep.subr.mxu0 0.0
        %1476 = vmatpush1.msra.mxu0 %v1277
        %1477 = vmatprep.subr.mxu0 0.0
        %1478 = vmatpush1.msra.mxu0 %v1278
        %1479 = vmatprep.subr.mxu0 0.0
        %1480 = vmatpush1.msra.mxu0 %v1279
        %1481 = vmatprep.subr.mxu0 0.0
        %1482 = vmatpush1.msra.mxu0 %v1280
        %1483 = vmatprep.subr.mxu0 0.0
        %1484 = vmatpush1.msra.mxu0 %v1281
        %1485 = vmatprep.subr.mxu0 0.0
        %1486 = vmatpush1.msra.mxu0 %v1282
        %1487 = vmatprep.subr.mxu0 0.0
        %1488 = vmatpush1.msra.mxu0 %v1283
        %1489 = vmatprep.subr.mxu0 0.0
        %1490 = vmatpush1.msra.mxu0 %v1284
        %1491 = vmatprep.subr.mxu0 0.0
        %1492 = vmatpush1.msra.mxu0 %v1285
        %1493 = vmatprep.subr.mxu0 0.0
        %1494 = vmatpush1.msra.mxu0 %v1286
        %1495 = vmatprep.subr.mxu0 0.0
        %1496 = vmatpush1.msra.mxu0 %v1287
        %1497 = vmatprep.subr.mxu0 0.0
        %1498 = vmatpush1.msra.mxu0 %v1288
        %1499 = vmatprep.subr.mxu0 0.0
        %1500 = vmatpush1.msra.mxu0 %v1289
        %1501 = vmatprep.subr.mxu0 0.0
        %1502 = vmatpush1.msra.mxu0 %v1290
        %1503 = vmatprep.subr.mxu0 0.0
        %1504 = vmatpush1.msra.mxu0 %v1291
        %1505 = vmatprep.subr.mxu0 0.0
        %1506 = vmatpush1.msra.mxu0 %v1292
        %1507 = vmatprep.subr.mxu0 0.0
        %1508 = vmatpush1.msra.mxu0 %v1293
        %1509 = vmatprep.mubr.f32.mxu0 %v1175
        %1510 = vmatmul.mubr.f32.gmra.mrb[0].mxu0 %v1174
        %v1511 = vpop.f32.mrb[0].mxu0
        %v1512 = vadd.f32 %v1443, %v1511
        %v1513 = vpop.f32.mrb[0].mxu0
        %1514 = vmatprep.mubr.f32.mxu0 %v1186
        %1515 = vmatmul.mubr.f32.gmra.mrb[0].mxu0 %v1185
        %v1516 = vpop.f32.mrb[0].mxu0
        %v1517 = vadd.f32 %v1443, %v1516
        %v1518 = vpop.f32.mrb[0].mxu0
        %1519 = vmatprep.mubr.f32.mxu0 %v1197
        %1520 = vmatmul.mubr.f32.gmra.mrb[0].mxu0 %v1196
        %v1521 = vpop.f32.mrb[0].mxu0
        %v1522 = vadd.f32 %v1443, %v1521
        %v1523 = vpop.f32.mrb[0].mxu0
        %1524 = vmatprep.mubr.f32.mxu0 %v1208
        %1525 = vmatmul.mubr.f32.gmra.mrb[0].mxu0 %v1207
        %v1526 = vpop.f32.mrb[0].mxu0
        %v1527 = vadd.f32 %v1443, %v1526
        %v1528 = vpop.f32.mrb[0].mxu0
        %1529 = vmatprep.mubr.f32.mxu0 %v1219
        %1530 = vmatmul.mubr.f32.gmra.mrb[0].mxu0 %v1218
        %v1531 = vpop.f32.mrb[0].mxu0
        %v1532 = vadd.f32 %v1443, %v1531
        %v1533 = vpop.f32.mrb[0].mxu0
        %1534 = vmatprep.mubr.f32.mxu0 %v1230
        %1535 = vmatmul.mubr.f32.gmra.mrb[0].mxu0 %v1229
        %v1536 = vpop.f32.mrb[0].mxu0
        %v1537 = vadd.f32 %v1443, %v1536
        %v1538 = vpop.f32.mrb[0].mxu0
        %1539 = vmatprep.mubr.f32.mxu0 %v1241
        %1540 = vmatmul.mubr.f32.gmra.mrb[0].mxu0 %v1240
        %v1541 = vpop.f32.mrb[0].mxu0
        %v1542 = vadd.f32 %v1443, %v1541
        %v1543 = vpop.f32.mrb[0].mxu0
        %1544 = vmatprep.mubr.f32.mxu0 %v1252
        %1545 = vmatmul.mubr.f32.gmra.mrb[0].mxu0 %v1251
        %v1546 = vpop.f32.mrb[0].mxu0
        %v1547 = vadd.f32 %v1443, %v1546
        %v1548 = vpop.f32.mrb[0].mxu0
        %1549 = vdwg.mxu0
        %1550 = vmatprep.subr.mxu0 0.0
        %1551 = vmatpush1.msra.mxu0 %v1294
        %1552 = vmatprep.subr.mxu0 0.0
        %1553 = vmatpush1.msra.mxu0 %v1295
        %1554 = vmatprep.subr.mxu0 0.0
        %1555 = vmatpush1.msra.mxu0 %v1296
        %1556 = vmatprep.subr.mxu0 0.0
        %1557 = vmatpush1.msra.mxu0 %v1297
        %1558 = vmatprep.subr.mxu0 0.0
        %1559 = vmatpush1.msra.mxu0 %v1298
        %1560 = vmatprep.subr.mxu0 0.0
        %1561 = vmatpush1.msra.mxu0 %v1299
        %1562 = vmatprep.subr.mxu0 0.0
        %1563 = vmatpush1.msra.mxu0 %v1300
        %1564 = vmatprep.subr.mxu0 0.0
        %1565 = vmatpush1.msra.mxu0 %v1301
        %1566 = vmatprep.subr.mxu0 0.0
        %1567 = vmatpush1.msra.mxu0 %v1302
        %1568 = vmatprep.subr.mxu0 0.0
        %1569 = vmatpush1.msra.mxu0 %v1303
        %1570 = vmatprep.subr.mxu0 0.0
        %1571 = vmatpush1.msra.mxu0 %v1304
        %1572 = vmatprep.subr.mxu0 0.0
        %1573 = vmatpush1.msra.mxu0 %v1305
        %1574 = vmatprep.subr.mxu0 0.0
        %1575 = vmatpush1.msra.mxu0 %v1306
        %1576 = vmatprep.subr.mxu0 0.0
        %1577 = vmatpush1.msra.mxu0 %v1307
        %1578 = vmatprep.subr.mxu0 0.0
        %1579 = vmatpush1.msra.mxu0 %v1308
        %1580 = vmatprep.subr.mxu0 0.0
        %1581 = vmatpush1.msra.mxu0 %v1309
        %1582 = vmatprep.subr.mxu0 0.0
        %1583 = vmatpush1.msra.mxu0 %v1310
        %1584 = vmatprep.subr.mxu0 0.0
        %1585 = vmatpush1.msra.mxu0 %v1311
        %1586 = vmatprep.subr.mxu0 0.0
        %1587 = vmatpush1.msra.mxu0 %v1312
        %1588 = vmatprep.subr.mxu0 0.0
        %1589 = vmatpush1.msra.mxu0 %v1313
        %1590 = vmatprep.subr.mxu0 0.0
        %1591 = vmatpush1.msra.mxu0 %v1314
        %1592 = vmatprep.subr.mxu0 0.0
        %1593 = vmatpush1.msra.mxu0 %v1315
        %1594 = vmatprep.subr.mxu0 0.0
        %1595 = vmatpush1.msra.mxu0 %v1316
        %1596 = vmatprep.subr.mxu0 0.0
        %1597 = vmatpush1.msra.mxu0 %v1317
        %1598 = vmatprep.subr.mxu0 0.0
        %1599 = vmatpush1.msra.mxu0 %v1318
        %1600 = vmatprep.subr.mxu0 0.0
        %1601 = vmatpush1.msra.mxu0 %v1319
        %1602 = vmatprep.subr.mxu0 0.0
        %1603 = vmatpush1.msra.mxu0 %v1320
        %1604 = vmatprep.subr.mxu0 0.0
        %1605 = vmatpush1.msra.mxu0 %v1321
        %1606 = vmatprep.subr.mxu0 0.0
        %1607 = vmatpush1.msra.mxu0 %v1322
        %1608 = vmatprep.subr.mxu0 0.0
        %1609 = vmatpush1.msra.mxu0 %v1323
        %1610 = vmatprep.subr.mxu0 0.0
        %1611 = vmatpush1.msra.mxu0 %v1324
        %1612 = vmatprep.subr.mxu0 0.0
        %1613 = vmatpush1.msra.mxu0 %v1325
        %1614 = vmatprep.mubr.f32.mxu0 %v1177
        %1615 = vmatmul.mubr.f32.gmra.mrb[0].mxu0 %v1176
        %v1616 = vpop.f32.mrb[0].mxu0
        %v1617 = vadd.f32 %v1512, %v1616
        %v1618 = vpop.f32.mrb[0].mxu0
        %1619 = vmatprep.mubr.f32.mxu0 %v1188
        %1620 = vmatmul.mubr.f32.gmra.mrb[0].mxu0 %v1187
        %v1621 = vpop.f32.mrb[0].mxu0
        %v1622 = vadd.f32 %v1517, %v1621
        %v1623 = vpop.f32.mrb[0].mxu0
        %1624 = vmatprep.mubr.f32.mxu0 %v1199
        %1625 = vmatmul.mubr.f32.gmra.mrb[0].mxu0 %v1198
        %v1626 = vpop.f32.mrb[0].mxu0
        %v1627 = vadd.f32 %v1522, %v1626
        %v1628 = vpop.f32.mrb[0].mxu0
        %1629 = vmatprep.mubr.f32.mxu0 %v1210
        %1630 = vmatmul.mubr.f32.gmra.mrb[0].mxu0 %v1209
        %v1631 = vpop.f32.mrb[0].mxu0
        %v1632 = vadd.f32 %v1527, %v1631
        %v1633 = vpop.f32.mrb[0].mxu0
        %1634 = vmatprep.mubr.f32.mxu0 %v1221
        %1635 = vmatmul.mubr.f32.gmra.mrb[0].mxu0 %v1220
        %v1636 = vpop.f32.mrb[0].mxu0
        %v1637 = vadd.f32 %v1532, %v1636
        %v1638 = vpop.f32.mrb[0].mxu0
        %1639 = vmatprep.mubr.f32.mxu0 %v1232
        %1640 = vmatmul.mubr.f32.gmra.mrb[0].mxu0 %v1231
        %v1641 = vpop.f32.mrb[0].mxu0
        %v1642 = vadd.f32 %v1537, %v1641
        %v1643 = vpop.f32.mrb[0].mxu0
        %1644 = vmatprep.mubr.f32.mxu0 %v1243
        %1645 = vmatmul.mubr.f32.gmra.mrb[0].mxu0 %v1242
        %v1646 = vpop.f32.mrb[0].mxu0
        %v1647 = vadd.f32 %v1542, %v1646
        %v1648 = vpop.f32.mrb[0].mxu0
        %1649 = vmatprep.mubr.f32.mxu0 %v1254
        %1650 = vmatmul.mubr.f32.gmra.mrb[0].mxu0 %v1253
        %v1651 = vpop.f32.mrb[0].mxu0
        %v1652 = vadd.f32 %v1547, %v1651
        %v1653 = vpop.f32.mrb[0].mxu0
        %1654 = vdwg.mxu0
        %1655 = vmatprep.subr.mxu0 0.0
        %1656 = vmatpush1.msra.mxu0 %v1326
        %1657 = vmatprep.subr.mxu0 0.0
        %1658 = vmatpush1.msra.mxu0 %v1327
        %1659 = vmatprep.subr.mxu0 0.0
        %1660 = vmatpush1.msra.mxu0 %v1328
        %1661 = vmatprep.subr.mxu0 0.0
        %1662 = vmatpush1.msra.mxu0 %v1329
        %1663 = vmatprep.subr.mxu0 0.0
        %1664 = vmatpush1.msra.mxu0 %v1330
        %1665 = vmatprep.subr.mxu0 0.0
        %1666 = vmatpush1.msra.mxu0 %v1331
        %1667 = vmatprep.subr.mxu0 0.0
        %1668 = vmatpush1.msra.mxu0 %v1332
        %1669 = vmatprep.subr.mxu0 0.0
        %1670 = vmatpush1.msra.mxu0 %v1333
        %1671 = vmatprep.subr.mxu0 0.0
        %1672 = vmatpush1.msra.mxu0 %v1334
        %1673 = vmatprep.subr.mxu0 0.0
        %1674 = vmatpush1.msra.mxu0 %v1335
        %1675 = vmatprep.subr.mxu0 0.0
        %1676 = vmatpush1.msra.mxu0 %v1336
        %1677 = vmatprep.subr.mxu0 0.0
        %1678 = vmatpush1.msra.mxu0 %v1337
        %1679 = vmatprep.subr.mxu0 0.0
        %1680 = vmatpush1.msra.mxu0 %v1338
        %1681 = vmatprep.subr.mxu0 0.0
        %1682 = vmatpush1.msra.mxu0 %v1339
        %1683 = vmatprep.subr.mxu0 0.0
        %1684 = vmatpush1.msra.mxu0 %v1340
        %1685 = vmatprep.subr.mxu0 0.0
        %1686 = vmatpush1.msra.mxu0 %v1341
        %1687 = vmatprep.subr.mxu0 0.0
        %1688 = vmatpush1.msra.mxu0 %v1342
        %1689 = vmatprep.subr.mxu0 0.0
        %1690 = vmatpush1.msra.mxu0 %v1343
        %1691 = vmatprep.subr.mxu0 0.0
        %1692 = vmatpush1.msra.mxu0 %v1344
        %1693 = vmatprep.subr.mxu0 0.0
        %1694 = vmatpush1.msra.mxu0 %v1345
        %1695 = vmatprep.subr.mxu0 0.0
        %1696 = vmatpush1.msra.mxu0 %v1346
        %1697 = vmatprep.subr.mxu0 0.0
        %1698 = vmatpush1.msra.mxu0 %v1347
        %1699 = vmatprep.subr.mxu0 0.0
        %1700 = vmatpush1.msra.mxu0 %v1348
        %1701 = vmatprep.subr.mxu0 0.0
        %1702 = vmatpush1.msra.mxu0 %v1349
        %1703 = vmatprep.subr.mxu0 0.0
        %1704 = vmatpush1.msra.mxu0 %v1350
        %1705 = vmatprep.subr.mxu0 0.0
        %1706 = vmatpush1.msra.mxu0 %v1351
        %1707 = vmatprep.subr.mxu0 0.0
        %1708 = vmatpush1.msra.mxu0 %v1352
        %1709 = vmatprep.subr.mxu0 0.0
        %1710 = vmatpush1.msra.mxu0 %v1353
        %1711 = vmatprep.subr.mxu0 0.0
        %1712 = vmatpush1.msra.mxu0 %v1354
        %1713 = vmatprep.subr.mxu0 0.0
        %1714 = vmatpush1.msra.mxu0 %v1355
        %1715 = vmatprep.subr.mxu0 0.0
        %1716 = vmatpush1.msra.mxu0 %v1356
        %1717 = vmatprep.subr.mxu0 0.0
        %1718 = vmatpush1.msra.mxu0 %v1357
        %1719 = vmatprep.mubr.f32.mxu0 %v1179
        %1720 = vmatmul.mubr.f32.gmra.mrb[0].mxu0 %v1178
        %v1721 = vpop.f32.mrb[0].mxu0
        %v1722 = vadd.f32 %v1617, %v1721
        %v1723 = vpop.f32.mrb[0].mxu0
        %1724 = vmatprep.mubr.f32.mxu0 %v1190
        %1725 = vmatmul.mubr.f32.gmra.mrb[0].mxu0 %v1189
        %v1726 = vpop.f32.mrb[0].mxu0
        %v1727 = vadd.f32 %v1622, %v1726
        %v1728 = vpop.f32.mrb[0].mxu0
        %1729 = vmatprep.mubr.f32.mxu0 %v1201
        %1730 = vmatmul.mubr.f32.gmra.mrb[0].mxu0 %v1200
        %v1731 = vpop.f32.mrb[0].mxu0
        %v1732 = vadd.f32 %v1627, %v1731
        %v1733 = vpop.f32.mrb[0].mxu0
        %1734 = vmatprep.mubr.f32.mxu0 %v1212
        %1735 = vmatmul.mubr.f32.gmra.mrb[0].mxu0 %v1211
        %v1736 = vpop.f32.mrb[0].mxu0
        %v1737 = vadd.f32 %v1632, %v1736
        %v1738 = vpop.f32.mrb[0].mxu0
        %1739 = vmatprep.mubr.f32.mxu0 %v1223
        %1740 = vmatmul.mubr.f32.gmra.mrb[0].mxu0 %v1222
        %v1741 = vpop.f32.mrb[0].mxu0
        %v1742 = vadd.f32 %v1637, %v1741
        %v1743 = vpop.f32.mrb[0].mxu0
        %1744 = vmatprep.mubr.f32.mxu0 %v1234
        %1745 = vmatmul.mubr.f32.gmra.mrb[0].mxu0 %v1233
        %v1746 = vpop.f32.mrb[0].mxu0
        %v1747 = vadd.f32 %v1642, %v1746
        %v1748 = vpop.f32.mrb[0].mxu0
        %1749 = vmatprep.mubr.f32.mxu0 %v1245
        %1750 = vmatmul.mubr.f32.gmra.mrb[0].mxu0 %v1244
        %v1751 = vpop.f32.mrb[0].mxu0
        %v1752 = vadd.f32 %v1647, %v1751
        %v1753 = vpop.f32.mrb[0].mxu0
        %1754 = vmatprep.mubr.f32.mxu0 %v1256
        %1755 = vmatmul.mubr.f32.gmra.mrb[0].mxu0 %v1255
        %v1756 = vpop.f32.mrb[0].mxu0
        %v1757 = vadd.f32 %v1652, %v1756
        %v1758 = vpop.f32.mrb[0].mxu0
        %1759 = vdwg.mxu0
        %1760 = vmatprep.subr.mxu0 0.0
        %1761 = vmatpush1.msra.mxu0 %v1358
        %1762 = vmatprep.subr.mxu0 0.0
        %1763 = vmatpush1.msra.mxu0 %v1359
        %1764 = vmatprep.subr.mxu0 0.0
        %1765 = vmatpush1.msra.mxu0 %v1360
        %1766 = vmatprep.subr.mxu0 0.0
        %1767 = vmatpush1.msra.mxu0 %v1361
        %1768 = vmatprep.subr.mxu0 0.0
        %1769 = vmatpush1.msra.mxu0 %v1362
        %1770 = vmatprep.subr.mxu0 0.0
        %1771 = vmatpush1.msra.mxu0 %v1363
        %1772 = vmatprep.subr.mxu0 0.0
        %1773 = vmatpush1.msra.mxu0 %v1364
        %1774 = vmatprep.subr.mxu0 0.0
        %1775 = vmatpush1.msra.mxu0 %v1365
        %1776 = vmatprep.subr.mxu0 0.0
        %1777 = vmatpush1.msra.mxu0 %v1366
        %1778 = vmatprep.subr.mxu0 0.0
        %1779 = vmatpush1.msra.mxu0 %v1367
        %1780 = vmatprep.subr.mxu0 0.0
        %1781 = vmatpush1.msra.mxu0 %v1368
        %1782 = vmatprep.subr.mxu0 0.0
        %1783 = vmatpush1.msra.mxu0 %v1369
        %1784 = vmatprep.subr.mxu0 0.0
        %1785 = vmatpush1.msra.mxu0 %v1370
        %1786 = vmatprep.subr.mxu0 0.0
        %1787 = vmatpush1.msra.mxu0 %v1371
        %1788 = vmatprep.subr.mxu0 0.0
        %1789 = vmatpush1.msra.mxu0 %v1372
        %1790 = vmatprep.subr.mxu0 0.0
        %1791 = vmatpush1.msra.mxu0 %v1373
        %1792 = vmatprep.subr.mxu0 0.0
        %1793 = vmatpush1.msra.mxu0 %v1374
        %1794 = vmatprep.subr.mxu0 0.0
        %1795 = vmatpush1.msra.mxu0 %v1375
        %1796 = vmatprep.subr.mxu0 0.0
        %1797 = vmatpush1.msra.mxu0 %v1376
        %1798 = vmatprep.subr.mxu0 0.0
        %1799 = vmatpush1.msra.mxu0 %v1377
        %1800 = vmatprep.subr.mxu0 0.0
        %1801 = vmatpush1.msra.mxu0 %v1378
        %1802 = vmatprep.subr.mxu0 0.0
        %1803 = vmatpush1.msra.mxu0 %v1379
        %1804 = vmatprep.subr.mxu0 0.0
        %1805 = vmatpush1.msra.mxu0 %v1380
        %1806 = vmatprep.subr.mxu0 0.0
        %1807 = vmatpush1.msra.mxu0 %v1381
        %1808 = vmatprep.subr.mxu0 0.0
        %1809 = vmatpush1.msra.mxu0 %v1382
        %1810 = vmatprep.subr.mxu0 0.0
        %1811 = vmatpush1.msra.mxu0 %v1383
        %1812 = vmatprep.subr.mxu0 0.0
        %1813 = vmatpush1.msra.mxu0 %v1384
        %1814 = vmatprep.subr.mxu0 0.0
        %1815 = vmatpush1.msra.mxu0 %v1385
        %1816 = vmatprep.subr.mxu0 0.0
        %1817 = vmatpush1.msra.mxu0 %v1386
        %1818 = vmatprep.subr.mxu0 0.0
        %1819 = vmatpush1.msra.mxu0 %v1387
        %1820 = vmatprep.subr.mxu0 0.0
        %1821 = vmatpush1.msra.mxu0 %v1388
        %1822 = vmatprep.subr.mxu0 0.0
        %1823 = vmatpush1.msra.mxu0 %v1389
        %1824 = vmatprep.mubr.f32.mxu0 %v1181
        %1825 = vmatmul.mubr.f32.gmra.mrb[0].mxu0 %v1180
        %v1826 = vpop.f32.mrb[0].mxu0
        %v1827 = vadd.f32 %v1722, %v1826
        %v1828 = vpop.f32.mrb[0].mxu0
        %1829 = vmatprep.mubr.f32.mxu0 %v1192
        %1830 = vmatmul.mubr.f32.gmra.mrb[0].mxu0 %v1191
        %v1831 = vpop.f32.mrb[0].mxu0
        %v1832 = vadd.f32 %v1727, %v1831
        %v1833 = vpop.f32.mrb[0].mxu0
        %1834 = vmatprep.mubr.f32.mxu0 %v1203
        %1835 = vmatmul.mubr.f32.gmra.mrb[0].mxu0 %v1202
        %v1836 = vpop.f32.mrb[0].mxu0
        %v1837 = vadd.f32 %v1732, %v1836
        %v1838 = vpop.f32.mrb[0].mxu0
        %1839 = vmatprep.mubr.f32.mxu0 %v1214
        %1840 = vmatmul.mubr.f32.gmra.mrb[0].mxu0 %v1213
        %v1841 = vpop.f32.mrb[0].mxu0
        %v1842 = vadd.f32 %v1737, %v1841
        %v1843 = vpop.f32.mrb[0].mxu0
        %1844 = vmatprep.mubr.f32.mxu0 %v1225
        %1845 = vmatmul.mubr.f32.gmra.mrb[0].mxu0 %v1224
        %v1846 = vpop.f32.mrb[0].mxu0
        %v1847 = vadd.f32 %v1742, %v1846
        %v1848 = vpop.f32.mrb[0].mxu0
        %1849 = vmatprep.mubr.f32.mxu0 %v1236
        %1850 = vmatmul.mubr.f32.gmra.mrb[0].mxu0 %v1235
        %v1851 = vpop.f32.mrb[0].mxu0
        %v1852 = vadd.f32 %v1747, %v1851
        %v1853 = vpop.f32.mrb[0].mxu0
        %1854 = vmatprep.mubr.f32.mxu0 %v1247
        %1855 = vmatmul.mubr.f32.gmra.mrb[0].mxu0 %v1246
        %v1856 = vpop.f32.mrb[0].mxu0
        %v1857 = vadd.f32 %v1752, %v1856
        %v1858 = vpop.f32.mrb[0].mxu0
        %1859 = vmatprep.mubr.f32.mxu0 %v1258
        %1860 = vmatmul.mubr.f32.gmra.mrb[0].mxu0 %v1257
        %v1861 = vpop.f32.mrb[0].mxu0
        %v1862 = vadd.f32 %v1757, %v1861
        %v1863 = vpop.f32.mrb[0].mxu0
        %1864 = vdwg.mxu0
        %1865 = vmatprep.subr.mxu0 0.0
        %1866 = vmatpush1.msra.mxu0 %v1390
        %1867 = vmatprep.subr.mxu0 0.0
        %1868 = vmatpush1.msra.mxu0 %v1391
        %1869 = vmatprep.subr.mxu0 0.0
        %1870 = vmatpush1.msra.mxu0 %v1392
        %1871 = vmatprep.subr.mxu0 0.0
        %1872 = vmatpush1.msra.mxu0 %v1393
        %1873 = vmatprep.subr.mxu0 0.0
        %1874 = vmatpush1.msra.mxu0 %v1394
        %1875 = vmatprep.subr.mxu0 0.0
        %1876 = vmatpush1.msra.mxu0 %v1395
        %1877 = vmatprep.subr.mxu0 0.0
        %1878 = vmatpush1.msra.mxu0 %v1396
        %1879 = vmatprep.subr.mxu0 0.0
        %1880 = vmatpush1.msra.mxu0 %v1397
        %1881 = vmatprep.subr.mxu0 0.0
        %1882 = vmatpush1.msra.mxu0 %v1398
        %1883 = vmatprep.subr.mxu0 0.0
        %1884 = vmatpush1.msra.mxu0 %v1399
        %1885 = vmatprep.subr.mxu0 0.0
        %1886 = vmatpush1.msra.mxu0 %v1400
        %1887 = vmatprep.subr.mxu0 0.0
        %1888 = vmatpush1.msra.mxu0 %v1401
        %1889 = vmatprep.subr.mxu0 0.0
        %1890 = vmatpush1.msra.mxu0 %v1402
        %1891 = vmatprep.subr.mxu0 0.0
        %1892 = vmatpush1.msra.mxu0 %v1403
        %1893 = vmatprep.subr.mxu0 0.0
        %1894 = vmatpush1.msra.mxu0 %v1404
        %1895 = vmatprep.subr.mxu0 0.0
        %1896 = vmatpush1.msra.mxu0 %v1405
        %1897 = vmatprep.subr.mxu0 0.0
        %1898 = vmatpush1.msra.mxu0 %v1406
        %1899 = vmatprep.subr.mxu0 0.0
        %1900 = vmatpush1.msra.mxu0 %v1407
        %1901 = vmatprep.subr.mxu0 0.0
        %1902 = vmatpush1.msra.mxu0 %v1408
        %1903 = vmatprep.subr.mxu0 0.0
        %1904 = vmatpush1.msra.mxu0 %v1409
        %1905 = vmatprep.subr.mxu0 0.0
        %1906 = vmatpush1.msra.mxu0 %v1410
        %1907 = vmatprep.subr.mxu0 0.0
        %1908 = vmatpush1.msra.mxu0 %v1411
        %1909 = vmatprep.subr.mxu0 0.0
        %1910 = vmatpush1.msra.mxu0 %v1412
        %1911 = vmatprep.subr.mxu0 0.0
        %1912 = vmatpush1.msra.mxu0 %v1413
        %1913 = vmatprep.subr.mxu0 0.0
        %1914 = vmatpush1.msra.mxu0 %v1414
        %1915 = vmatprep.subr.mxu0 0.0
        %1916 = vmatpush1.msra.mxu0 %v1415
        %1917 = vmatprep.subr.mxu0 0.0
        %1918 = vmatpush1.msra.mxu0 %v1416
        %1919 = vmatprep.subr.mxu0 0.0
        %1920 = vmatpush1.msra.mxu0 %v1417
        %1921 = vmatprep.subr.mxu0 0.0
        %1922 = vmatpush1.msra.mxu0 %v1418
        %1923 = vmatprep.subr.mxu0 0.0
        %1924 = vmatpush1.msra.mxu0 %v1419
        %1925 = vmatprep.subr.mxu0 0.0
        %1926 = vmatpush1.msra.mxu0 %v1420
        %1927 = vmatprep.subr.mxu0 0.0
        %1928 = vmatpush1.msra.mxu0 %v1421
        %1929 = vmatprep.mubr.f32.mxu0 %v1183
        %1930 = vmatmul.mubr.f32.gmra.mrb[0].mxu0 %v1182
        %v1931 = vpop.f32.mrb[0].mxu0
        %v1932 = vadd.f32 %v1827, %v1931
        %v1933 = vpop.f32.mrb[0].mxu0
        %1934 = vmatprep.mubr.f32.mxu0 %v1194
        %1935 = vmatmul.mubr.f32.gmra.mrb[0].mxu0 %v1193
        %v1936 = vpop.f32.mrb[0].mxu0
        %v1937 = vadd.f32 %v1832, %v1936
        %v1938 = vpop.f32.mrb[0].mxu0
        %1939 = vmatprep.mubr.f32.mxu0 %v1205
        %1940 = vmatmul.mubr.f32.gmra.mrb[0].mxu0 %v1204
        %v1941 = vpop.f32.mrb[0].mxu0
        %v1942 = vadd.f32 %v1837, %v1941
        %v1943 = vpop.f32.mrb[0].mxu0
        %1944 = vmatprep.mubr.f32.mxu0 %v1216
        %1945 = vmatmul.mubr.f32.gmra.mrb[0].mxu0 %v1215
        %v1946 = vpop.f32.mrb[0].mxu0
        %v1947 = vadd.f32 %v1842, %v1946
        %v1948 = vpop.f32.mrb[0].mxu0
        %1949 = vmatprep.mubr.f32.mxu0 %v1227
        %1950 = vmatmul.mubr.f32.gmra.mrb[0].mxu0 %v1226
        %v1951 = vpop.f32.mrb[0].mxu0
        %v1952 = vadd.f32 %v1847, %v1951
        %v1953 = vpop.f32.mrb[0].mxu0
        %1954 = vmatprep.mubr.f32.mxu0 %v1238
        %1955 = vmatmul.mubr.f32.gmra.mrb[0].mxu0 %v1237
        %v1956 = vpop.f32.mrb[0].mxu0
        %v1957 = vadd.f32 %v1852, %v1956
        %v1958 = vpop.f32.mrb[0].mxu0
        %1959 = vmatprep.mubr.f32.mxu0 %v1249
        %1960 = vmatmul.mubr.f32.gmra.mrb[0].mxu0 %v1248
        %v1961 = vpop.f32.mrb[0].mxu0
        %v1962 = vadd.f32 %v1857, %v1961
        %v1963 = vpop.f32.mrb[0].mxu0
        %1964 = vmatprep.mubr.f32.mxu0 %v1260
        %1965 = vmatmul.mubr.f32.gmra.mrb[0].mxu0 %v1259
        %v1966 = vpop.f32.mrb[0].mxu0
        %v1967 = vadd.f32 %v1862, %v1966
        %v1968 = vpop.f32.mrb[0].mxu0
        %1969 = vdwg.mxu0
        %1970 = vmatprep.subr.mxu0 0.0
        %1971 = vmatpush1.msra.mxu0 %v1422
        %1972 = vmatprep.subr.mxu0 0.0
        %1973 = vmatpush1.msra.mxu0 %v1423
        %1974 = vmatprep.subr.mxu0 0.0
        %1975 = vmatpush1.msra.mxu0 %v1424
        %1976 = vmatprep.subr.mxu0 0.0
        %1977 = vmatpush1.msra.mxu0 %v1425
        %1978 = vmatprep.subr.mxu0 0.0
        %1979 = vmatpush1.msra.mxu0 %v1426
        %1980 = vmatprep.subr.mxu0 0.0
        %1981 = vmatpush1.msra.mxu0 %v1427
        %1982 = vmatprep.subr.mxu0 0.0
        %1983 = vmatpush1.msra.mxu0 %v1428
        %1984 = vmatprep.subr.mxu0 0.0
        %1985 = vmatpush1.msra.mxu0 %v1429
        %1986 = vmatprep.subr.mxu0 0.0
        %1987 = vmatpush1.msra.mxu0 %v1430
        %1988 = vmatprep.subr.mxu0 0.0
        %1989 = vmatpush1.msra.mxu0 %v1431
        %1990 = vmatprep.subr.mxu0 0.0
        %1991 = vmatpush1.msra.mxu0 %v1432
        %1992 = vmatprep.subr.mxu0 0.0
        %1993 = vmatpush1.msra.mxu0 %v1433
        %1994 = vmatprep.subr.mxu0 0.0
        %1995 = vmatpush1.msra.mxu0 %v1434
        %1996 = vmatprep.subr.mxu0 0.0
        %1997 = vmatpush1.msra.mxu0 %v1435
        %1998 = vmatprep.subr.mxu0 0.0
        %1999 = vmatpush1.msra.mxu0 %v1436
        %2000 = vmatprep.subr.mxu0 0.0
        %2001 = vmatpush1.msra.mxu0 %v1437
        %2002 = vmatprep.subr.mxu0 0.0
        %2003 = vmatpush1.msra.mxu0 0.0
        %2004 = vmatprep.subr.mxu0 0.0
        %2005 = vmatpush1.msra.mxu0 0.0
        %2006 = vmatprep.subr.mxu0 0.0
        %2007 = vmatpush1.msra.mxu0 0.0
        %2008 = vmatprep.subr.mxu0 0.0
        %2009 = vmatpush1.msra.mxu0 0.0
        %2010 = vmatprep.subr.mxu0 0.0
        %2011 = vmatpush1.msra.mxu0 0.0
        %2012 = vmatprep.subr.mxu0 0.0
        %2013 = vmatpush1.msra.mxu0 0.0
        %2014 = vmatprep.subr.mxu0 0.0
        %2015 = vmatpush1.msra.mxu0 0.0
        %2016 = vmatprep.subr.mxu0 0.0
        %2017 = vmatpush1.msra.mxu0 0.0
        %2018 = vmatprep.subr.mxu0 0.0
        %2019 = vmatpush1.msra.mxu0 0.0
        %2020 = vmatprep.subr.mxu0 0.0
        %2021 = vmatpush1.msra.mxu0 0.0
        %2022 = vmatprep.subr.mxu0 0.0
        %2023 = vmatpush1.msra.mxu0 0.0
        %2024 = vmatprep.subr.mxu0 0.0
        %2025 = vmatpush1.msra.mxu0 0.0
        %2026 = vmatprep.subr.mxu0 0.0
        %2027 = vmatpush1.msra.mxu0 0.0
        %2028 = vmatprep.subr.mxu0 0.0
        %2029 = vmatpush1.msra.mxu0 0.0
        %2030 = vmatprep.subr.mxu0 0.0
        %2031 = vmatpush1.msra.mxu0 0.0
        %2032 = vmatprep.subr.mxu0 0.0
        %2033 = vmatpush1.msra.mxu0 0.0
        %2034 = vmatprep.mubr.f32.mxu0 0.0
        %2035 = vmatmul.mubr.f32.gmra.mrb[0].mxu0 %v1184
        %v2036 = vpop.f32.mrb[0].mxu0
        %v2037 = vadd.f32 %v1932, %v2036
        %v2038 = vpop.f32.mrb[0].mxu0
        %2039 = vmatprep.mubr.f32.mxu0 0.0
        %2040 = vmatmul.mubr.f32.gmra.mrb[0].mxu0 %v1195
        %v2041 = vpop.f32.mrb[0].mxu0
        %v2042 = vadd.f32 %v1937, %v2041
        %v2043 = vpop.f32.mrb[0].mxu0
        %2044 = vmatprep.mubr.f32.mxu0 0.0
        %2045 = vmatmul.mubr.f32.gmra.mrb[0].mxu0 %v1206
        %v2046 = vpop.f32.mrb[0].mxu0
        %v2047 = vadd.f32 %v1942, %v2046
        %v2048 = vpop.f32.mrb[0].mxu0
        %2049 = vmatprep.mubr.f32.mxu0 0.0
        %2050 = vmatmul.mubr.f32.gmra.mrb[0].mxu0 %v1217
        %v2051 = vpop.f32.mrb[0].mxu0
        %v2052 = vadd.f32 %v1947, %v2051
        %v2053 = vpop.f32.mrb[0].mxu0
        %2054 = vmatprep.mubr.f32.mxu0 0.0
        %2055 = vmatmul.mubr.f32.gmra.mrb[0].mxu0 %v1228
        %v2056 = vpop.f32.mrb[0].mxu0
        %v2057 = vadd.f32 %v1952, %v2056
        %v2058 = vpop.f32.mrb[0].mxu0
        %2059 = vmatprep.mubr.f32.mxu0 0.0
        %2060 = vmatmul.mubr.f32.gmra.mrb[0].mxu0 %v1239
        %v2061 = vpop.f32.mrb[0].mxu0
        %v2062 = vadd.f32 %v1957, %v2061
        %v2063 = vpop.f32.mrb[0].mxu0
        %2064 = vmatprep.mubr.f32.mxu0 0.0
        %2065 = vmatmul.mubr.f32.gmra.mrb[0].mxu0 %v1250
        %v2066 = vpop.f32.mrb[0].mxu0
        %v2067 = vadd.f32 %v1962, %v2066
        %v2068 = vpop.f32.mrb[0].mxu0
        %2069 = vmatprep.mubr.f32.mxu0 0.0
        %2070 = vmatmul.mubr.f32.gmra.mrb[0].mxu0 %v1261
        %v2071 = vpop.f32.mrb[0].mxu0
        %v2072 = vadd.f32 %v1967, %v2071
        %v2073 = vpop.f32.mrb[0].mxu0
        %2074 = vdwg.mxu0
        %v2075 = vmax.f32 %v2037, 0.0
        %v2076 = vmax.f32 %v2042, 0.0
        %v2077 = vmax.f32 %v2047, 0.0
        %v2078 = vmax.f32 %v2052, 0.0
        %v2079 = vmax.f32 %v2057, 0.0
        %v2080 = vmax.f32 %v2062, 0.0
        %v2081 = vmax.f32 %v2067, 0.0
        %v2082 = vmax.f32 %v2072, 0.0
        %v2083 = vlaneseq
        %v2084 = vshrl.u32 %v2083, 7
        %v2085 = vadd.s32 %v2084, 8
        %v2086 = vadd.s32 %v2084, 16
        %v2087 = vadd.s32 %v2084, 24
        %v2088 = vadd.s32 %v2084, 32
        %v2089 = vadd.s32 %v2084, 40
        %v2090 = vadd.s32 %v2084, 48
        %v2091 = vadd.s32 %v2084, 56
        %vm2092 = vcmp.lt.s32.totalorder %v2084, 61
        %vm2093 = vcmp.lt.s32.totalorder %v2085, 61
        %vm2094 = vcmp.lt.s32.totalorder %v2086, 61
        %vm2095 = vcmp.lt.s32.totalorder %v2087, 61
        %vm2096 = vcmp.lt.s32.totalorder %v2088, 61
        %vm2097 = vcmp.lt.s32.totalorder %v2089, 61
        %vm2098 = vcmp.lt.s32.totalorder %v2090, 61
        %vm2099 = vcmp.lt.s32.totalorder %v2091, 61
        %v2100 = vsel %vm2092, 1, 0
        %v2101 = vsel %vm2093, 1, 0
        %v2102 = vsel %vm2094, 1, 0
        %v2103 = vsel %vm2095, 1, 0
        %v2104 = vsel %vm2096, 1, 0
        %v2105 = vsel %vm2097, 1, 0
        %v2106 = vsel %vm2098, 1, 0
        %v2107 = vsel %vm2099, 1, 0
        %vm2108 = vcmp.eq.s32.totalorder %v2100, 1
        %vm2109 = vcmp.eq.s32.totalorder %v2101, 1
        %vm2110 = vcmp.eq.s32.totalorder %v2102, 1
        %vm2111 = vcmp.eq.s32.totalorder %v2103, 1
        %vm2112 = vcmp.eq.s32.totalorder %v2104, 1
        %vm2113 = vcmp.eq.s32.totalorder %v2105, 1
        %vm2114 = vcmp.eq.s32.totalorder %v2106, 1
        %vm2115 = vcmp.eq.s32.totalorder %v2107, 1
        %v2116 = vsel %vm2108, %v2075, 0.0
        %v2117 = vsel %vm2109, %v2076, 0.0
        %v2118 = vsel %vm2110, %v2077, 0.0
        %v2119 = vsel %vm2111, %v2078, 0.0
        %v2120 = vsel %vm2112, %v2079, 0.0
        %v2121 = vsel %vm2113, %v2080, 0.0
        %v2122 = vsel %vm2114, %v2081, 0.0
        %v2123 = vsel %vm2115, %v2082, 0.0
        %2124 = vst [vmem:[#allocation3] sm:$0xff] 0.0
        %2125 = vst [vmem:[#allocation3 + $0x8] sm:$0xff] %v2116
        %2126 = vst [vmem:[#allocation3 + $0x10] sm:$0xff] %v2117
        %2127 = vst [vmem:[#allocation3 + $0x18] sm:$0xff] %v2118
        %2128 = vst [vmem:[#allocation3 + $0x20] sm:$0xff] %v2119
        %2129 = vst [vmem:[#allocation3 + $0x28] sm:$0xff] %v2120
        %2130 = vst [vmem:[#allocation3 + $0x30] sm:$0xff] %v2121
        %2131 = vst [vmem:[#allocation3 + $0x38] sm:$0xff] %v2122
        %2132 = vst [vmem:[#allocation3 + $0x40] sm:$0xff] %v2123
        %2133 = vst [vmem:[#allocation3 + $0x48] sm:$0xff] 0.0
        %2134 = vst [vmem:[#allocation3 + $0x50] sm:$0xff] 0.0
        %v2135 = vld [vmem:[#allocation3] sm:$0xff]
        %v2136 = vld [vmem:[#allocation3 + $0x8] sm:$0xff]
        %v2137 = vld [vmem:[#allocation3 + $0x10] sm:$0xff]
        %v2138 = vld [vmem:[#allocation3 + $0x18] sm:$0xff]
        %v2139 = vld [vmem:[#allocation3 + $0x20] sm:$0xff]
        %v2140 = vld [vmem:[#allocation3 + $0x28] sm:$0xff]
        %v2141 = vld [vmem:[#allocation3 + $0x30] sm:$0xff]
        %v2142 = vld [vmem:[#allocation3 + $0x38] sm:$0xff]
        %v2143 = vld [vmem:[#allocation3 + $0x40] sm:$0xff]
        %2144 = vst [vmem:[#allocation2] sm:$0xff] %v2135
        %2145 = vst [vmem:[#allocation2 + $0x58] sm:$0xff] %v2136
        %2146 = vst [vmem:[#allocation2 + $0xb0] sm:$0xff] %v2137
        %2147 = vst [vmem:[#allocation2 + $0x108] sm:$0xff] %v2138
        %2148 = vst [vmem:[#allocation2 + $0x160] sm:$0xff] %v2139
        %2149 = vst [vmem:[#allocation2 + $0x1b8] sm:$0xff] %v2140
        %2150 = vst [vmem:[#allocation2 + $0x210] sm:$0xff] %v2141
        %2151 = vst [vmem:[#allocation2 + $0x268] sm:$0xff] %v2142
        %2152 = vst [vmem:[#allocation2 + $0x2c0] sm:$0xff] %v2143
        %v2153 = vld [vmem:[#allocation3 + $0x1] sm:$0xff]
        %v2154 = vld [vmem:[#allocation3 + $0x9] sm:$0xff]
        %v2155 = vld [vmem:[#allocation3 + $0x11] sm:$0xff]
        %v2156 = vld [vmem:[#allocation3 + $0x19] sm:$0xff]
        %v2157 = vld [vmem:[#allocation3 + $0x21] sm:$0xff]
        %v2158 = vld [vmem:[#allocation3 + $0x29] sm:$0xff]
        %v2159 = vld [vmem:[#allocation3 + $0x31] sm:$0xff]
        %v2160 = vld [vmem:[#allocation3 + $0x39] sm:$0xff]
        %v2161 = vld [vmem:[#allocation3 + $0x41] sm:$0xff]
        %2162 = vst [vmem:[#allocation2 + $0x8] sm:$0xff] %v2153
        %2163 = vst [vmem:[#allocation2 + $0x60] sm:$0xff] %v2154
        %2164 = vst [vmem:[#allocation2 + $0xb8] sm:$0xff] %v2155
        %2165 = vst [vmem:[#allocation2 + $0x110] sm:$0xff] %v2156
        %2166 = vst [vmem:[#allocation2 + $0x168] sm:$0xff] %v2157
        %2167 = vst [vmem:[#allocation2 + $0x1c0] sm:$0xff] %v2158
        %2168 = vst [vmem:[#allocation2 + $0x218] sm:$0xff] %v2159
        %2169 = vst [vmem:[#allocation2 + $0x270] sm:$0xff] %v2160
        %2170 = vst [vmem:[#allocation2 + $0x2c8] sm:$0xff] %v2161
        %v2171 = vld [vmem:[#allocation3 + $0x2] sm:$0xff]
        %v2172 = vld [vmem:[#allocation3 + $0xa] sm:$0xff]
        %v2173 = vld [vmem:[#allocation3 + $0x12] sm:$0xff]
        %v2174 = vld [vmem:[#allocation3 + $0x1a] sm:$0xff]
        %v2175 = vld [vmem:[#allocation3 + $0x22] sm:$0xff]
        %v2176 = vld [vmem:[#allocation3 + $0x2a] sm:$0xff]
        %v2177 = vld [vmem:[#allocation3 + $0x32] sm:$0xff]
        %v2178 = vld [vmem:[#allocation3 + $0x3a] sm:$0xff]
        %v2179 = vld [vmem:[#allocation3 + $0x42] sm:$0xff]
        %2180 = vst [vmem:[#allocation2 + $0x10] sm:$0xff] %v2171
        %2181 = vst [vmem:[#allocation2 + $0x68] sm:$0xff] %v2172
        %2182 = vst [vmem:[#allocation2 + $0xc0] sm:$0xff] %v2173
        %2183 = vst [vmem:[#allocation2 + $0x118] sm:$0xff] %v2174
        %2184 = vst [vmem:[#allocation2 + $0x170] sm:$0xff] %v2175
        %2185 = vst [vmem:[#allocation2 + $0x1c8] sm:$0xff] %v2176
        %2186 = vst [vmem:[#allocation2 + $0x220] sm:$0xff] %v2177
        %2187 = vst [vmem:[#allocation2 + $0x278] sm:$0xff] %v2178
        %2188 = vst [vmem:[#allocation2 + $0x2d0] sm:$0xff] %v2179
        %v2189 = vld [vmem:[#allocation3 + $0x3] sm:$0xff]
        %v2190 = vld [vmem:[#allocation3 + $0xb] sm:$0xff]
        %v2191 = vld [vmem:[#allocation3 + $0x13] sm:$0xff]
        %v2192 = vld [vmem:[#allocation3 + $0x1b] sm:$0xff]
        %v2193 = vld [vmem:[#allocation3 + $0x23] sm:$0xff]
        %v2194 = vld [vmem:[#allocation3 + $0x2b] sm:$0xff]
        %v2195 = vld [vmem:[#allocation3 + $0x33] sm:$0xff]
        %v2196 = vld [vmem:[#allocation3 + $0x3b] sm:$0xff]
        %v2197 = vld [vmem:[#allocation3 + $0x43] sm:$0xff]
        %2198 = vst [vmem:[#allocation2 + $0x18] sm:$0xff] %v2189
        %2199 = vst [vmem:[#allocation2 + $0x70] sm:$0xff] %v2190
        %2200 = vst [vmem:[#allocation2 + $0xc8] sm:$0xff] %v2191
        %2201 = vst [vmem:[#allocation2 + $0x120] sm:$0xff] %v2192
        %2202 = vst [vmem:[#allocation2 + $0x178] sm:$0xff] %v2193
        %2203 = vst [vmem:[#allocation2 + $0x1d0] sm:$0xff] %v2194
        %2204 = vst [vmem:[#allocation2 + $0x228] sm:$0xff] %v2195
        %2205 = vst [vmem:[#allocation2 + $0x280] sm:$0xff] %v2196
        %2206 = vst [vmem:[#allocation2 + $0x2d8] sm:$0xff] %v2197
        %v2207 = vld [vmem:[#allocation3 + $0x4] sm:$0xff]
        %v2208 = vld [vmem:[#allocation3 + $0xc] sm:$0xff]
        %v2209 = vld [vmem:[#allocation3 + $0x14] sm:$0xff]
        %v2210 = vld [vmem:[#allocation3 + $0x1c] sm:$0xff]
        %v2211 = vld [vmem:[#allocation3 + $0x24] sm:$0xff]
        %v2212 = vld [vmem:[#allocation3 + $0x2c] sm:$0xff]
        %v2213 = vld [vmem:[#allocation3 + $0x34] sm:$0xff]
        %v2214 = vld [vmem:[#allocation3 + $0x3c] sm:$0xff]
        %v2215 = vld [vmem:[#allocation3 + $0x44] sm:$0xff]
        %2216 = vst [vmem:[#allocation2 + $0x20] sm:$0xff] %v2207
        %2217 = vst [vmem:[#allocation2 + $0x78] sm:$0xff] %v2208
        %2218 = vst [vmem:[#allocation2 + $0xd0] sm:$0xff] %v2209
        %2219 = vst [vmem:[#allocation2 + $0x128] sm:$0xff] %v2210
        %2220 = vst [vmem:[#allocation2 + $0x180] sm:$0xff] %v2211
        %2221 = vst [vmem:[#allocation2 + $0x1d8] sm:$0xff] %v2212
        %2222 = vst [vmem:[#allocation2 + $0x230] sm:$0xff] %v2213
        %2223 = vst [vmem:[#allocation2 + $0x288] sm:$0xff] %v2214
        %2224 = vst [vmem:[#allocation2 + $0x2e0] sm:$0xff] %v2215
        %v2225 = vld [vmem:[#allocation3 + $0x5] sm:$0xff]
        %v2226 = vld [vmem:[#allocation3 + $0xd] sm:$0xff]
        %v2227 = vld [vmem:[#allocation3 + $0x15] sm:$0xff]
        %v2228 = vld [vmem:[#allocation3 + $0x1d] sm:$0xff]
        %v2229 = vld [vmem:[#allocation3 + $0x25] sm:$0xff]
        %v2230 = vld [vmem:[#allocation3 + $0x2d] sm:$0xff]
        %v2231 = vld [vmem:[#allocation3 + $0x35] sm:$0xff]
        %v2232 = vld [vmem:[#allocation3 + $0x3d] sm:$0xff]
        %v2233 = vld [vmem:[#allocation3 + $0x45] sm:$0xff]
        %2234 = vst [vmem:[#allocation2 + $0x28] sm:$0xff] %v2225
        %2235 = vst [vmem:[#allocation2 + $0x80] sm:$0xff] %v2226
        %2236 = vst [vmem:[#allocation2 + $0xd8] sm:$0xff] %v2227
        %2237 = vst [vmem:[#allocation2 + $0x130] sm:$0xff] %v2228
        %2238 = vst [vmem:[#allocation2 + $0x188] sm:$0xff] %v2229
        %2239 = vst [vmem:[#allocation2 + $0x1e0] sm:$0xff] %v2230
        %2240 = vst [vmem:[#allocation2 + $0x238] sm:$0xff] %v2231
        %2241 = vst [vmem:[#allocation2 + $0x290] sm:$0xff] %v2232
        %2242 = vst [vmem:[#allocation2 + $0x2e8] sm:$0xff] %v2233
        %v2243 = vld [vmem:[#allocation3 + $0x6] sm:$0xff]
        %v2244 = vld [vmem:[#allocation3 + $0xe] sm:$0xff]
        %v2245 = vld [vmem:[#allocation3 + $0x16] sm:$0xff]
        %v2246 = vld [vmem:[#allocation3 + $0x1e] sm:$0xff]
        %v2247 = vld [vmem:[#allocation3 + $0x26] sm:$0xff]
        %v2248 = vld [vmem:[#allocation3 + $0x2e] sm:$0xff]
        %v2249 = vld [vmem:[#allocation3 + $0x36] sm:$0xff]
        %v2250 = vld [vmem:[#allocation3 + $0x3e] sm:$0xff]
        %v2251 = vld [vmem:[#allocation3 + $0x46] sm:$0xff]
        %2252 = vst [vmem:[#allocation2 + $0x30] sm:$0xff] %v2243
        %2253 = vst [vmem:[#allocation2 + $0x88] sm:$0xff] %v2244
        %2254 = vst [vmem:[#allocation2 + $0xe0] sm:$0xff] %v2245
        %2255 = vst [vmem:[#allocation2 + $0x138] sm:$0xff] %v2246
        %2256 = vst [vmem:[#allocation2 + $0x190] sm:$0xff] %v2247
        %2257 = vst [vmem:[#allocation2 + $0x1e8] sm:$0xff] %v2248
        %2258 = vst [vmem:[#allocation2 + $0x240] sm:$0xff] %v2249
        %2259 = vst [vmem:[#allocation2 + $0x298] sm:$0xff] %v2250
        %2260 = vst [vmem:[#allocation2 + $0x2f0] sm:$0xff] %v2251
        %v2261 = vld [vmem:[#allocation3 + $0x7] sm:$0xff]
        %v2262 = vld [vmem:[#allocation3 + $0xf] sm:$0xff]
        %v2263 = vld [vmem:[#allocation3 + $0x17] sm:$0xff]
        %v2264 = vld [vmem:[#allocation3 + $0x1f] sm:$0xff]
        %v2265 = vld [vmem:[#allocation3 + $0x27] sm:$0xff]
        %v2266 = vld [vmem:[#allocation3 + $0x2f] sm:$0xff]
        %v2267 = vld [vmem:[#allocation3 + $0x37] sm:$0xff]
        %v2268 = vld [vmem:[#allocation3 + $0x3f] sm:$0xff]
        %v2269 = vld [vmem:[#allocation3 + $0x47] sm:$0xff]
        %2270 = vst [vmem:[#allocation2 + $0x38] sm:$0xff] %v2261
        %2271 = vst [vmem:[#allocation2 + $0x90] sm:$0xff] %v2262
        %2272 = vst [vmem:[#allocation2 + $0xe8] sm:$0xff] %v2263
        %2273 = vst [vmem:[#allocation2 + $0x140] sm:$0xff] %v2264
        %2274 = vst [vmem:[#allocation2 + $0x198] sm:$0xff] %v2265
        %2275 = vst [vmem:[#allocation2 + $0x1f0] sm:$0xff] %v2266
        %2276 = vst [vmem:[#allocation2 + $0x248] sm:$0xff] %v2267
        %2277 = vst [vmem:[#allocation2 + $0x2a0] sm:$0xff] %v2268
        %2278 = vst [vmem:[#allocation2 + $0x2f8] sm:$0xff] %v2269
        %v2279 = vld [vmem:[#allocation3 + $0x8] sm:$0xff]
        %v2280 = vld [vmem:[#allocation3 + $0x10] sm:$0xff]
        %v2281 = vld [vmem:[#allocation3 + $0x18] sm:$0xff]
        %v2282 = vld [vmem:[#allocation3 + $0x20] sm:$0xff]
        %v2283 = vld [vmem:[#allocation3 + $0x28] sm:$0xff]
        %v2284 = vld [vmem:[#allocation3 + $0x30] sm:$0xff]
        %v2285 = vld [vmem:[#allocation3 + $0x38] sm:$0xff]
        %v2286 = vld [vmem:[#allocation3 + $0x40] sm:$0xff]
        %v2287 = vld [vmem:[#allocation3 + $0x48] sm:$0xff]
        %2288 = vst [vmem:[#allocation2 + $0x40] sm:$0xff] %v2279
        %2289 = vst [vmem:[#allocation2 + $0x98] sm:$0xff] %v2280
        %2290 = vst [vmem:[#allocation2 + $0xf0] sm:$0xff] %v2281
        %2291 = vst [vmem:[#allocation2 + $0x148] sm:$0xff] %v2282
        %2292 = vst [vmem:[#allocation2 + $0x1a0] sm:$0xff] %v2283
        %2293 = vst [vmem:[#allocation2 + $0x1f8] sm:$0xff] %v2284
        %2294 = vst [vmem:[#allocation2 + $0x250] sm:$0xff] %v2285
        %2295 = vst [vmem:[#allocation2 + $0x2a8] sm:$0xff] %v2286
        %2296 = vst [vmem:[#allocation2 + $0x300] sm:$0xff] %v2287
        %v2297 = vld [vmem:[#allocation3 + $0x9] sm:$0xff]
        %v2298 = vld [vmem:[#allocation3 + $0x11] sm:$0xff]
        %v2299 = vld [vmem:[#allocation3 + $0x19] sm:$0xff]
        %v2300 = vld [vmem:[#allocation3 + $0x21] sm:$0xff]
        %v2301 = vld [vmem:[#allocation3 + $0x29] sm:$0xff]
        %v2302 = vld [vmem:[#allocation3 + $0x31] sm:$0xff]
        %v2303 = vld [vmem:[#allocation3 + $0x39] sm:$0xff]
        %v2304 = vld [vmem:[#allocation3 + $0x41] sm:$0xff]
        %v2305 = vld [vmem:[#allocation3 + $0x49] sm:$0xff]
        %2306 = vst [vmem:[#allocation2 + $0x48] sm:$0xff] %v2297
        %2307 = vst [vmem:[#allocation2 + $0xa0] sm:$0xff] %v2298
        %2308 = vst [vmem:[#allocation2 + $0xf8] sm:$0xff] %v2299
        %2309 = vst [vmem:[#allocation2 + $0x150] sm:$0xff] %v2300
        %2310 = vst [vmem:[#allocation2 + $0x1a8] sm:$0xff] %v2301
        %2311 = vst [vmem:[#allocation2 + $0x200] sm:$0xff] %v2302
        %2312 = vst [vmem:[#allocation2 + $0x258] sm:$0xff] %v2303
        %2313 = vst [vmem:[#allocation2 + $0x2b0] sm:$0xff] %v2304
        %2314 = vst [vmem:[#allocation2 + $0x308] sm:$0xff] %v2305
        %v2315 = vld [vmem:[#allocation3 + $0xa] sm:$0xff]
        %v2316 = vld [vmem:[#allocation3 + $0x12] sm:$0xff]
        %v2317 = vld [vmem:[#allocation3 + $0x1a] sm:$0xff]
        %v2318 = vld [vmem:[#allocation3 + $0x22] sm:$0xff]
        %v2319 = vld [vmem:[#allocation3 + $0x2a] sm:$0xff]
        %v2320 = vld [vmem:[#allocation3 + $0x32] sm:$0xff]
        %v2321 = vld [vmem:[#allocation3 + $0x3a] sm:$0xff]
        %v2322 = vld [vmem:[#allocation3 + $0x42] sm:$0xff]
        %v2323 = vld [vmem:[#allocation3 + $0x4a] sm:$0xff]
        %2324 = vst [vmem:[#allocation2 + $0x50] sm:$0xff] %v2315
        %2325 = vst [vmem:[#allocation2 + $0xa8] sm:$0xff] %v2316
        %2326 = vst [vmem:[#allocation2 + $0x100] sm:$0xff] %v2317
        %2327 = vst [vmem:[#allocation2 + $0x158] sm:$0xff] %v2318
        %2328 = vst [vmem:[#allocation2 + $0x1b0] sm:$0xff] %v2319
        %2329 = vst [vmem:[#allocation2 + $0x208] sm:$0xff] %v2320
        %2330 = vst [vmem:[#allocation2 + $0x260] sm:$0xff] %v2321
        %2331 = vst [vmem:[#allocation2 + $0x2b8] sm:$0xff] %v2322
        %2332 = vst [vmem:[#allocation2 + $0x310] sm:$0xff] %v2323
        %v2333 = vld [vmem:[#allocation2] sm:$0xff]
        %v2334 = vld [vmem:[#allocation2 + $0x8] sm:$0xff]
        %v2335 = vld [vmem:[#allocation2 + $0x10] sm:$0xff]
        %v2336 = vld [vmem:[#allocation2 + $0x18] sm:$0xff]
        %v2337 = vld [vmem:[#allocation2 + $0x20] sm:$0xff]
        %v2338 = vld [vmem:[#allocation2 + $0x28] sm:$0xff]
        %v2339 = vld [vmem:[#allocation2 + $0x30] sm:$0xff]
        %v2340 = vld [vmem:[#allocation2 + $0x38] sm:$0xff]
        %v2341 = vld [vmem:[#allocation2 + $0x40] sm:$0xff]
        %v2342 = vld [vmem:[#allocation2 + $0x48] sm:$0xff]
        %v2343 = vld [vmem:[#allocation2 + $0x50] sm:$0xff]
        %v2344 = vld [vmem:[#allocation2 + $0x58] sm:$0xff]
        %v2345 = vld [vmem:[#allocation2 + $0x60] sm:$0xff]
        %v2346 = vld [vmem:[#allocation2 + $0x68] sm:$0xff]
        %v2347 = vld [vmem:[#allocation2 + $0x70] sm:$0xff]
        %v2348 = vld [vmem:[#allocation2 + $0x78] sm:$0xff]
        %v2349 = vld [vmem:[#allocation2 + $0x80] sm:$0xff]
        %v2350 = vld [vmem:[#allocation2 + $0x88] sm:$0xff]
        %v2351 = vld [vmem:[#allocation2 + $0x90] sm:$0xff]
        %v2352 = vld [vmem:[#allocation2 + $0x98] sm:$0xff]
        %v2353 = vld [vmem:[#allocation2 + $0xa0] sm:$0xff]
        %v2354 = vld [vmem:[#allocation2 + $0xa8] sm:$0xff]
        %v2355 = vld [vmem:[#allocation2 + $0xb0] sm:$0xff]
        %v2356 = vld [vmem:[#allocation2 + $0xb8] sm:$0xff]
        %v2357 = vld [vmem:[#allocation2 + $0xc0] sm:$0xff]
        %v2358 = vld [vmem:[#allocation2 + $0xc8] sm:$0xff]
        %v2359 = vld [vmem:[#allocation2 + $0xd0] sm:$0xff]
        %v2360 = vld [vmem:[#allocation2 + $0xd8] sm:$0xff]
        %v2361 = vld [vmem:[#allocation2 + $0xe0] sm:$0xff]
        %v2362 = vld [vmem:[#allocation2 + $0xe8] sm:$0xff]
        %v2363 = vld [vmem:[#allocation2 + $0xf0] sm:$0xff]
        %v2364 = vld [vmem:[#allocation2 + $0xf8] sm:$0xff]
        %v2365 = vld [vmem:[#allocation2 + $0x100] sm:$0xff]
        %v2366 = vld [vmem:[#allocation2 + $0x108] sm:$0xff]
        %v2367 = vld [vmem:[#allocation2 + $0x110] sm:$0xff]
        %v2368 = vld [vmem:[#allocation2 + $0x118] sm:$0xff]
        %v2369 = vld [vmem:[#allocation2 + $0x120] sm:$0xff]
        %v2370 = vld [vmem:[#allocation2 + $0x128] sm:$0xff]
        %v2371 = vld [vmem:[#allocation2 + $0x130] sm:$0xff]
        %v2372 = vld [vmem:[#allocation2 + $0x138] sm:$0xff]
        %v2373 = vld [vmem:[#allocation2 + $0x140] sm:$0xff]
        %v2374 = vld [vmem:[#allocation2 + $0x148] sm:$0xff]
        %v2375 = vld [vmem:[#allocation2 + $0x150] sm:$0xff]
        %v2376 = vld [vmem:[#allocation2 + $0x158] sm:$0xff]
        %v2377 = vld [vmem:[#allocation2 + $0x160] sm:$0xff]
        %v2378 = vld [vmem:[#allocation2 + $0x168] sm:$0xff]
        %v2379 = vld [vmem:[#allocation2 + $0x170] sm:$0xff]
        %v2380 = vld [vmem:[#allocation2 + $0x178] sm:$0xff]
        %v2381 = vld [vmem:[#allocation2 + $0x180] sm:$0xff]
        %v2382 = vld [vmem:[#allocation2 + $0x188] sm:$0xff]
        %v2383 = vld [vmem:[#allocation2 + $0x190] sm:$0xff]
        %v2384 = vld [vmem:[#allocation2 + $0x198] sm:$0xff]
        %v2385 = vld [vmem:[#allocation2 + $0x1a0] sm:$0xff]
        %v2386 = vld [vmem:[#allocation2 + $0x1a8] sm:$0xff]
        %v2387 = vld [vmem:[#allocation2 + $0x1b0] sm:$0xff]
        %v2388 = vld [vmem:[#allocation2 + $0x1b8] sm:$0xff]
        %v2389 = vld [vmem:[#allocation2 + $0x1c0] sm:$0xff]
        %v2390 = vld [vmem:[#allocation2 + $0x1c8] sm:$0xff]
        %v2391 = vld [vmem:[#allocation2 + $0x1d0] sm:$0xff]
        %v2392 = vld [vmem:[#allocation2 + $0x1d8] sm:$0xff]
        %v2393 = vld [vmem:[#allocation2 + $0x1e0] sm:$0xff]
        %v2394 = vld [vmem:[#allocation2 + $0x1e8] sm:$0xff]
        %v2395 = vld [vmem:[#allocation2 + $0x1f0] sm:$0xff]
        %v2396 = vld [vmem:[#allocation2 + $0x1f8] sm:$0xff]
        %v2397 = vld [vmem:[#allocation2 + $0x200] sm:$0xff]
        %v2398 = vld [vmem:[#allocation2 + $0x208] sm:$0xff]
        %v2399 = vld [vmem:[#allocation2 + $0x210] sm:$0xff]
        %v2400 = vld [vmem:[#allocation2 + $0x218] sm:$0xff]
        %v2401 = vld [vmem:[#allocation2 + $0x220] sm:$0xff]
        %v2402 = vld [vmem:[#allocation2 + $0x228] sm:$0xff]
        %v2403 = vld [vmem:[#allocation2 + $0x230] sm:$0xff]
        %v2404 = vld [vmem:[#allocation2 + $0x238] sm:$0xff]
        %v2405 = vld [vmem:[#allocation2 + $0x240] sm:$0xff]
        %v2406 = vld [vmem:[#allocation2 + $0x248] sm:$0xff]
        %v2407 = vld [vmem:[#allocation2 + $0x250] sm:$0xff]
        %v2408 = vld [vmem:[#allocation2 + $0x258] sm:$0xff]
        %v2409 = vld [vmem:[#allocation2 + $0x260] sm:$0xff]
        %v2410 = vld [vmem:[#allocation2 + $0x268] sm:$0xff]
        %v2411 = vld [vmem:[#allocation2 + $0x270] sm:$0xff]
        %v2412 = vld [vmem:[#allocation2 + $0x278] sm:$0xff]
        %v2413 = vld [vmem:[#allocation2 + $0x280] sm:$0xff]
        %v2414 = vld [vmem:[#allocation2 + $0x288] sm:$0xff]
        %v2415 = vld [vmem:[#allocation2 + $0x290] sm:$0xff]
        %v2416 = vld [vmem:[#allocation2 + $0x298] sm:$0xff]
        %v2417 = vld [vmem:[#allocation2 + $0x2a0] sm:$0xff]
        %v2418 = vld [vmem:[#allocation2 + $0x2a8] sm:$0xff]
        %v2419 = vld [vmem:[#allocation2 + $0x2b0] sm:$0xff]
        %v2420 = vld [vmem:[#allocation2 + $0x2b8] sm:$0xff]
        %v2421 = vld [vmem:[#allocation2 + $0x2c0] sm:$0xff]
        %v2422 = vld [vmem:[#allocation2 + $0x2c8] sm:$0xff]
        %v2423 = vld [vmem:[#allocation2 + $0x2d0] sm:$0xff]
        %v2424 = vld [vmem:[#allocation2 + $0x2d8] sm:$0xff]
        %v2425 = vld [vmem:[#allocation2 + $0x2e0] sm:$0xff]
        %v2426 = vld [vmem:[#allocation2 + $0x2e8] sm:$0xff]
        %v2427 = vld [vmem:[#allocation2 + $0x2f0] sm:$0xff]
        %v2428 = vld [vmem:[#allocation2 + $0x2f8] sm:$0xff]
        %v2429 = vld [vmem:[#allocation2 + $0x300] sm:$0xff]
        %v2430 = vld [vmem:[#allocation2 + $0x308] sm:$0xff]
        %v2431 = vld [vmem:[#allocation2 + $0x310] sm:$0xff]
        %v2432 = vld [vmem:[#allocation10] sm:$0xff]
        %v2433 = vld [vmem:[#allocation10 + $0x8] sm:$0xff]
        %v2434 = vld [vmem:[#allocation10 + $0x10] sm:$0xff]
        %v2435 = vld [vmem:[#allocation10 + $0x18] sm:$0xff]
        %v2436 = vld [vmem:[#allocation10 + $0x20] sm:$0xff]
        %v2437 = vld [vmem:[#allocation10 + $0x28] sm:$0xff]
        %v2438 = vld [vmem:[#allocation10 + $0x30] sm:$0xff]
        %v2439 = vld [vmem:[#allocation10 + $0x38] sm:$0xff]
        %v2440 = vld [vmem:[#allocation10 + $0x40] sm:$0xff]
        %v2441 = vld [vmem:[#allocation10 + $0x48] sm:$0xff]
        %v2442 = vld [vmem:[#allocation10 + $0x50] sm:$0xff]
        %v2443 = vld [vmem:[#allocation10 + $0x58] sm:$0xff]
        %v2444 = vld [vmem:[#allocation10 + $0x60] sm:$0xff]
        %v2445 = vld [vmem:[#allocation10 + $0x68] sm:$0xff]
        %v2446 = vld [vmem:[#allocation10 + $0x70] sm:$0xff]
        %v2447 = vld [vmem:[#allocation10 + $0x78] sm:$0xff]
        %v2448 = vld [vmem:[#allocation10 + $0x80] sm:$0xff]
        %v2449 = vld [vmem:[#allocation10 + $0x88] sm:$0xff]
        %v2450 = vld [vmem:[#allocation10 + $0x90] sm:$0xff]
        %v2451 = vld [vmem:[#allocation10 + $0x98] sm:$0xff]
        %v2452 = vld [vmem:[#allocation10 + $0xa0] sm:$0xff]
        %v2453 = vld [vmem:[#allocation10 + $0xa8] sm:$0xff]
        %v2454 = vld [vmem:[#allocation10 + $0xb0] sm:$0xff]
        %v2455 = vld [vmem:[#allocation10 + $0xb8] sm:$0xff]
        %v2456 = vld [vmem:[#allocation10 + $0xc0] sm:$0xff]
        %v2457 = vld [vmem:[#allocation10 + $0xc8] sm:$0xff]
        %v2458 = vld [vmem:[#allocation10 + $0xd0] sm:$0xff]
        %v2459 = vld [vmem:[#allocation10 + $0xd8] sm:$0xff]
        %v2460 = vld [vmem:[#allocation10 + $0xe0] sm:$0xff]
        %v2461 = vld [vmem:[#allocation10 + $0xe8] sm:$0xff]
        %v2462 = vld [vmem:[#allocation10 + $0xf0] sm:$0xff]
        %v2463 = vld [vmem:[#allocation10 + $0xf8] sm:$0xff]
        %v2464 = vld [vmem:[#allocation10 + $0x100] sm:$0xff]
        %v2465 = vld [vmem:[#allocation10 + $0x108] sm:$0xff]
        %v2466 = vld [vmem:[#allocation10 + $0x110] sm:$0xff]
        %v2467 = vld [vmem:[#allocation10 + $0x118] sm:$0xff]
        %v2468 = vld [vmem:[#allocation10 + $0x120] sm:$0xff]
        %v2469 = vld [vmem:[#allocation10 + $0x128] sm:$0xff]
        %v2470 = vld [vmem:[#allocation10 + $0x130] sm:$0xff]
        %v2471 = vld [vmem:[#allocation10 + $0x138] sm:$0xff]
        %v2472 = vld [vmem:[#allocation10 + $0x140] sm:$0xff]
        %v2473 = vld [vmem:[#allocation10 + $0x148] sm:$0xff]
        %v2474 = vld [vmem:[#allocation10 + $0x150] sm:$0xff]
        %v2475 = vld [vmem:[#allocation10 + $0x158] sm:$0xff]
        %v2476 = vld [vmem:[#allocation10 + $0x160] sm:$0xff]
        %v2477 = vld [vmem:[#allocation10 + $0x168] sm:$0xff]
        %v2478 = vld [vmem:[#allocation10 + $0x170] sm:$0xff]
        %v2479 = vld [vmem:[#allocation10 + $0x178] sm:$0xff]
        %v2480 = vld [vmem:[#allocation10 + $0x180] sm:$0xff]
        %v2481 = vld [vmem:[#allocation10 + $0x188] sm:$0xff]
        %v2482 = vld [vmem:[#allocation10 + $0x190] sm:$0xff]
        %v2483 = vld [vmem:[#allocation10 + $0x198] sm:$0xff]
        %v2484 = vld [vmem:[#allocation10 + $0x1a0] sm:$0xff]
        %v2485 = vld [vmem:[#allocation10 + $0x1a8] sm:$0xff]
        %v2486 = vld [vmem:[#allocation10 + $0x1b0] sm:$0xff]
        %v2487 = vld [vmem:[#allocation10 + $0x1b8] sm:$0xff]
        %v2488 = vld [vmem:[#allocation10 + $0x1c0] sm:$0xff]
        %v2489 = vld [vmem:[#allocation10 + $0x1c8] sm:$0xff]
        %v2490 = vld [vmem:[#allocation10 + $0x1d0] sm:$0xff]
        %v2491 = vld [vmem:[#allocation10 + $0x1d8] sm:$0xff]
        %v2492 = vld [vmem:[#allocation10 + $0x1e0] sm:$0xff]
        %v2493 = vld [vmem:[#allocation10 + $0x1e8] sm:$0xff]
        %v2494 = vld [vmem:[#allocation10 + $0x1f0] sm:$0xff]
        %v2495 = vld [vmem:[#allocation10 + $0x1f8] sm:$0xff]
        %v2496 = vld [vmem:[#allocation10 + $0x200] sm:$0xff]
        %v2497 = vld [vmem:[#allocation10 + $0x208] sm:$0xff]
        %v2498 = vld [vmem:[#allocation10 + $0x210] sm:$0xff]
        %v2499 = vld [vmem:[#allocation10 + $0x218] sm:$0xff]
        %v2500 = vld [vmem:[#allocation10 + $0x220] sm:$0xff]
        %v2501 = vld [vmem:[#allocation10 + $0x228] sm:$0xff]
        %v2502 = vld [vmem:[#allocation10 + $0x230] sm:$0xff]
        %v2503 = vld [vmem:[#allocation10 + $0x238] sm:$0xff]
        %v2504 = vld [vmem:[#allocation10 + $0x240] sm:$0xff]
        %v2505 = vld [vmem:[#allocation10 + $0x248] sm:$0xff]
        %v2506 = vld [vmem:[#allocation10 + $0x250] sm:$0xff]
        %v2507 = vld [vmem:[#allocation10 + $0x258] sm:$0xff]
        %v2508 = vld [vmem:[#allocation10 + $0x260] sm:$0xff]
        %v2509 = vld [vmem:[#allocation10 + $0x268] sm:$0xff]
        %v2510 = vld [vmem:[#allocation10 + $0x270] sm:$0xff]
        %v2511 = vld [vmem:[#allocation10 + $0x278] sm:$0xff]
        %v2512 = vld [vmem:[#allocation10 + $0x280] sm:$0xff]
        %v2513 = vld [vmem:[#allocation10 + $0x288] sm:$0xff]
        %v2514 = vld [vmem:[#allocation10 + $0x290] sm:$0xff]
        %v2515 = vld [vmem:[#allocation10 + $0x298] sm:$0xff]
        %v2516 = vld [vmem:[#allocation10 + $0x2a0] sm:$0xff]
        %v2517 = vld [vmem:[#allocation10 + $0x2a8] sm:$0xff]
        %v2518 = vld [vmem:[#allocation10 + $0x2b0] sm:$0xff]
        %v2519 = vld [vmem:[#allocation10 + $0x2b8] sm:$0xff]
        %v2520 = vld [vmem:[#allocation10 + $0x2c0] sm:$0xff]
        %v2521 = vld [vmem:[#allocation10 + $0x2c8] sm:$0xff]
        %v2522 = vld [vmem:[#allocation10 + $0x2d0] sm:$0xff]
        %v2523 = vld [vmem:[#allocation10 + $0x2d8] sm:$0xff]
        %v2524 = vld [vmem:[#allocation10 + $0x2e0] sm:$0xff]
        %v2525 = vld [vmem:[#allocation10 + $0x2e8] sm:$0xff]
        %v2526 = vld [vmem:[#allocation10 + $0x2f0] sm:$0xff]
        %v2527 = vld [vmem:[#allocation10 + $0x2f8] sm:$0xff]
        %v2528 = vld [vmem:[#allocation10 + $0x300] sm:$0xff]
        %v2529 = vld [vmem:[#allocation10 + $0x308] sm:$0xff]
        %v2530 = vld [vmem:[#allocation10 + $0x310] sm:$0xff]
        %v2531 = vld [vmem:[#allocation10 + $0x318] sm:$0xff]
        %v2532 = vld [vmem:[#allocation10 + $0x320] sm:$0xff]
        %v2533 = vld [vmem:[#allocation10 + $0x328] sm:$0xff]
        %v2534 = vld [vmem:[#allocation10 + $0x330] sm:$0xff]
        %v2535 = vld [vmem:[#allocation10 + $0x338] sm:$0xff]
        %v2536 = vld [vmem:[#allocation10 + $0x340] sm:$0xff]
        %v2537 = vld [vmem:[#allocation10 + $0x348] sm:$0xff]
        %v2538 = vld [vmem:[#allocation10 + $0x350] sm:$0xff]
        %v2539 = vld [vmem:[#allocation10 + $0x358] sm:$0xff]
        %v2540 = vld [vmem:[#allocation10 + $0x360] sm:$0xff]
        %v2541 = vld [vmem:[#allocation10 + $0x368] sm:$0xff]
        %v2542 = vld [vmem:[#allocation10 + $0x370] sm:$0xff]
        %v2543 = vld [vmem:[#allocation10 + $0x378] sm:$0xff]
        %v2544 = vld [vmem:[#allocation10 + $0x380] sm:$0xff]
        %v2545 = vld [vmem:[#allocation10 + $0x388] sm:$0xff]
        %v2546 = vld [vmem:[#allocation10 + $0x390] sm:$0xff]
        %v2547 = vld [vmem:[#allocation10 + $0x398] sm:$0xff]
        %v2548 = vld [vmem:[#allocation10 + $0x3a0] sm:$0xff]
        %v2549 = vld [vmem:[#allocation10 + $0x3a8] sm:$0xff]
        %v2550 = vld [vmem:[#allocation10 + $0x3b0] sm:$0xff]
        %v2551 = vld [vmem:[#allocation10 + $0x3b8] sm:$0xff]
        %v2552 = vld [vmem:[#allocation10 + $0x3c0] sm:$0xff]
        %v2553 = vld [vmem:[#allocation10 + $0x3c8] sm:$0xff]
        %v2554 = vld [vmem:[#allocation10 + $0x3d0] sm:$0xff]
        %v2555 = vld [vmem:[#allocation10 + $0x3d8] sm:$0xff]
        %v2556 = vld [vmem:[#allocation10 + $0x3e0] sm:$0xff]
        %v2557 = vld [vmem:[#allocation10 + $0x3e8] sm:$0xff]
        %v2558 = vld [vmem:[#allocation10 + $0x3f0] sm:$0xff]
        %v2559 = vld [vmem:[#allocation10 + $0x3f8] sm:$0xff]
        %v2560 = vld [vmem:[#allocation10 + $0x400] sm:$0xff]
        %v2561 = vld [vmem:[#allocation10 + $0x408] sm:$0xff]
        %v2562 = vld [vmem:[#allocation10 + $0x410] sm:$0xff]
        %v2563 = vld [vmem:[#allocation10 + $0x418] sm:$0xff]
        %v2564 = vld [vmem:[#allocation10 + $0x420] sm:$0xff]
        %v2565 = vld [vmem:[#allocation10 + $0x428] sm:$0xff]
        %v2566 = vld [vmem:[#allocation10 + $0x430] sm:$0xff]
        %v2567 = vld [vmem:[#allocation10 + $0x438] sm:$0xff]
        %v2568 = vld [vmem:[#allocation10 + $0x440] sm:$0xff]
        %v2569 = vld [vmem:[#allocation10 + $0x448] sm:$0xff]
        %v2570 = vld [vmem:[#allocation10 + $0x450] sm:$0xff]
        %v2571 = vld [vmem:[#allocation10 + $0x458] sm:$0xff]
        %v2572 = vld [vmem:[#allocation10 + $0x460] sm:$0xff]
        %v2573 = vld [vmem:[#allocation10 + $0x468] sm:$0xff]
        %v2574 = vld [vmem:[#allocation10 + $0x470] sm:$0xff]
        %v2575 = vld [vmem:[#allocation10 + $0x478] sm:$0xff]
        %v2576 = vld [vmem:[#allocation10 + $0x480] sm:$0xff]
        %v2577 = vld [vmem:[#allocation10 + $0x488] sm:$0xff]
        %v2578 = vld [vmem:[#allocation10 + $0x490] sm:$0xff]
        %v2579 = vld [vmem:[#allocation10 + $0x498] sm:$0xff]
        %v2580 = vld [vmem:[#allocation10 + $0x4a0] sm:$0xff]
        %v2581 = vld [vmem:[#allocation10 + $0x4a8] sm:$0xff]
        %v2582 = vld [vmem:[#allocation10 + $0x4b0] sm:$0xff]
        %v2583 = vld [vmem:[#allocation10 + $0x4b8] sm:$0xff]
        %v2584 = vld [vmem:[#allocation10 + $0x4c0] sm:$0xff]
        %v2585 = vld [vmem:[#allocation10 + $0x4c8] sm:$0xff]
        %v2586 = vld [vmem:[#allocation10 + $0x4d0] sm:$0xff]
        %v2587 = vld [vmem:[#allocation10 + $0x4d8] sm:$0xff]
        %v2588 = vld [vmem:[#allocation10 + $0x4e0] sm:$0xff]
        %v2589 = vld [vmem:[#allocation10 + $0x4e8] sm:$0xff]
        %v2590 = vld [vmem:[#allocation10 + $0x4f0] sm:$0xff]
        %v2591 = vld [vmem:[#allocation10 + $0x4f8] sm:$0xff]
        %v2592 = vld [vmem:[#allocation10 + $0x500] sm:$0xff]
        %v2593 = vld [vmem:[#allocation10 + $0x508] sm:$0xff]
        %v2594 = vld [vmem:[#allocation10 + $0x510] sm:$0xff]
        %v2595 = vld [vmem:[#allocation10 + $0x518] sm:$0xff]
        %v2596 = vld [vmem:[#allocation10 + $0x520] sm:$0xff]
        %v2597 = vld [vmem:[#allocation10 + $0x528] sm:$0xff]
        %v2598 = vld [vmem:[#allocation10 + $0x530] sm:$0xff]
        %v2599 = vld [vmem:[#allocation10 + $0x538] sm:$0xff]
        %v2600 = vld [vmem:[#allocation10 + $0x540] sm:$0xff]
        %v2601 = vld [vmem:[#allocation10 + $0x548] sm:$0xff]
        %v2602 = vld [vmem:[#allocation10 + $0x550] sm:$0xff]
        %v2603 = vld [vmem:[#allocation10 + $0x558] sm:$0xff]
        %v2604 = vld [vmem:[#allocation10 + $0x560] sm:$0xff]
        %v2605 = vld [vmem:[#allocation10 + $0x568] sm:$0xff]
        %v2606 = vld [vmem:[#allocation10 + $0x570] sm:$0xff]
        %v2607 = vld [vmem:[#allocation10 + $0x578] sm:$0xff]
        %v2608 = vld [vmem:[%s7] sm:$0x1]
        %v2610 = vlaneseq
        %v2611 = vshrl.u32 %v2610, 7
        %v2612 = vsub.s32 0, %v2611
        %v2613 = vrot.slane %v2608, %v2612
        %2615 = vmatprep.subr.mxu0 0.0
        %2616 = vmatpush1.msra.mxu0 %v2432
        %2617 = vmatprep.subr.mxu0 0.0
        %2618 = vmatpush1.msra.mxu0 %v2433
        %2619 = vmatprep.subr.mxu0 0.0
        %2620 = vmatpush1.msra.mxu0 %v2434
        %2621 = vmatprep.subr.mxu0 0.0
        %2622 = vmatpush1.msra.mxu0 %v2435
        %2623 = vmatprep.subr.mxu0 0.0
        %2624 = vmatpush1.msra.mxu0 %v2436
        %2625 = vmatprep.subr.mxu0 0.0
        %2626 = vmatpush1.msra.mxu0 %v2437
        %2627 = vmatprep.subr.mxu0 0.0
        %2628 = vmatpush1.msra.mxu0 %v2438
        %2629 = vmatprep.subr.mxu0 0.0
        %2630 = vmatpush1.msra.mxu0 %v2439
        %2631 = vmatprep.subr.mxu0 0.0
        %2632 = vmatpush1.msra.mxu0 %v2440
        %2633 = vmatprep.subr.mxu0 0.0
        %2634 = vmatpush1.msra.mxu0 %v2441
        %2635 = vmatprep.subr.mxu0 0.0
        %2636 = vmatpush1.msra.mxu0 %v2442
        %2637 = vmatprep.subr.mxu0 0.0
        %2638 = vmatpush1.msra.mxu0 %v2443
        %2639 = vmatprep.subr.mxu0 0.0
        %2640 = vmatpush1.msra.mxu0 %v2444
        %2641 = vmatprep.subr.mxu0 0.0
        %2642 = vmatpush1.msra.mxu0 %v2445
        %2643 = vmatprep.subr.mxu0 0.0
        %2644 = vmatpush1.msra.mxu0 %v2446
        %2645 = vmatprep.subr.mxu0 0.0
        %2646 = vmatpush1.msra.mxu0 %v2447
        %2647 = vmatprep.subr.mxu0 0.0
        %2648 = vmatpush1.msra.mxu0 %v2448
        %2649 = vmatprep.subr.mxu0 0.0
        %2650 = vmatpush1.msra.mxu0 %v2449
        %2651 = vmatprep.subr.mxu0 0.0
        %2652 = vmatpush1.msra.mxu0 %v2450
        %2653 = vmatprep.subr.mxu0 0.0
        %2654 = vmatpush1.msra.mxu0 %v2451
        %2655 = vmatprep.subr.mxu0 0.0
        %2656 = vmatpush1.msra.mxu0 %v2452
        %2657 = vmatprep.subr.mxu0 0.0
        %2658 = vmatpush1.msra.mxu0 %v2453
        %2659 = vmatprep.subr.mxu0 0.0
        %2660 = vmatpush1.msra.mxu0 %v2454
        %2661 = vmatprep.subr.mxu0 0.0
        %2662 = vmatpush1.msra.mxu0 %v2455
        %2663 = vmatprep.subr.mxu0 0.0
        %2664 = vmatpush1.msra.mxu0 %v2456
        %2665 = vmatprep.subr.mxu0 0.0
        %2666 = vmatpush1.msra.mxu0 %v2457
        %2667 = vmatprep.subr.mxu0 0.0
        %2668 = vmatpush1.msra.mxu0 %v2458
        %2669 = vmatprep.subr.mxu0 0.0
        %2670 = vmatpush1.msra.mxu0 %v2459
        %2671 = vmatprep.subr.mxu0 0.0
        %2672 = vmatpush1.msra.mxu0 %v2460
        %2673 = vmatprep.subr.mxu0 0.0
        %2674 = vmatpush1.msra.mxu0 %v2461
        %2675 = vmatprep.subr.mxu0 0.0
        %2676 = vmatpush1.msra.mxu0 %v2462
        %2677 = vmatprep.subr.mxu0 0.0
        %2678 = vmatpush1.msra.mxu0 %v2463
        %2679 = vmatprep.mubr.f32.mxu0 %v2334
        %2680 = vmatmul.mubr.f32.gmra.mrb[0].mxu0 %v2333
        %v2681 = vpop.f32.mrb[0].mxu0
        %v2682 = vadd.f32 %v2613, %v2681
        %v2683 = vpop.f32.mrb[0].mxu0
        %2684 = vmatprep.mubr.f32.mxu0 %v2345
        %2685 = vmatmul.mubr.f32.gmra.mrb[0].mxu0 %v2344
        %v2686 = vpop.f32.mrb[0].mxu0
        %v2687 = vadd.f32 %v2613, %v2686
        %v2688 = vpop.f32.mrb[0].mxu0
        %2689 = vmatprep.mubr.f32.mxu0 %v2356
        %2690 = vmatmul.mubr.f32.gmra.mrb[0].mxu0 %v2355
        %v2691 = vpop.f32.mrb[0].mxu0
        %v2692 = vadd.f32 %v2613, %v2691
        %v2693 = vpop.f32.mrb[0].mxu0
        %2694 = vmatprep.mubr.f32.mxu0 %v2367
        %2695 = vmatmul.mubr.f32.gmra.mrb[0].mxu0 %v2366
        %v2696 = vpop.f32.mrb[0].mxu0
        %v2697 = vadd.f32 %v2613, %v2696
        %v2698 = vpop.f32.mrb[0].mxu0
        %2699 = vmatprep.mubr.f32.mxu0 %v2378
        %2700 = vmatmul.mubr.f32.gmra.mrb[0].mxu0 %v2377
        %v2701 = vpop.f32.mrb[0].mxu0
        %v2702 = vadd.f32 %v2613, %v2701
        %v2703 = vpop.f32.mrb[0].mxu0
        %2704 = vmatprep.mubr.f32.mxu0 %v2389
        %2705 = vmatmul.mubr.f32.gmra.mrb[0].mxu0 %v2388
        %v2706 = vpop.f32.mrb[0].mxu0
        %v2707 = vadd.f32 %v2613, %v2706
        %v2708 = vpop.f32.mrb[0].mxu0
        %2709 = vmatprep.mubr.f32.mxu0 %v2400
        %2710 = vmatmul.mubr.f32.gmra.mrb[0].mxu0 %v2399
        %v2711 = vpop.f32.mrb[0].mxu0
        %v2712 = vadd.f32 %v2613, %v2711
        %v2713 = vpop.f32.mrb[0].mxu0
        %2714 = vmatprep.mubr.f32.mxu0 %v2411
        %2715 = vmatmul.mubr.f32.gmra.mrb[0].mxu0 %v2410
        %v2716 = vpop.f32.mrb[0].mxu0
        %v2717 = vadd.f32 %v2613, %v2716
        %v2718 = vpop.f32.mrb[0].mxu0
        %2719 = vmatprep.mubr.f32.mxu0 %v2422
        %2720 = vmatmul.mubr.f32.gmra.mrb[0].mxu0 %v2421
        %v2721 = vpop.f32.mrb[0].mxu0
        %v2722 = vadd.f32 %v2613, %v2721
        %v2723 = vpop.f32.mrb[0].mxu0
        %2724 = vdwg.mxu0
        %2725 = vmatprep.subr.mxu0 0.0
        %2726 = vmatpush1.msra.mxu0 %v2464
        %2727 = vmatprep.subr.mxu0 0.0
        %2728 = vmatpush1.msra.mxu0 %v2465
        %2729 = vmatprep.subr.mxu0 0.0
        %2730 = vmatpush1.msra.mxu0 %v2466
        %2731 = vmatprep.subr.mxu0 0.0
        %2732 = vmatpush1.msra.mxu0 %v2467
        %2733 = vmatprep.subr.mxu0 0.0
        %2734 = vmatpush1.msra.mxu0 %v2468
        %2735 = vmatprep.subr.mxu0 0.0
        %2736 = vmatpush1.msra.mxu0 %v2469
        %2737 = vmatprep.subr.mxu0 0.0
        %2738 = vmatpush1.msra.mxu0 %v2470
        %2739 = vmatprep.subr.mxu0 0.0
        %2740 = vmatpush1.msra.mxu0 %v2471
        %2741 = vmatprep.subr.mxu0 0.0
        %2742 = vmatpush1.msra.mxu0 %v2472
        %2743 = vmatprep.subr.mxu0 0.0
        %2744 = vmatpush1.msra.mxu0 %v2473
        %2745 = vmatprep.subr.mxu0 0.0
        %2746 = vmatpush1.msra.mxu0 %v2474
        %2747 = vmatprep.subr.mxu0 0.0
        %2748 = vmatpush1.msra.mxu0 %v2475
        %2749 = vmatprep.subr.mxu0 0.0
        %2750 = vmatpush1.msra.mxu0 %v2476
        %2751 = vmatprep.subr.mxu0 0.0
        %2752 = vmatpush1.msra.mxu0 %v2477
        %2753 = vmatprep.subr.mxu0 0.0
        %2754 = vmatpush1.msra.mxu0 %v2478
        %2755 = vmatprep.subr.mxu0 0.0
        %2756 = vmatpush1.msra.mxu0 %v2479
        %2757 = vmatprep.subr.mxu0 0.0
        %2758 = vmatpush1.msra.mxu0 %v2480
        %2759 = vmatprep.subr.mxu0 0.0
        %2760 = vmatpush1.msra.mxu0 %v2481
        %2761 = vmatprep.subr.mxu0 0.0
        %2762 = vmatpush1.msra.mxu0 %v2482
        %2763 = vmatprep.subr.mxu0 0.0
        %2764 = vmatpush1.msra.mxu0 %v2483
        %2765 = vmatprep.subr.mxu0 0.0
        %2766 = vmatpush1.msra.mxu0 %v2484
        %2767 = vmatprep.subr.mxu0 0.0
        %2768 = vmatpush1.msra.mxu0 %v2485
        %2769 = vmatprep.subr.mxu0 0.0
        %2770 = vmatpush1.msra.mxu0 %v2486
        %2771 = vmatprep.subr.mxu0 0.0
        %2772 = vmatpush1.msra.mxu0 %v2487
        %2773 = vmatprep.subr.mxu0 0.0
        %2774 = vmatpush1.msra.mxu0 %v2488
        %2775 = vmatprep.subr.mxu0 0.0
        %2776 = vmatpush1.msra.mxu0 %v2489
        %2777 = vmatprep.subr.mxu0 0.0
        %2778 = vmatpush1.msra.mxu0 %v2490
        %2779 = vmatprep.subr.mxu0 0.0
        %2780 = vmatpush1.msra.mxu0 %v2491
        %2781 = vmatprep.subr.mxu0 0.0
        %2782 = vmatpush1.msra.mxu0 %v2492
        %2783 = vmatprep.subr.mxu0 0.0
        %2784 = vmatpush1.msra.mxu0 %v2493
        %2785 = vmatprep.subr.mxu0 0.0
        %2786 = vmatpush1.msra.mxu0 %v2494
        %2787 = vmatprep.subr.mxu0 0.0
        %2788 = vmatpush1.msra.mxu0 %v2495
        %2789 = vmatprep.mubr.f32.mxu0 %v2336
        %2790 = vmatmul.mubr.f32.gmra.mrb[0].mxu0 %v2335
        %v2791 = vpop.f32.mrb[0].mxu0
        %v2792 = vadd.f32 %v2682, %v2791
        %v2793 = vpop.f32.mrb[0].mxu0
        %2794 = vmatprep.mubr.f32.mxu0 %v2347
        %2795 = vmatmul.mubr.f32.gmra.mrb[0].mxu0 %v2346
        %v2796 = vpop.f32.mrb[0].mxu0
        %v2797 = vadd.f32 %v2687, %v2796
        %v2798 = vpop.f32.mrb[0].mxu0
        %2799 = vmatprep.mubr.f32.mxu0 %v2358
        %2800 = vmatmul.mubr.f32.gmra.mrb[0].mxu0 %v2357
        %v2801 = vpop.f32.mrb[0].mxu0
        %v2802 = vadd.f32 %v2692, %v2801
        %v2803 = vpop.f32.mrb[0].mxu0
        %2804 = vmatprep.mubr.f32.mxu0 %v2369
        %2805 = vmatmul.mubr.f32.gmra.mrb[0].mxu0 %v2368
        %v2806 = vpop.f32.mrb[0].mxu0
        %v2807 = vadd.f32 %v2697, %v2806
        %v2808 = vpop.f32.mrb[0].mxu0
        %2809 = vmatprep.mubr.f32.mxu0 %v2380
        %2810 = vmatmul.mubr.f32.gmra.mrb[0].mxu0 %v2379
        %v2811 = vpop.f32.mrb[0].mxu0
        %v2812 = vadd.f32 %v2702, %v2811
        %v2813 = vpop.f32.mrb[0].mxu0
        %2814 = vmatprep.mubr.f32.mxu0 %v2391
        %2815 = vmatmul.mubr.f32.gmra.mrb[0].mxu0 %v2390
        %v2816 = vpop.f32.mrb[0].mxu0
        %v2817 = vadd.f32 %v2707, %v2816
        %v2818 = vpop.f32.mrb[0].mxu0
        %2819 = vmatprep.mubr.f32.mxu0 %v2402
        %2820 = vmatmul.mubr.f32.gmra.mrb[0].mxu0 %v2401
        %v2821 = vpop.f32.mrb[0].mxu0
        %v2822 = vadd.f32 %v2712, %v2821
        %v2823 = vpop.f32.mrb[0].mxu0
        %2824 = vmatprep.mubr.f32.mxu0 %v2413
        %2825 = vmatmul.mubr.f32.gmra.mrb[0].mxu0 %v2412
        %v2826 = vpop.f32.mrb[0].mxu0
        %v2827 = vadd.f32 %v2717, %v2826
        %v2828 = vpop.f32.mrb[0].mxu0
        %2829 = vmatprep.mubr.f32.mxu0 %v2424
        %2830 = vmatmul.mubr.f32.gmra.mrb[0].mxu0 %v2423
        %v2831 = vpop.f32.mrb[0].mxu0
        %v2832 = vadd.f32 %v2722, %v2831
        %v2833 = vpop.f32.mrb[0].mxu0
        %2834 = vdwg.mxu0
        %2835 = vmatprep.subr.mxu0 0.0
        %2836 = vmatpush1.msra.mxu0 %v2496
        %2837 = vmatprep.subr.mxu0 0.0
        %2838 = vmatpush1.msra.mxu0 %v2497
        %2839 = vmatprep.subr.mxu0 0.0
        %2840 = vmatpush1.msra.mxu0 %v2498
        %2841 = vmatprep.subr.mxu0 0.0
        %2842 = vmatpush1.msra.mxu0 %v2499
        %2843 = vmatprep.subr.mxu0 0.0
        %2844 = vmatpush1.msra.mxu0 %v2500
        %2845 = vmatprep.subr.mxu0 0.0
        %2846 = vmatpush1.msra.mxu0 %v2501
        %2847 = vmatprep.subr.mxu0 0.0
        %2848 = vmatpush1.msra.mxu0 %v2502
        %2849 = vmatprep.subr.mxu0 0.0
        %2850 = vmatpush1.msra.mxu0 %v2503
        %2851 = vmatprep.subr.mxu0 0.0
        %2852 = vmatpush1.msra.mxu0 %v2504
        %2853 = vmatprep.subr.mxu0 0.0
        %2854 = vmatpush1.msra.mxu0 %v2505
        %2855 = vmatprep.subr.mxu0 0.0
        %2856 = vmatpush1.msra.mxu0 %v2506
        %2857 = vmatprep.subr.mxu0 0.0
        %2858 = vmatpush1.msra.mxu0 %v2507
        %2859 = vmatprep.subr.mxu0 0.0
        %2860 = vmatpush1.msra.mxu0 %v2508
        %2861 = vmatprep.subr.mxu0 0.0
        %2862 = vmatpush1.msra.mxu0 %v2509
        %2863 = vmatprep.subr.mxu0 0.0
        %2864 = vmatpush1.msra.mxu0 %v2510
        %2865 = vmatprep.subr.mxu0 0.0
        %2866 = vmatpush1.msra.mxu0 %v2511
        %2867 = vmatprep.subr.mxu0 0.0
        %2868 = vmatpush1.msra.mxu0 %v2512
        %2869 = vmatprep.subr.mxu0 0.0
        %2870 = vmatpush1.msra.mxu0 %v2513
        %2871 = vmatprep.subr.mxu0 0.0
        %2872 = vmatpush1.msra.mxu0 %v2514
        %2873 = vmatprep.subr.mxu0 0.0
        %2874 = vmatpush1.msra.mxu0 %v2515
        %2875 = vmatprep.subr.mxu0 0.0
        %2876 = vmatpush1.msra.mxu0 %v2516
        %2877 = vmatprep.subr.mxu0 0.0
        %2878 = vmatpush1.msra.mxu0 %v2517
        %2879 = vmatprep.subr.mxu0 0.0
        %2880 = vmatpush1.msra.mxu0 %v2518
        %2881 = vmatprep.subr.mxu0 0.0
        %2882 = vmatpush1.msra.mxu0 %v2519
        %2883 = vmatprep.subr.mxu0 0.0
        %2884 = vmatpush1.msra.mxu0 %v2520
        %2885 = vmatprep.subr.mxu0 0.0
        %2886 = vmatpush1.msra.mxu0 %v2521
        %2887 = vmatprep.subr.mxu0 0.0
        %2888 = vmatpush1.msra.mxu0 %v2522
        %2889 = vmatprep.subr.mxu0 0.0
        %2890 = vmatpush1.msra.mxu0 %v2523
        %2891 = vmatprep.subr.mxu0 0.0
        %2892 = vmatpush1.msra.mxu0 %v2524
        %2893 = vmatprep.subr.mxu0 0.0
        %2894 = vmatpush1.msra.mxu0 %v2525
        %2895 = vmatprep.subr.mxu0 0.0
        %2896 = vmatpush1.msra.mxu0 %v2526
        %2897 = vmatprep.subr.mxu0 0.0
        %2898 = vmatpush1.msra.mxu0 %v2527
        %2899 = vmatprep.mubr.f32.mxu0 %v2338
        %2900 = vmatmul.mubr.f32.gmra.mrb[0].mxu0 %v2337
        %v2901 = vpop.f32.mrb[0].mxu0
        %v2902 = vadd.f32 %v2792, %v2901
        %v2903 = vpop.f32.mrb[0].mxu0
        %2904 = vmatprep.mubr.f32.mxu0 %v2349
        %2905 = vmatmul.mubr.f32.gmra.mrb[0].mxu0 %v2348
        %v2906 = vpop.f32.mrb[0].mxu0
        %v2907 = vadd.f32 %v2797, %v2906
        %v2908 = vpop.f32.mrb[0].mxu0
        %2909 = vmatprep.mubr.f32.mxu0 %v2360
        %2910 = vmatmul.mubr.f32.gmra.mrb[0].mxu0 %v2359
        %v2911 = vpop.f32.mrb[0].mxu0
        %v2912 = vadd.f32 %v2802, %v2911
        %v2913 = vpop.f32.mrb[0].mxu0
        %2914 = vmatprep.mubr.f32.mxu0 %v2371
        %2915 = vmatmul.mubr.f32.gmra.mrb[0].mxu0 %v2370
        %v2916 = vpop.f32.mrb[0].mxu0
        %v2917 = vadd.f32 %v2807, %v2916
        %v2918 = vpop.f32.mrb[0].mxu0
        %2919 = vmatprep.mubr.f32.mxu0 %v2382
        %2920 = vmatmul.mubr.f32.gmra.mrb[0].mxu0 %v2381
        %v2921 = vpop.f32.mrb[0].mxu0
        %v2922 = vadd.f32 %v2812, %v2921
        %v2923 = vpop.f32.mrb[0].mxu0
        %2924 = vmatprep.mubr.f32.mxu0 %v2393
        %2925 = vmatmul.mubr.f32.gmra.mrb[0].mxu0 %v2392
        %v2926 = vpop.f32.mrb[0].mxu0
        %v2927 = vadd.f32 %v2817, %v2926
        %v2928 = vpop.f32.mrb[0].mxu0
        %2929 = vmatprep.mubr.f32.mxu0 %v2404
        %2930 = vmatmul.mubr.f32.gmra.mrb[0].mxu0 %v2403
        %v2931 = vpop.f32.mrb[0].mxu0
        %v2932 = vadd.f32 %v2822, %v2931
        %v2933 = vpop.f32.mrb[0].mxu0
        %2934 = vmatprep.mubr.f32.mxu0 %v2415
        %2935 = vmatmul.mubr.f32.gmra.mrb[0].mxu0 %v2414
        %v2936 = vpop.f32.mrb[0].mxu0
        %v2937 = vadd.f32 %v2827, %v2936
        %v2938 = vpop.f32.mrb[0].mxu0
        %2939 = vmatprep.mubr.f32.mxu0 %v2426
        %2940 = vmatmul.mubr.f32.gmra.mrb[0].mxu0 %v2425
        %v2941 = vpop.f32.mrb[0].mxu0
        %v2942 = vadd.f32 %v2832, %v2941
        %v2943 = vpop.f32.mrb[0].mxu0
        %2944 = vdwg.mxu0
        %2945 = vmatprep.subr.mxu0 0.0
        %2946 = vmatpush1.msra.mxu0 %v2528
        %2947 = vmatprep.subr.mxu0 0.0
        %2948 = vmatpush1.msra.mxu0 %v2529
        %2949 = vmatprep.subr.mxu0 0.0
        %2950 = vmatpush1.msra.mxu0 %v2530
        %2951 = vmatprep.subr.mxu0 0.0
        %2952 = vmatpush1.msra.mxu0 %v2531
        %2953 = vmatprep.subr.mxu0 0.0
        %2954 = vmatpush1.msra.mxu0 %v2532
        %2955 = vmatprep.subr.mxu0 0.0
        %2956 = vmatpush1.msra.mxu0 %v2533
        %2957 = vmatprep.subr.mxu0 0.0
        %2958 = vmatpush1.msra.mxu0 %v2534
        %2959 = vmatprep.subr.mxu0 0.0
        %2960 = vmatpush1.msra.mxu0 %v2535
        %2961 = vmatprep.subr.mxu0 0.0
        %2962 = vmatpush1.msra.mxu0 %v2536
        %2963 = vmatprep.subr.mxu0 0.0
        %2964 = vmatpush1.msra.mxu0 %v2537
        %2965 = vmatprep.subr.mxu0 0.0
        %2966 = vmatpush1.msra.mxu0 %v2538
        %2967 = vmatprep.subr.mxu0 0.0
        %2968 = vmatpush1.msra.mxu0 %v2539
        %2969 = vmatprep.subr.mxu0 0.0
        %2970 = vmatpush1.msra.mxu0 %v2540
        %2971 = vmatprep.subr.mxu0 0.0
        %2972 = vmatpush1.msra.mxu0 %v2541
        %2973 = vmatprep.subr.mxu0 0.0
        %2974 = vmatpush1.msra.mxu0 %v2542
        %2975 = vmatprep.subr.mxu0 0.0
        %2976 = vmatpush1.msra.mxu0 %v2543
        %2977 = vmatprep.subr.mxu0 0.0
        %2978 = vmatpush1.msra.mxu0 %v2544
        %2979 = vmatprep.subr.mxu0 0.0
        %2980 = vmatpush1.msra.mxu0 %v2545
        %2981 = vmatprep.subr.mxu0 0.0
        %2982 = vmatpush1.msra.mxu0 %v2546
        %2983 = vmatprep.subr.mxu0 0.0
        %2984 = vmatpush1.msra.mxu0 %v2547
        %2985 = vmatprep.subr.mxu0 0.0
        %2986 = vmatpush1.msra.mxu0 %v2548
        %2987 = vmatprep.subr.mxu0 0.0
        %2988 = vmatpush1.msra.mxu0 %v2549
        %2989 = vmatprep.subr.mxu0 0.0
        %2990 = vmatpush1.msra.mxu0 %v2550
        %2991 = vmatprep.subr.mxu0 0.0
        %2992 = vmatpush1.msra.mxu0 %v2551
        %2993 = vmatprep.subr.mxu0 0.0
        %2994 = vmatpush1.msra.mxu0 %v2552
        %2995 = vmatprep.subr.mxu0 0.0
        %2996 = vmatpush1.msra.mxu0 %v2553
        %2997 = vmatprep.subr.mxu0 0.0
        %2998 = vmatpush1.msra.mxu0 %v2554
        %2999 = vmatprep.subr.mxu0 0.0
        %3000 = vmatpush1.msra.mxu0 %v2555
        %3001 = vmatprep.subr.mxu0 0.0
        %3002 = vmatpush1.msra.mxu0 %v2556
        %3003 = vmatprep.subr.mxu0 0.0
        %3004 = vmatpush1.msra.mxu0 %v2557
        %3005 = vmatprep.subr.mxu0 0.0
        %3006 = vmatpush1.msra.mxu0 %v2558
        %3007 = vmatprep.subr.mxu0 0.0
        %3008 = vmatpush1.msra.mxu0 %v2559
        %3009 = vmatprep.mubr.f32.mxu0 %v2340
        %3010 = vmatmul.mubr.f32.gmra.mrb[0].mxu0 %v2339
        %v3011 = vpop.f32.mrb[0].mxu0
        %v3012 = vadd.f32 %v2902, %v3011
        %v3013 = vpop.f32.mrb[0].mxu0
        %3014 = vmatprep.mubr.f32.mxu0 %v2351
        %3015 = vmatmul.mubr.f32.gmra.mrb[0].mxu0 %v2350
        %v3016 = vpop.f32.mrb[0].mxu0
        %v3017 = vadd.f32 %v2907, %v3016
        %v3018 = vpop.f32.mrb[0].mxu0
        %3019 = vmatprep.mubr.f32.mxu0 %v2362
        %3020 = vmatmul.mubr.f32.gmra.mrb[0].mxu0 %v2361
        %v3021 = vpop.f32.mrb[0].mxu0
        %v3022 = vadd.f32 %v2912, %v3021
        %v3023 = vpop.f32.mrb[0].mxu0
        %3024 = vmatprep.mubr.f32.mxu0 %v2373
        %3025 = vmatmul.mubr.f32.gmra.mrb[0].mxu0 %v2372
        %v3026 = vpop.f32.mrb[0].mxu0
        %v3027 = vadd.f32 %v2917, %v3026
        %v3028 = vpop.f32.mrb[0].mxu0
        %3029 = vmatprep.mubr.f32.mxu0 %v2384
        %3030 = vmatmul.mubr.f32.gmra.mrb[0].mxu0 %v2383
        %v3031 = vpop.f32.mrb[0].mxu0
        %v3032 = vadd.f32 %v2922, %v3031
        %v3033 = vpop.f32.mrb[0].mxu0
        %3034 = vmatprep.mubr.f32.mxu0 %v2395
        %3035 = vmatmul.mubr.f32.gmra.mrb[0].mxu0 %v2394
        %v3036 = vpop.f32.mrb[0].mxu0
        %v3037 = vadd.f32 %v2927, %v3036
        %v3038 = vpop.f32.mrb[0].mxu0
        %3039 = vmatprep.mubr.f32.mxu0 %v2406
        %3040 = vmatmul.mubr.f32.gmra.mrb[0].mxu0 %v2405
        %v3041 = vpop.f32.mrb[0].mxu0
        %v3042 = vadd.f32 %v2932, %v3041
        %v3043 = vpop.f32.mrb[0].mxu0
        %3044 = vmatprep.mubr.f32.mxu0 %v2417
        %3045 = vmatmul.mubr.f32.gmra.mrb[0].mxu0 %v2416
        %v3046 = vpop.f32.mrb[0].mxu0
        %v3047 = vadd.f32 %v2937, %v3046
        %v3048 = vpop.f32.mrb[0].mxu0
        %3049 = vmatprep.mubr.f32.mxu0 %v2428
        %3050 = vmatmul.mubr.f32.gmra.mrb[0].mxu0 %v2427
        %v3051 = vpop.f32.mrb[0].mxu0
        %v3052 = vadd.f32 %v2942, %v3051
        %v3053 = vpop.f32.mrb[0].mxu0
        %3054 = vdwg.mxu0
        %3055 = vmatprep.subr.mxu0 0.0
        %3056 = vmatpush1.msra.mxu0 %v2560
        %3057 = vmatprep.subr.mxu0 0.0
        %3058 = vmatpush1.msra.mxu0 %v2561
        %3059 = vmatprep.subr.mxu0 0.0
        %3060 = vmatpush1.msra.mxu0 %v2562
        %3061 = vmatprep.subr.mxu0 0.0
        %3062 = vmatpush1.msra.mxu0 %v2563
        %3063 = vmatprep.subr.mxu0 0.0
        %3064 = vmatpush1.msra.mxu0 %v2564
        %3065 = vmatprep.subr.mxu0 0.0
        %3066 = vmatpush1.msra.mxu0 %v2565
        %3067 = vmatprep.subr.mxu0 0.0
        %3068 = vmatpush1.msra.mxu0 %v2566
        %3069 = vmatprep.subr.mxu0 0.0
        %3070 = vmatpush1.msra.mxu0 %v2567
        %3071 = vmatprep.subr.mxu0 0.0
        %3072 = vmatpush1.msra.mxu0 %v2568
        %3073 = vmatprep.subr.mxu0 0.0
        %3074 = vmatpush1.msra.mxu0 %v2569
        %3075 = vmatprep.subr.mxu0 0.0
        %3076 = vmatpush1.msra.mxu0 %v2570
        %3077 = vmatprep.subr.mxu0 0.0
        %3078 = vmatpush1.msra.mxu0 %v2571
        %3079 = vmatprep.subr.mxu0 0.0
        %3080 = vmatpush1.msra.mxu0 %v2572
        %3081 = vmatprep.subr.mxu0 0.0
        %3082 = vmatpush1.msra.mxu0 %v2573
        %3083 = vmatprep.subr.mxu0 0.0
        %3084 = vmatpush1.msra.mxu0 %v2574
        %3085 = vmatprep.subr.mxu0 0.0
        %3086 = vmatpush1.msra.mxu0 %v2575
        %3087 = vmatprep.subr.mxu0 0.0
        %3088 = vmatpush1.msra.mxu0 %v2576
        %3089 = vmatprep.subr.mxu0 0.0
        %3090 = vmatpush1.msra.mxu0 %v2577
        %3091 = vmatprep.subr.mxu0 0.0
        %3092 = vmatpush1.msra.mxu0 %v2578
        %3093 = vmatprep.subr.mxu0 0.0
        %3094 = vmatpush1.msra.mxu0 %v2579
        %3095 = vmatprep.subr.mxu0 0.0
        %3096 = vmatpush1.msra.mxu0 %v2580
        %3097 = vmatprep.subr.mxu0 0.0
        %3098 = vmatpush1.msra.mxu0 %v2581
        %3099 = vmatprep.subr.mxu0 0.0
        %3100 = vmatpush1.msra.mxu0 %v2582
        %3101 = vmatprep.subr.mxu0 0.0
        %3102 = vmatpush1.msra.mxu0 %v2583
        %3103 = vmatprep.subr.mxu0 0.0
        %3104 = vmatpush1.msra.mxu0 %v2584
        %3105 = vmatprep.subr.mxu0 0.0
        %3106 = vmatpush1.msra.mxu0 %v2585
        %3107 = vmatprep.subr.mxu0 0.0
        %3108 = vmatpush1.msra.mxu0 %v2586
        %3109 = vmatprep.subr.mxu0 0.0
        %3110 = vmatpush1.msra.mxu0 %v2587
        %3111 = vmatprep.subr.mxu0 0.0
        %3112 = vmatpush1.msra.mxu0 %v2588
        %3113 = vmatprep.subr.mxu0 0.0
        %3114 = vmatpush1.msra.mxu0 %v2589
        %3115 = vmatprep.subr.mxu0 0.0
        %3116 = vmatpush1.msra.mxu0 %v2590
        %3117 = vmatprep.subr.mxu0 0.0
        %3118 = vmatpush1.msra.mxu0 %v2591
        %3119 = vmatprep.mubr.f32.mxu0 %v2342
        %3120 = vmatmul.mubr.f32.gmra.mrb[0].mxu0 %v2341
        %v3121 = vpop.f32.mrb[0].mxu0
        %v3122 = vadd.f32 %v3012, %v3121
        %v3123 = vpop.f32.mrb[0].mxu0
        %3124 = vmatprep.mubr.f32.mxu0 %v2353
        %3125 = vmatmul.mubr.f32.gmra.mrb[0].mxu0 %v2352
        %v3126 = vpop.f32.mrb[0].mxu0
        %v3127 = vadd.f32 %v3017, %v3126
        %v3128 = vpop.f32.mrb[0].mxu0
        %3129 = vmatprep.mubr.f32.mxu0 %v2364
        %3130 = vmatmul.mubr.f32.gmra.mrb[0].mxu0 %v2363
        %v3131 = vpop.f32.mrb[0].mxu0
        %v3132 = vadd.f32 %v3022, %v3131
        %v3133 = vpop.f32.mrb[0].mxu0
        %3134 = vmatprep.mubr.f32.mxu0 %v2375
        %3135 = vmatmul.mubr.f32.gmra.mrb[0].mxu0 %v2374
        %v3136 = vpop.f32.mrb[0].mxu0
        %v3137 = vadd.f32 %v3027, %v3136
        %v3138 = vpop.f32.mrb[0].mxu0
        %3139 = vmatprep.mubr.f32.mxu0 %v2386
        %3140 = vmatmul.mubr.f32.gmra.mrb[0].mxu0 %v2385
        %v3141 = vpop.f32.mrb[0].mxu0
        %v3142 = vadd.f32 %v3032, %v3141
        %v3143 = vpop.f32.mrb[0].mxu0
        %3144 = vmatprep.mubr.f32.mxu0 %v2397
        %3145 = vmatmul.mubr.f32.gmra.mrb[0].mxu0 %v2396
        %v3146 = vpop.f32.mrb[0].mxu0
        %v3147 = vadd.f32 %v3037, %v3146
        %v3148 = vpop.f32.mrb[0].mxu0
        %3149 = vmatprep.mubr.f32.mxu0 %v2408
        %3150 = vmatmul.mubr.f32.gmra.mrb[0].mxu0 %v2407
        %v3151 = vpop.f32.mrb[0].mxu0
        %v3152 = vadd.f32 %v3042, %v3151
        %v3153 = vpop.f32.mrb[0].mxu0
        %3154 = vmatprep.mubr.f32.mxu0 %v2419
        %3155 = vmatmul.mubr.f32.gmra.mrb[0].mxu0 %v2418
        %v3156 = vpop.f32.mrb[0].mxu0
        %v3157 = vadd.f32 %v3047, %v3156
        %v3158 = vpop.f32.mrb[0].mxu0
        %3159 = vmatprep.mubr.f32.mxu0 %v2430
        %3160 = vmatmul.mubr.f32.gmra.mrb[0].mxu0 %v2429
        %v3161 = vpop.f32.mrb[0].mxu0
        %v3162 = vadd.f32 %v3052, %v3161
        %v3163 = vpop.f32.mrb[0].mxu0
        %3164 = vdwg.mxu0
        %3165 = vmatprep.subr.mxu0 0.0
        %3166 = vmatpush1.msra.mxu0 %v2592
        %3167 = vmatprep.subr.mxu0 0.0
        %3168 = vmatpush1.msra.mxu0 %v2593
        %3169 = vmatprep.subr.mxu0 0.0
        %3170 = vmatpush1.msra.mxu0 %v2594
        %3171 = vmatprep.subr.mxu0 0.0
        %3172 = vmatpush1.msra.mxu0 %v2595
        %3173 = vmatprep.subr.mxu0 0.0
        %3174 = vmatpush1.msra.mxu0 %v2596
        %3175 = vmatprep.subr.mxu0 0.0
        %3176 = vmatpush1.msra.mxu0 %v2597
        %3177 = vmatprep.subr.mxu0 0.0
        %3178 = vmatpush1.msra.mxu0 %v2598
        %3179 = vmatprep.subr.mxu0 0.0
        %3180 = vmatpush1.msra.mxu0 %v2599
        %3181 = vmatprep.subr.mxu0 0.0
        %3182 = vmatpush1.msra.mxu0 %v2600
        %3183 = vmatprep.subr.mxu0 0.0
        %3184 = vmatpush1.msra.mxu0 %v2601
        %3185 = vmatprep.subr.mxu0 0.0
        %3186 = vmatpush1.msra.mxu0 %v2602
        %3187 = vmatprep.subr.mxu0 0.0
        %3188 = vmatpush1.msra.mxu0 %v2603
        %3189 = vmatprep.subr.mxu0 0.0
        %3190 = vmatpush1.msra.mxu0 %v2604
        %3191 = vmatprep.subr.mxu0 0.0
        %3192 = vmatpush1.msra.mxu0 %v2605
        %3193 = vmatprep.subr.mxu0 0.0
        %3194 = vmatpush1.msra.mxu0 %v2606
        %3195 = vmatprep.subr.mxu0 0.0
        %3196 = vmatpush1.msra.mxu0 %v2607
        %3197 = vmatprep.subr.mxu0 0.0
        %3198 = vmatpush1.msra.mxu0 0.0
        %3199 = vmatprep.subr.mxu0 0.0
        %3200 = vmatpush1.msra.mxu0 0.0
        %3201 = vmatprep.subr.mxu0 0.0
        %3202 = vmatpush1.msra.mxu0 0.0
        %3203 = vmatprep.subr.mxu0 0.0
        %3204 = vmatpush1.msra.mxu0 0.0
        %3205 = vmatprep.subr.mxu0 0.0
        %3206 = vmatpush1.msra.mxu0 0.0
        %3207 = vmatprep.subr.mxu0 0.0
        %3208 = vmatpush1.msra.mxu0 0.0
        %3209 = vmatprep.subr.mxu0 0.0
        %3210 = vmatpush1.msra.mxu0 0.0
        %3211 = vmatprep.subr.mxu0 0.0
        %3212 = vmatpush1.msra.mxu0 0.0
        %3213 = vmatprep.subr.mxu0 0.0
        %3214 = vmatpush1.msra.mxu0 0.0
        %3215 = vmatprep.subr.mxu0 0.0
        %3216 = vmatpush1.msra.mxu0 0.0
        %3217 = vmatprep.subr.mxu0 0.0
        %3218 = vmatpush1.msra.mxu0 0.0
        %3219 = vmatprep.subr.mxu0 0.0
        %3220 = vmatpush1.msra.mxu0 0.0
        %3221 = vmatprep.subr.mxu0 0.0
        %3222 = vmatpush1.msra.mxu0 0.0
        %3223 = vmatprep.subr.mxu0 0.0
        %3224 = vmatpush1.msra.mxu0 0.0
        %3225 = vmatprep.subr.mxu0 0.0
        %3226 = vmatpush1.msra.mxu0 0.0
        %3227 = vmatprep.subr.mxu0 0.0
        %3228 = vmatpush1.msra.mxu0 0.0
        %3229 = vmatprep.mubr.f32.mxu0 0.0
        %3230 = vmatmul.mubr.f32.gmra.mrb[0].mxu0 %v2343
        %v3231 = vpop.f32.mrb[0].mxu0
        %v3232 = vadd.f32 %v3122, %v3231
        %v3233 = vpop.f32.mrb[0].mxu0
        %3234 = vmatprep.mubr.f32.mxu0 0.0
        %3235 = vmatmul.mubr.f32.gmra.mrb[0].mxu0 %v2354
        %v3236 = vpop.f32.mrb[0].mxu0
        %v3237 = vadd.f32 %v3127, %v3236
        %v3238 = vpop.f32.mrb[0].mxu0
        %3239 = vmatprep.mubr.f32.mxu0 0.0
        %3240 = vmatmul.mubr.f32.gmra.mrb[0].mxu0 %v2365
        %v3241 = vpop.f32.mrb[0].mxu0
        %v3242 = vadd.f32 %v3132, %v3241
        %v3243 = vpop.f32.mrb[0].mxu0
        %3244 = vmatprep.mubr.f32.mxu0 0.0
        %3245 = vmatmul.mubr.f32.gmra.mrb[0].mxu0 %v2376
        %v3246 = vpop.f32.mrb[0].mxu0
        %v3247 = vadd.f32 %v3137, %v3246
        %v3248 = vpop.f32.mrb[0].mxu0
        %3249 = vmatprep.mubr.f32.mxu0 0.0
        %3250 = vmatmul.mubr.f32.gmra.mrb[0].mxu0 %v2387
        %v3251 = vpop.f32.mrb[0].mxu0
        %v3252 = vadd.f32 %v3142, %v3251
        %v3253 = vpop.f32.mrb[0].mxu0
        %3254 = vmatprep.mubr.f32.mxu0 0.0
        %3255 = vmatmul.mubr.f32.gmra.mrb[0].mxu0 %v2398
        %v3256 = vpop.f32.mrb[0].mxu0
        %v3257 = vadd.f32 %v3147, %v3256
        %v3258 = vpop.f32.mrb[0].mxu0
        %3259 = vmatprep.mubr.f32.mxu0 0.0
        %3260 = vmatmul.mubr.f32.gmra.mrb[0].mxu0 %v2409
        %v3261 = vpop.f32.mrb[0].mxu0
        %v3262 = vadd.f32 %v3152, %v3261
        %v3263 = vpop.f32.mrb[0].mxu0
        %3264 = vmatprep.mubr.f32.mxu0 0.0
        %3265 = vmatmul.mubr.f32.gmra.mrb[0].mxu0 %v2420
        %v3266 = vpop.f32.mrb[0].mxu0
        %v3267 = vadd.f32 %v3157, %v3266
        %v3268 = vpop.f32.mrb[0].mxu0
        %3269 = vmatprep.mubr.f32.mxu0 0.0
        %3270 = vmatmul.mubr.f32.gmra.mrb[0].mxu0 %v2431
        %v3271 = vpop.f32.mrb[0].mxu0
        %v3272 = vadd.f32 %v3162, %v3271
        %v3273 = vpop.f32.mrb[0].mxu0
        %3274 = vdwg.mxu0
        %v3275 = vmax.f32 %v3232, 0.0
        %v3276 = vmax.f32 %v3237, 0.0
        %v3277 = vmax.f32 %v3242, 0.0
        %v3278 = vmax.f32 %v3247, 0.0
        %v3279 = vmax.f32 %v3252, 0.0
        %v3280 = vmax.f32 %v3257, 0.0
        %v3281 = vmax.f32 %v3262, 0.0
        %v3282 = vmax.f32 %v3267, 0.0
        %v3283 = vmax.f32 %v3272, 0.0
        %3284 = vst [vmem:[%s367] sm:$0xff] %v3275
        %3285 = vst [vmem:[%s367 + $0x8] sm:$0xff] %v3276
        %3286 = vst [vmem:[%s367 + $0x10] sm:$0xff] %v3277
        %3287 = vst [vmem:[%s367 + $0x18] sm:$0xff] %v3278
        %3288 = vst [vmem:[%s367 + $0x20] sm:$0xff] %v3279
        %3289 = vst [vmem:[%s367 + $0x28] sm:$0xff] %v3280
        %3290 = vst [vmem:[%s367 + $0x30] sm:$0xff] %v3281
        %3291 = vst [vmem:[%s367 + $0x38] sm:$0xff] %v3282
        %3292 = vst [vmem:[%s367 + $0x40] sm:$0xff] %v3283
        %s3293 = sand.u32 %s208, 1
        %s3294 = scalar_lea.sflag [#allocation6], %s3293
        %s3295 = sand.u32 %s208, 1
        %s3296 = smul.addr %s3295, 72
        %s3297 = scalar_lea.vmem [#allocation12], %s3296
        // Predicated region
        $region69: #{tpu_custom_call.1} parent=51 // pred_check
          %p3298 = pneg %p218
        $region70: #{tpu_custom_call.1} parent=51 // pred_check_branch
          %3300 = sbr.rel (%p3298) target = $region72
        $region71: #{tpu_custom_call.1} parent=51 // pred_region
          %s3302 = ssub.s32 1152, 1152
          %3303 = vsyncadd %s3294, %s3302
          %s3304 = smul.addr %s27, 9
          %s3305 = smul.addr %s3304, 128
          %s3306 = scalar_lea.hbm %s8, %s3305
          %s3307 = sshll.u32 %s3297, 4
          %s3308 = int_to_ptr.vmem [resolvable:$true] %s3307
          %3313 = dma.vmem_to_hbm [thread:$0]  %s3308, 1152, %s3306, %s3294, 128, 128, 8
        $region72: #{tpu_custom_call.1} parent=51 // pred_fallthru
          _
      $region52: #{tpu_custom_call.1} parent=5 // pred_fallthru
        _
      %p3314 = scmp.le.s32.totalorder 2, %s22
      // Predicated region
      $region73: #{tpu_custom_call.1} parent=5 // pred_check
        %p3315 = pneg %p3314
      $region74: #{tpu_custom_call.1} parent=5 // pred_check_branch
        %3317 = sbr.rel (%p3315) target = $region76
      $region75: #{tpu_custom_call.1} parent=5 // pred_region
        %s3318 = ssub.s32 %s22, 2
        // Predicated region
        $region77: #{tpu_custom_call.1} parent=75 // pred_check
          %p3319 = pneg %p224
        $region78: #{tpu_custom_call.1} parent=75 // pred_check_branch
          %3321 = sbr.rel (%p3319) target = $region80
        $region79: #{tpu_custom_call.1} parent=75 // pred_region
          %s3322 = sand.u32 %s209, 1
          %s3323 = scalar_lea.sflag [#allocation6], %s3322
          %s3324 = sand.u32 %s209, 1
          %s3325 = smul.addr %s3324, 72
          %s3326 = scalar_lea.vmem [#allocation12], %s3325
          %3327 = dma.done %s3323, 1152
        $region80: #{tpu_custom_call.1} parent=75 // pred_fallthru
          _
      $region76: #{tpu_custom_call.1} parent=5 // pred_fallthru
        _
    $region6: #{tpu_custom_call.1} parent=1 // loop_footer
      %s26 = sadd.s32 1, %s22
    $region7: #{tpu_custom_call.1} parent=1 // loop_footer_branch
      %21 = sbr.rel target = $region3
    $region8: #{tpu_custom_call.1} parent=1 // loop_exit
      _
    %3328 = vsyncpa [#allocation5], 1
    %s3329 = scalar_lea.sflag [#allocation5], 1
    %3330 = vsyncpa %s3329, 1
    %3331 = vsyncpa [#allocation8], 1
    %3332 = vsyncpa [#allocation11], 1
    %3333 = vsyncpa [#allocation6], 1
    %s3334 = scalar_lea.sflag [#allocation6], 1
    %3335 = vsyncpa %s3334, 1

</llo_original>
